<compile_context>
chip_gen: v7x
topology: tpu7x:2x2x1
jax: 0.10.0
libtpu: 0.0.40
codegen_flags: <defaults>
</compile_context>

<pallas_src>
import jax
import jax.numpy as jnp
import numpy as np
from jax.experimental import pallas as pl
from jax.experimental.pallas import tpu as pltpu


# ----------------------------------------------------------------------------
# Kernel 1: full decoder recurrence for one batch row (grid = batch rows).
# ----------------------------------------------------------------------------
def decoder_recurrent_kernel(
    tok_ref,                         # SMEM (t, B) int32 (scalar prefetch)
    emb_ref,                         # (V1p, D) padded embedding table
    wg_ref,                          # (1, D, 4D)  Wfold[b] @ Wih0_ctx
    bg_ref,                          # (1, 1, 4D)  b0 + mh_bias[b] @ Wih0_ctx
    bg0_ref,                         # (1, 1, 4D)  b0 + mh_init[b] @ Wih0_ctx  (step 0)
    wcp_ref,                         # (1, D, D)   Wc1_h2 + Wfold[b] @ Wc1_ctx
    bcp_ref,                         # (1, 1, D)   bc1 + mh_bias[b] @ Wc1_ctx
    wih0e_ref, whh0_ref,             # LSTM cell 0 (embed-part input weights / recurrent)
    wih1_ref, whh1_ref, b1_ref,      # LSTM cell 1
    wih2_ref, whh2_ref, b2_ref,      # LSTM cell 2
    hid_out_ref,                     # (1, t, D)  char-projection hidden (post-LeakyReLU)
):
    bb, t, D = hid_out_ref.shape     # bb == 1 (one batch row per grid point)
    boff = pl.program_id(0) * bb

    wg = wg_ref[0]                   # (D, 4D)
    wcp = wcp_ref[0]                 # (D, D)
    bg = bg_ref[0]                   # (1, 4D)
    bg0 = bg0_ref[0]                 # (1, 4D)
    bcp = bcp_ref[0]                 # (1, D)
    b1 = b1_ref[...]                 # (1, 4D)
    b2 = b2_ref[...]                 # (1, 4D)

    def lstm(gates, c_prev):
        # Gate slices are 32-lane sub-slices of one (1, 4D) vreg row; VPU has
        # large slack at these sizes.
        i_g = jax.nn.sigmoid(gates[:, 0 * D:1 * D])
        g_g = jnp.tanh(gates[:, 2 * D:3 * D])
        o_g = jax.nn.sigmoid(gates[:, 3 * D:4 * D])
        c_new = i_g * g_g
        if c_prev is not None:                       # static: skipped at step 0
            c_new = c_new + jax.nn.sigmoid(gates[:, 1 * D:2 * D]) * c_prev
        return o_g * jnp.tanh(c_new), c_new

    h0 = h1 = h2 = None
    c0 = c1 = c2 = None

    # Entire time recurrence inside one kernel invocation. t is small/static
    # so a Python loop (== fully unrolled) is used.
    # TODO(synk): for large t switch to lax.fori_loop(unroll=...) to bound code size.
    for step in range(t):
        tok = tok_ref[step, boff]                    # SMEM scalar read
        embed = emb_ref[pl.ds(tok, 1), :]            # (1, D) row gather (no one-hot)

        # cell 0: cat([embed, mh_prev]) @ Wih0 with the context feedback folded:
        #   mh_prev @ Wih0_ctx == h2_prev @ Wg[b] + (bg[b] - b0)
        g0 = jnp.dot(embed, wih0e_ref[...], preferred_element_type=jnp.float32)
        if step == 0:                                # h*, c* are all zero
            g0 = g0 + bg0
        else:
            g0 = (g0
                  + jnp.dot(h2, wg, preferred_element_type=jnp.float32)
                  + jnp.dot(h0, whh0_ref[...], preferred_element_type=jnp.float32)
                  + bg)
        h0, c0 = lstm(g0, c0)

        g1 = jnp.dot(h0, wih1_ref[...], preferred_element_type=jnp.float32) + b1
        if step > 0:
            g1 = g1 + jnp.dot(h1, whh1_ref[...], preferred_element_type=jnp.float32)
        h1, c1 = lstm(g1, c1)

        g2 = jnp.dot(h1, wih2_ref[...], preferred_element_type=jnp.float32) + b2
        if step > 0:
            g2 = g2 + jnp.dot(h2, whh2_ref[...], preferred_element_type=jnp.float32)
        h2, c2 = lstm(g2, c2)

        # char_projection hidden with attention + Wo + Wq + 1/D + cat folded in:
        #   hid = LeakyReLU( cat([h2, mh]) @ Wc1 + bc1 ) == LeakyReLU(h2 @ Wcp[b] + bcp[b])
        hid = jnp.dot(h2, wcp, preferred_element_type=jnp.float32) + bcp
        hid = jnp.where(hid > 0, hid, jnp.float32(0.01) * hid)   # LeakyReLU(0.01)
        hid_out_ref[0, step:step + 1, :] = hid


# ----------------------------------------------------------------------------
# Kernel 2: tied vocab projection batched over all t*B rows (hoisted out of
# the recurrence); vocab axis padded to 128 lanes so stores are lane-dense;
# tied weight contracted directly against emb (no emb^T copy).
# ----------------------------------------------------------------------------
def vocab_projection_kernel(hid_ref, emb_ref, b2_ref, out_ref):
    out_ref[...] = jax.lax.dot_general(
        hid_ref[...], emb_ref[...], (((1,), (1,)), ((), ())),   # hid @ emb^T
        preferred_element_type=jnp.float32) + b2_ref[...]


# ----------------------------------------------------------------------------
# Wrapper
# ----------------------------------------------------------------------------
def decoder_forward(tokens, keys, values, params):
    """tokens: (t, B) int32; keys/values: (T, B, H, K) float32 (PyTorch layout)."""
    t, B = tokens.shape
    T, _, H, K = keys.shape
    V1, D = params["emb"].shape
    HK = H * K
    V1p = pl.cdiv(V1, 128) * 128                 # lane-pad vocab axis
    hp = jax.lax.Precision.HIGHEST

    keys = keys.astype(jnp.float32)
    values = values.astype(jnp.float32)

    # --- one-time parameter prep (loop-invariant algebra / layout plumbing) ---
    emb_pad = jnp.pad(params["emb"], ((0, V1p - V1), (0, 0)))
    bc2_pad = jnp.pad(params["bc2"], ((0, 0), (0, V1p - V1)))

    wih0e_t = params["wih0_t"][:D]               # embed part of cell-0 input weights
    wih0m_t = params["wih0_t"][D:]               # context part
    wc1h_t = params["wc1_t"][:D]                 # h2 part of char-projection hidden
    wc1m_t = params["wc1_t"][D:]                 # context part

    # Fold keys/values/Wo into a per-batch linear attention operator (exact:
    # no softmax -> linear in the query), then fold Wq, bq, 1/D on top.
    A = jnp.einsum('tbhk,tbhj->bhkj', keys, values, precision=hp)        # (B,H,K,K)
    wo_r = params["wo_t"].reshape(H, K, D)
    M = jnp.einsum('bhkj,hjd->bhkd', A, wo_r, precision=hp).reshape(B, HK, D)
    Wfold = jnp.einsum('dk,bke->bde', params["wq_t"], M, precision=hp) / D   # (B,D,D)
    mh_bias = jnp.einsum('k,bkd->bd', params["bq"][0], M, precision=hp) / D + params["bo"]
    mh_init = jnp.einsum('k,bkd->bd', params["bq"][0], M, precision=hp) + params["bo"]
    # (step-0 initial context has NO 1/decoder_dim scaling, matching forward()).

    # Fold the context feedback into LSTM cell 0 and the char-projection hidden.
    Wg = jnp.einsum('bde,ef->bdf', Wfold, wih0m_t, precision=hp)              # (B,D,4D)
    bg = (params["b0"] + jnp.dot(mh_bias, wih0m_t, precision=hp))[:, None, :]   # (B,1,4D)
    bg0 = (params["b0"] + jnp.dot(mh_init, wih0m_t, precision=hp))[:, None, :]  # (B,1,4D)
    Wcp = wc1h_t[None] + jnp.einsum('bde,ef->bdf', Wfold, wc1m_t, precision=hp)  # (B,D,D)
    bcp = (params["bc1"] + jnp.dot(mh_bias, wc1m_t, precision=hp))[:, None, :]   # (B,1,D)

    # --- recurrent kernel: 'parallel' grid over batch rows (megacore on v7x) ---
    bb = 1
    assert B % bb == 0
    nb = B // bb

    def full_spec(a):
        nd = a.ndim
        return pl.BlockSpec(a.shape, lambda i, tok, nd=nd: (0,) * nd)

    shared = (wih0e_t, params["whh0_t"],
              params["wih1_t"], params["whh1_t"], params["b1"],
              params["wih2_t"], params["whh2_t"], params["b2"])

    grid_spec = pltpu.PrefetchScalarGridSpec(
        num_scalar_prefetch=1,
        grid=(nb,),
        in_specs=[full_spec(emb_pad),
                  pl.BlockSpec((bb, D, 4 * D), lambda i, tok: (i, 0, 0)),
                  pl.BlockSpec((bb, 1, 4 * D), lambda i, tok: (i, 0, 0)),
                  pl.BlockSpec((bb, 1, 4 * D), lambda i, tok: (i, 0, 0)),
                  pl.BlockSpec((bb, D, D), lambda i, tok: (i, 0, 0)),
                  pl.BlockSpec((bb, 1, D), lambda i, tok: (i, 0, 0))]
                 + [full_spec(w) for w in shared],
        out_specs=pl.BlockSpec((bb, t, D), lambda i, tok: (i, 0, 0)),
    )

    hid_all = pl.pallas_call(
        decoder_recurrent_kernel,
        out_shape=jax.ShapeDtypeStruct((B, t, D), jnp.float32),
        grid_spec=grid_spec,
        compiler_params=pltpu.CompilerParams(
            dimension_semantics=("parallel",)),
    )(tokens.astype(jnp.int32), emb_pad, Wg, bg, bg0, Wcp, bcp, *shared)

    # --- tied vocab projection batched over t*B rows (lane-dense padded output) ---
    hid_flat = jnp.transpose(hid_all, (1, 0, 2)).reshape(t * B, D)

    logits_pad = pl.pallas_call(
        vocab_projection_kernel,
        out_shape=jax.ShapeDtypeStruct((t * B, V1p), jnp.float32),
    )(hid_flat, emb_pad, bc2_pad)

    logits = logits_pad.reshape(t, B, V1p)[:, :, :V1]

    # gumbel_argmax (glue, host-side RNG substitutes torch.rand):
    eps = 1e-10
    U = jax.random.uniform(jax.random.PRNGKey(123), logits.shape, dtype=jnp.float32)
    gumbel = -jnp.log(eps - jnp.log(U + eps))
    generated = jnp.argmax(logits + gumbel, axis=-1).astype(jnp.int32)
    return logits, generated


# ----------------------------------------------------------------------------
# Pure-JAX reference (direct transcription of the PyTorch forward)
# ----------------------------------------------------------------------------
def reference_logits(tokens, keys, values, p):
    t, B = tokens.shape
    T, _, H, K = keys.shape
    V1, D = p["emb"].shape
    keys_t = jnp.transpose(keys, (1, 0, 2, 3))
    vals_t = jnp.transpose(values, (1, 0, 2, 3))

    def attn(q_flat, denom):
        q = q_flat.reshape(B, H, K)
        pre = jnp.sum(keys_t * q[:, None, :, :], axis=3) / denom
        heads = jnp.sum(pre[:, :, :, None] * vals_t, axis=1)
        return heads.reshape(B, H * K) @ p["wo_t"] + p["bo"]

    h = [jnp.zeros((B, D), jnp.float32)] * 3
    c = [jnp.zeros((B, D), jnp.float32)] * 3
    mh = attn(jnp.broadcast_to(p["bq"], (B, H * K)), 1.0)

    logits = []
    for i in range(t):
        emb = p["emb"][tokens[i]]
        x = jnp.concatenate([emb, mh], axis=1)
        for l in range(3):
            gates = (x @ p[f"wih{l}_t"] + h[l] @ p[f"whh{l}_t"] + p[f"b{l}"])
            ii = jax.nn.sigmoid(gates[:, :D])
            ff = jax.nn.sigmoid(gates[:, D:2 * D])
            gg = jnp.tanh(gates[:, 2 * D:3 * D])
            oo = jax.nn.sigmoid(gates[:, 3 * D:])
            c[l] = ff * c[l] + ii * gg
            h[l] = oo * jnp.tanh(c[l])
            x = h[l]
        q = x @ p["wq_t"] + p["bq"]
        mh = attn(q, float(D))
        ht2 = jnp.concatenate([x, mh], axis=1)
        hid = ht2 @ p["wc1_t"] + p["bc1"]
        hid = jnp.where(hid > 0, hid, 0.01 * hid)
        logits.append(hid @ p["emb"].T + p["bc2"])
    return jnp.stack(logits, axis=0)


# ----------------------------------------------------------------------------
# Deterministic parameter construction
# ----------------------------------------------------------------------------
def make_params(key, vocab_size, D, H, K):
    V1 = vocab_size + 1
    HK = H * K
    names_shapes = [
        ("emb", (V1, D)),
        ("wih0_t", (2 * D, 4 * D)), ("whh0_t", (D, 4 * D)), ("b0", (1, 4 * D)),
        ("wih1_t", (D, 4 * D)), ("whh1_t", (D, 4 * D)), ("b1", (1, 4 * D)),
        ("wih2_t", (D, 4 * D)), ("whh2_t", (D, 4 * D)), ("b2", (1, 4 * D)),
        ("wq_t", (D, HK)), ("bq", (1, HK)),
        ("wo_t", (HK, D)), ("bo", (1, D)),
        ("wc1_t", (2 * D, D)), ("bc1", (1, D)),
        ("bc2", (1, V1)),          # char_projection[-1] weight is tied to emb
    ]
    params = {}
    keys = jax.random.split(key, len(names_shapes))
    for k, (name, shape) in zip(keys, names_shapes):
        params[name] = (0.1 * jax.random.normal(k, shape)).astype(jnp.float32)
    return params


if __name__ == "__main__":
    vocab_size = 19          # -> V1 = 20
    decoder_dim = 32         # D
    num_heads = 4            # H
    key_dim = 16             # K (== value_dim)
    t_dec = 6                # decoder steps
    B = 2                    # batch
    T_utt = 8                # encoder time steps
    # teacher_force_rate = 1.0 -> always teacher-forced; future = 0.
    # TODO(synk): output_mask(...) is computed but never applied in the original
    # forward (attention is unmasked), so utterance_lengths/mask are omitted.

    root = jax.random.PRNGKey(0)
    k_tok, k_keys, k_vals, k_par = jax.random.split(root, 4)

    tokens = jax.random.randint(k_tok, (t_dec, B), 0, vocab_size + 1,
                                dtype=jnp.int32)                  # inputs (t, B)
    keys = jax.random.normal(k_keys, (T_utt, B, num_heads, key_dim),
                             dtype=jnp.float32)
    values = jax.random.normal(k_vals, (T_utt, B, num_heads, key_dim),
                               dtype=jnp.float32)
    params = make_params(k_par, vocab_size, decoder_dim, num_heads, key_dim)

    logits, generated = decoder_forward(tokens, keys, values, params)
    logits = jax.block_until_ready(logits)
    generated = jax.block_until_ready(generated)

    ref = jax.block_until_ready(reference_logits(tokens, keys, values, params))
    np.testing.assert_allclose(np.asarray(logits), np.asarray(ref),
                               rtol=1e-3, atol=1e-3)
    assert logits.shape == (t_dec, B, vocab_size + 1)
    assert generated.shape == (t_dec, B)

    print("KERNEL_OK")
</pallas_src>

<mosaic_0001>
module attributes {stable_mosaic.version = 11 : i64} {
  func.func @decoder_recurrent_kernel(%arg0: i32, %arg1: memref<6x2xi32, #tpu.memory_space<smem>>, %arg2: memref<128x32xf32, #tpu.memory_space<vmem>>, %arg3: memref<1x32x128xf32, #tpu.memory_space<vmem>>, %arg4: memref<1x1x128xf32, #tpu.memory_space<vmem>>, %arg5: memref<1x1x128xf32, #tpu.memory_space<vmem>>, %arg6: memref<1x32x32xf32, #tpu.memory_space<vmem>>, %arg7: memref<1x1x32xf32, #tpu.memory_space<vmem>>, %arg8: memref<32x128xf32, #tpu.memory_space<vmem>>, %arg9: memref<32x128xf32, #tpu.memory_space<vmem>>, %arg10: memref<32x128xf32, #tpu.memory_space<vmem>>, %arg11: memref<32x128xf32, #tpu.memory_space<vmem>>, %arg12: memref<1x128xf32, #tpu.memory_space<vmem>>, %arg13: memref<32x128xf32, #tpu.memory_space<vmem>>, %arg14: memref<32x128xf32, #tpu.memory_space<vmem>>, %arg15: memref<1x128xf32, #tpu.memory_space<vmem>>, %arg16: memref<1x6x32xf32, #tpu.memory_space<vmem>>) attributes {dimension_semantics = [#tpu.dimension_semantics<parallel>], iteration_bounds = array<i64: 2>, scalar_prefetch = 1 : i64, scratch_operands = 0 : i64, tpu.core_type = #tpu.core_type<tc>, window_params = [{pipeline_mode = #tpu.pipeline_mode<synchronous>, transform_indices = @transform_0, window_bounds = array<i64: 128, 32>}, {transform_indices = @transform_1, window_bounds = array<i64: 1, 32, 128>}, {transform_indices = @transform_2, window_bounds = array<i64: 1, 1, 128>}, {transform_indices = @transform_3, window_bounds = array<i64: 1, 1, 128>}, {transform_indices = @transform_4, window_bounds = array<i64: 1, 32, 32>}, {transform_indices = @transform_5, window_bounds = array<i64: 1, 1, 32>}, {pipeline_mode = #tpu.pipeline_mode<synchronous>, transform_indices = @transform_6, window_bounds = array<i64: 32, 128>}, {pipeline_mode = #tpu.pipeline_mode<synchronous>, transform_indices = @transform_7, window_bounds = array<i64: 32, 128>}, {pipeline_mode = #tpu.pipeline_mode<synchronous>, transform_indices = @transform_8, window_bounds = array<i64: 32, 128>}, {pipeline_mode = #tpu.pipeline_mode<synchronous>, transform_indices = @transform_9, window_bounds = array<i64: 32, 128>}, {pipeline_mode = #tpu.pipeline_mode<synchronous>, transform_indices = @transform_10, window_bounds = array<i64: 1, 128>}, {pipeline_mode = #tpu.pipeline_mode<synchronous>, transform_indices = @transform_11, window_bounds = array<i64: 32, 128>}, {pipeline_mode = #tpu.pipeline_mode<synchronous>, transform_indices = @transform_12, window_bounds = array<i64: 32, 128>}, {pipeline_mode = #tpu.pipeline_mode<synchronous>, transform_indices = @transform_13, window_bounds = array<i64: 1, 128>}, {transform_indices = @transform_14, window_bounds = array<i64: 1, 6, 32>}]} {
    %c1_i32 = arith.constant 1 : i32
    %0 = arith.muli %arg0, %c1_i32 : i32
    %c0 = arith.constant 0 : index
    %c0_0 = arith.constant 0 : index
    %c0_1 = arith.constant 0 : index
    %1 = vector.load %arg3[%c0, %c0_0, %c0_1] : memref<1x32x128xf32, #tpu.memory_space<vmem>>, vector<1x32x128xf32>
    %2 = vector.shape_cast %1 : vector<1x32x128xf32> to vector<32x128xf32>
    %c0_2 = arith.constant 0 : index
    %c0_3 = arith.constant 0 : index
    %c0_4 = arith.constant 0 : index
    %3 = vector.load %arg6[%c0_2, %c0_3, %c0_4] : memref<1x32x32xf32, #tpu.memory_space<vmem>>, vector<1x32x32xf32>
    %4 = vector.shape_cast %3 : vector<1x32x32xf32> to vector<32x32xf32>
    %c0_5 = arith.constant 0 : index
    %c0_6 = arith.constant 0 : index
    %c0_7 = arith.constant 0 : index
    %5 = vector.load %arg4[%c0_5, %c0_6, %c0_7] : memref<1x1x128xf32, #tpu.memory_space<vmem>>, vector<1x1x128xf32>
    %6 = vector.shape_cast %5 : vector<1x1x128xf32> to vector<1x128xf32>
    %c0_8 = arith.constant 0 : index
    %c0_9 = arith.constant 0 : index
    %c0_10 = arith.constant 0 : index
    %7 = vector.load %arg5[%c0_8, %c0_9, %c0_10] : memref<1x1x128xf32, #tpu.memory_space<vmem>>, vector<1x1x128xf32>
    %8 = vector.shape_cast %7 : vector<1x1x128xf32> to vector<1x128xf32>
    %c0_11 = arith.constant 0 : index
    %c0_12 = arith.constant 0 : index
    %c0_13 = arith.constant 0 : index
    %9 = vector.load %arg7[%c0_11, %c0_12, %c0_13] : memref<1x1x32xf32, #tpu.memory_space<vmem>>, vector<1x1x32xf32>
    %10 = vector.shape_cast %9 : vector<1x1x32xf32> to vector<1x32xf32>
    %c0_14 = arith.constant 0 : index
    %c0_15 = arith.constant 0 : index
    %11 = vector.load %arg12[%c0_14, %c0_15] : memref<1x128xf32, #tpu.memory_space<vmem>>, vector<1x128xf32>
    %c0_16 = arith.constant 0 : index
    %c0_17 = arith.constant 0 : index
    %12 = vector.load %arg15[%c0_16, %c0_17] : memref<1x128xf32, #tpu.memory_space<vmem>>, vector<1x128xf32>
    %c0_18 = arith.constant 0 : index
    %13 = arith.index_cast %0 : i32 to index
    %14 = memref.load %arg1[%c0_18, %13] : memref<6x2xi32, #tpu.memory_space<smem>>
    %15 = arith.index_cast %14 : i32 to index
    %c0_19 = arith.constant 0 : index
    %16 = vector.load %arg2[%15, %c0_19] : memref<128x32xf32, #tpu.memory_space<vmem>>, vector<1x32xf32>
    %c0_20 = arith.constant 0 : index
    %c0_21 = arith.constant 0 : index
    %17 = vector.load %arg8[%c0_20, %c0_21] : memref<32x128xf32, #tpu.memory_space<vmem>>, vector<32x128xf32>
    %cst = arith.constant dense<0.000000e+00> : vector<1x128xf32>
    %18 = tpu.matmul %16, %17, %cst {dimension_numbers = #tpu.dot_dimension_numbers<[1], [0], [0], [1], [0, 0, 1, 1], [], []>} : vector<1x32xf32>, vector<32x128xf32>, vector<1x128xf32> -> vector<1x128xf32>
    %19 = arith.addf %18, %8 : vector<1x128xf32>
    %20 = vector.extract_strided_slice %19 {offsets = [0, 0], sizes = [1, 32], strides = [1, 1]} : vector<1x128xf32> to vector<1x32xf32>
    %21 = arith.negf %20 : vector<1x32xf32>
    %22 = math.exp %21 : vector<1x32xf32>
    %cst_22 = arith.constant 1.000000e+00 : f32
    %23 = vector.broadcast %cst_22 : f32 to vector<1x32xf32>
    %24 = arith.addf %23, %22 : vector<1x32xf32>
    %25 = arith.divf %23, %24 : vector<1x32xf32>
    %26 = vector.extract_strided_slice %19 {offsets = [0, 64], sizes = [1, 32], strides = [1, 1]} : vector<1x128xf32> to vector<1x32xf32>
    %27 = math.tanh %26 : vector<1x32xf32>
    %28 = vector.extract_strided_slice %19 {offsets = [0, 96], sizes = [1, 32], strides = [1, 1]} : vector<1x128xf32> to vector<1x32xf32>
    %29 = arith.negf %28 : vector<1x32xf32>
    %30 = math.exp %29 : vector<1x32xf32>
    %cst_23 = arith.constant 1.000000e+00 : f32
    %31 = vector.broadcast %cst_23 : f32 to vector<1x32xf32>
    %32 = arith.addf %31, %30 : vector<1x32xf32>
    %33 = arith.divf %31, %32 : vector<1x32xf32>
    %34 = arith.mulf %25, %27 : vector<1x32xf32>
    %35 = math.tanh %34 : vector<1x32xf32>
    %36 = arith.mulf %33, %35 : vector<1x32xf32>
    %c0_24 = arith.constant 0 : index
    %c0_25 = arith.constant 0 : index
    %37 = vector.load %arg10[%c0_24, %c0_25] : memref<32x128xf32, #tpu.memory_space<vmem>>, vector<32x128xf32>
    %cst_26 = arith.constant dense<0.000000e+00> : vector<1x128xf32>
    %38 = tpu.matmul %36, %37, %cst_26 {dimension_numbers = #tpu.dot_dimension_numbers<[1], [0], [0], [1], [0, 0, 1, 1], [], []>} : vector<1x32xf32>, vector<32x128xf32>, vector<1x128xf32> -> vector<1x128xf32>
    %39 = arith.addf %38, %11 : vector<1x128xf32>
    %40 = vector.extract_strided_slice %39 {offsets = [0, 0], sizes = [1, 32], strides = [1, 1]} : vector<1x128xf32> to vector<1x32xf32>
    %41 = arith.negf %40 : vector<1x32xf32>
    %42 = math.exp %41 : vector<1x32xf32>
    %cst_27 = arith.constant 1.000000e+00 : f32
    %43 = vector.broadcast %cst_27 : f32 to vector<1x32xf32>
    %44 = arith.addf %43, %42 : vector<1x32xf32>
    %45 = arith.divf %43, %44 : vector<1x32xf32>
    %46 = vector.extract_strided_slice %39 {offsets = [0, 64], sizes = [1, 32], strides = [1, 1]} : vector<1x128xf32> to vector<1x32xf32>
    %47 = math.tanh %46 : vector<1x32xf32>
    %48 = vector.extract_strided_slice %39 {offsets = [0, 96], sizes = [1, 32], strides = [1, 1]} : vector<1x128xf32> to vector<1x32xf32>
    %49 = arith.negf %48 : vector<1x32xf32>
    %50 = math.exp %49 : vector<1x32xf32>
    %cst_28 = arith.constant 1.000000e+00 : f32
    %51 = vector.broadcast %cst_28 : f32 to vector<1x32xf32>
    %52 = arith.addf %51, %50 : vector<1x32xf32>
    %53 = arith.divf %51, %52 : vector<1x32xf32>
    %54 = arith.mulf %45, %47 : vector<1x32xf32>
    %55 = math.tanh %54 : vector<1x32xf32>
    %56 = arith.mulf %53, %55 : vector<1x32xf32>
    %c0_29 = arith.constant 0 : index
    %c0_30 = arith.constant 0 : index
    %57 = vector.load %arg13[%c0_29, %c0_30] : memref<32x128xf32, #tpu.memory_space<vmem>>, vector<32x128xf32>
    %cst_31 = arith.constant dense<0.000000e+00> : vector<1x128xf32>
    %58 = tpu.matmul %56, %57, %cst_31 {dimension_numbers = #tpu.dot_dimension_numbers<[1], [0], [0], [1], [0, 0, 1, 1], [], []>} : vector<1x32xf32>, vector<32x128xf32>, vector<1x128xf32> -> vector<1x128xf32>
    %59 = arith.addf %58, %12 : vector<1x128xf32>
    %60 = vector.extract_strided_slice %59 {offsets = [0, 0], sizes = [1, 32], strides = [1, 1]} : vector<1x128xf32> to vector<1x32xf32>
    %61 = arith.negf %60 : vector<1x32xf32>
    %62 = math.exp %61 : vector<1x32xf32>
    %cst_32 = arith.constant 1.000000e+00 : f32
    %63 = vector.broadcast %cst_32 : f32 to vector<1x32xf32>
    %64 = arith.addf %63, %62 : vector<1x32xf32>
    %65 = arith.divf %63, %64 : vector<1x32xf32>
    %66 = vector.extract_strided_slice %59 {offsets = [0, 64], sizes = [1, 32], strides = [1, 1]} : vector<1x128xf32> to vector<1x32xf32>
    %67 = math.tanh %66 : vector<1x32xf32>
    %68 = vector.extract_strided_slice %59 {offsets = [0, 96], sizes = [1, 32], strides = [1, 1]} : vector<1x128xf32> to vector<1x32xf32>
    %69 = arith.negf %68 : vector<1x32xf32>
    %70 = math.exp %69 : vector<1x32xf32>
    %cst_33 = arith.constant 1.000000e+00 : f32
    %71 = vector.broadcast %cst_33 : f32 to vector<1x32xf32>
    %72 = arith.addf %71, %70 : vector<1x32xf32>
    %73 = arith.divf %71, %72 : vector<1x32xf32>
    %74 = arith.mulf %65, %67 : vector<1x32xf32>
    %75 = math.tanh %74 : vector<1x32xf32>
    %76 = arith.mulf %73, %75 : vector<1x32xf32>
    %cst_34 = arith.constant dense<0.000000e+00> : vector<1x32xf32>
    %77 = tpu.matmul %76, %4, %cst_34 {dimension_numbers = #tpu.dot_dimension_numbers<[1], [0], [0], [1], [0, 0, 1, 1], [], []>} : vector<1x32xf32>, vector<32x32xf32>, vector<1x32xf32> -> vector<1x32xf32>
    %78 = arith.addf %77, %10 : vector<1x32xf32>
    %cst_35 = arith.constant 0.000000e+00 : f32
    %79 = vector.broadcast %cst_35 : f32 to vector<1x32xf32>
    %80 = arith.cmpf ogt, %78, %79 : vector<1x32xf32>
    %cst_36 = arith.constant 0.00999999977 : f32
    %81 = vector.broadcast %cst_36 : f32 to vector<1x32xf32>
    %82 = arith.mulf %81, %78 : vector<1x32xf32>
    %83 = arith.select %80, %78, %82 : vector<1x32xi1>, vector<1x32xf32>
    %c0_37 = arith.constant 0 : index
    %c0_38 = arith.constant 0 : index
    %c0_39 = arith.constant 0 : index
    %84 = vector.load %arg16[%c0_37, %c0_38, %c0_39] : memref<1x6x32xf32, #tpu.memory_space<vmem>>, vector<1x1x32xf32>
    %85 = vector.shape_cast %84 : vector<1x1x32xf32> to vector<1x32xf32>
    %86 = vector.shape_cast %83 : vector<1x32xf32> to vector<1x1x32xf32>
    tpu.vector_store %arg16[%c0_37, %c0_38, %c0_39], %86 {strides = array<i32>} : memref<1x6x32xf32, #tpu.memory_space<vmem>>, vector<1x1x32xf32>,
    %c1 = arith.constant 1 : index
    %87 = arith.index_cast %0 : i32 to index
    %88 = memref.load %arg1[%c1, %87] : memref<6x2xi32, #tpu.memory_space<smem>>
    %89 = arith.index_cast %88 : i32 to index
    %c0_40 = arith.constant 0 : index
    %90 = vector.load %arg2[%89, %c0_40] : memref<128x32xf32, #tpu.memory_space<vmem>>, vector<1x32xf32>
    %c0_41 = arith.constant 0 : index
    %c0_42 = arith.constant 0 : index
    %91 = vector.load %arg8[%c0_41, %c0_42] : memref<32x128xf32, #tpu.memory_space<vmem>>, vector<32x128xf32>
    %cst_43 = arith.constant dense<0.000000e+00> : vector<1x128xf32>
    %92 = tpu.matmul %90, %91, %cst_43 {dimension_numbers = #tpu.dot_dimension_numbers<[1], [0], [0], [1], [0, 0, 1, 1], [], []>} : vector<1x32xf32>, vector<32x128xf32>, vector<1x128xf32> -> vector<1x128xf32>
    %cst_44 = arith.constant dense<0.000000e+00> : vector<1x128xf32>
    %93 = tpu.matmul %76, %2, %cst_44 {dimension_numbers = #tpu.dot_dimension_numbers<[1], [0], [0], [1], [0, 0, 1, 1], [], []>} : vector<1x32xf32>, vector<32x128xf32>, vector<1x128xf32> -> vector<1x128xf32>
    %94 = arith.addf %92, %93 : vector<1x128xf32>
    %c0_45 = arith.constant 0 : index
    %c0_46 = arith.constant 0 : index
    %95 = vector.load %arg9[%c0_45, %c0_46] : memref<32x128xf32, #tpu.memory_space<vmem>>, vector<32x128xf32>
    %cst_47 = arith.constant dense<0.000000e+00> : vector<1x128xf32>
    %96 = tpu.matmul %36, %95, %cst_47 {dimension_numbers = #tpu.dot_dimension_numbers<[1], [0], [0], [1], [0, 0, 1, 1], [], []>} : vector<1x32xf32>, vector<32x128xf32>, vector<1x128xf32> -> vector<1x128xf32>
    %97 = arith.addf %94, %96 : vector<1x128xf32>
    %98 = arith.addf %97, %6 : vector<1x128xf32>
    %99 = vector.extract_strided_slice %98 {offsets = [0, 0], sizes = [1, 32], strides = [1, 1]} : vector<1x128xf32> to vector<1x32xf32>
    %100 = arith.negf %99 : vector<1x32xf32>
    %101 = math.exp %100 : vector<1x32xf32>
    %cst_48 = arith.constant 1.000000e+00 : f32
    %102 = vector.broadcast %cst_48 : f32 to vector<1x32xf32>
    %103 = arith.addf %102, %101 : vector<1x32xf32>
    %104 = arith.divf %102, %103 : vector<1x32xf32>
    %105 = vector.extract_strided_slice %98 {offsets = [0, 64], sizes = [1, 32], strides = [1, 1]} : vector<1x128xf32> to vector<1x32xf32>
    %106 = math.tanh %105 : vector<1x32xf32>
    %107 = vector.extract_strided_slice %98 {offsets = [0, 96], sizes = [1, 32], strides = [1, 1]} : vector<1x128xf32> to vector<1x32xf32>
    %108 = arith.negf %107 : vector<1x32xf32>
    %109 = math.exp %108 : vector<1x32xf32>
    %cst_49 = arith.constant 1.000000e+00 : f32
    %110 = vector.broadcast %cst_49 : f32 to vector<1x32xf32>
    %111 = arith.addf %110, %109 : vector<1x32xf32>
    %112 = arith.divf %110, %111 : vector<1x32xf32>
    %113 = arith.mulf %104, %106 : vector<1x32xf32>
    %114 = vector.extract_strided_slice %98 {offsets = [0, 32], sizes = [1, 32], strides = [1, 1]} : vector<1x128xf32> to vector<1x32xf32>
    %115 = arith.negf %114 : vector<1x32xf32>
    %116 = math.exp %115 : vector<1x32xf32>
    %cst_50 = arith.constant 1.000000e+00 : f32
    %117 = vector.broadcast %cst_50 : f32 to vector<1x32xf32>
    %118 = arith.addf %117, %116 : vector<1x32xf32>
    %119 = arith.divf %117, %118 : vector<1x32xf32>
    %120 = arith.mulf %119, %34 : vector<1x32xf32>
    %121 = arith.addf %113, %120 : vector<1x32xf32>
    %122 = math.tanh %121 : vector<1x32xf32>
    %123 = arith.mulf %112, %122 : vector<1x32xf32>
    %c0_51 = arith.constant 0 : index
    %c0_52 = arith.constant 0 : index
    %124 = vector.load %arg10[%c0_51, %c0_52] : memref<32x128xf32, #tpu.memory_space<vmem>>, vector<32x128xf32>
    %cst_53 = arith.constant dense<0.000000e+00> : vector<1x128xf32>
    %125 = tpu.matmul %123, %124, %cst_53 {dimension_numbers = #tpu.dot_dimension_numbers<[1], [0], [0], [1], [0, 0, 1, 1], [], []>} : vector<1x32xf32>, vector<32x128xf32>, vector<1x128xf32> -> vector<1x128xf32>
    %126 = arith.addf %125, %11 : vector<1x128xf32>
    %c0_54 = arith.constant 0 : index
    %c0_55 = arith.constant 0 : index
    %127 = vector.load %arg11[%c0_54, %c0_55] : memref<32x128xf32, #tpu.memory_space<vmem>>, vector<32x128xf32>
    %cst_56 = arith.constant dense<0.000000e+00> : vector<1x128xf32>
    %128 = tpu.matmul %56, %127, %cst_56 {dimension_numbers = #tpu.dot_dimension_numbers<[1], [0], [0], [1], [0, 0, 1, 1], [], []>} : vector<1x32xf32>, vector<32x128xf32>, vector<1x128xf32> -> vector<1x128xf32>
    %129 = arith.addf %126, %128 : vector<1x128xf32>
    %130 = vector.extract_strided_slice %129 {offsets = [0, 0], sizes = [1, 32], strides = [1, 1]} : vector<1x128xf32> to vector<1x32xf32>
    %131 = arith.negf %130 : vector<1x32xf32>
    %132 = math.exp %131 : vector<1x32xf32>
    %cst_57 = arith.constant 1.000000e+00 : f32
    %133 = vector.broadcast %cst_57 : f32 to vector<1x32xf32>
    %134 = arith.addf %133, %132 : vector<1x32xf32>
    %135 = arith.divf %133, %134 : vector<1x32xf32>
    %136 = vector.extract_strided_slice %129 {offsets = [0, 64], sizes = [1, 32], strides = [1, 1]} : vector<1x128xf32> to vector<1x32xf32>
    %137 = math.tanh %136 : vector<1x32xf32>
    %138 = vector.extract_strided_slice %129 {offsets = [0, 96], sizes = [1, 32], strides = [1, 1]} : vector<1x128xf32> to vector<1x32xf32>
    %139 = arith.negf %138 : vector<1x32xf32>
    %140 = math.exp %139 : vector<1x32xf32>
    %cst_58 = arith.constant 1.000000e+00 : f32
    %141 = vector.broadcast %cst_58 : f32 to vector<1x32xf32>
    %142 = arith.addf %141, %140 : vector<1x32xf32>
    %143 = arith.divf %141, %142 : vector<1x32xf32>
    %144 = arith.mulf %135, %137 : vector<1x32xf32>
    %145 = vector.extract_strided_slice %129 {offsets = [0, 32], sizes = [1, 32], strides = [1, 1]} : vector<1x128xf32> to vector<1x32xf32>
    %146 = arith.negf %145 : vector<1x32xf32>
    %147 = math.exp %146 : vector<1x32xf32>
    %cst_59 = arith.constant 1.000000e+00 : f32
    %148 = vector.broadcast %cst_59 : f32 to vector<1x32xf32>
    %149 = arith.addf %148, %147 : vector<1x32xf32>
    %150 = arith.divf %148, %149 : vector<1x32xf32>
    %151 = arith.mulf %150, %54 : vector<1x32xf32>
    %152 = arith.addf %144, %151 : vector<1x32xf32>
    %153 = math.tanh %152 : vector<1x32xf32>
    %154 = arith.mulf %143, %153 : vector<1x32xf32>
    %c0_60 = arith.constant 0 : index
    %c0_61 = arith.constant 0 : index
    %155 = vector.load %arg13[%c0_60, %c0_61] : memref<32x128xf32, #tpu.memory_space<vmem>>, vector<32x128xf32>
    %cst_62 = arith.constant dense<0.000000e+00> : vector<1x128xf32>
    %156 = tpu.matmul %154, %155, %cst_62 {dimension_numbers = #tpu.dot_dimension_numbers<[1], [0], [0], [1], [0, 0, 1, 1], [], []>} : vector<1x32xf32>, vector<32x128xf32>, vector<1x128xf32> -> vector<1x128xf32>
    %157 = arith.addf %156, %12 : vector<1x128xf32>
    %c0_63 = arith.constant 0 : index
    %c0_64 = arith.constant 0 : index
    %158 = vector.load %arg14[%c0_63, %c0_64] : memref<32x128xf32, #tpu.memory_space<vmem>>, vector<32x128xf32>
    %cst_65 = arith.constant dense<0.000000e+00> : vector<1x128xf32>
    %159 = tpu.matmul %76, %158, %cst_65 {dimension_numbers = #tpu.dot_dimension_numbers<[1], [0], [0], [1], [0, 0, 1, 1], [], []>} : vector<1x32xf32>, vector<32x128xf32>, vector<1x128xf32> -> vector<1x128xf32>
    %160 = arith.addf %157, %159 : vector<1x128xf32>
    %161 = vector.extract_strided_slice %160 {offsets = [0, 0], sizes = [1, 32], strides = [1, 1]} : vector<1x128xf32> to vector<1x32xf32>
    %162 = arith.negf %161 : vector<1x32xf32>
    %163 = math.exp %162 : vector<1x32xf32>
    %cst_66 = arith.constant 1.000000e+00 : f32
    %164 = vector.broadcast %cst_66 : f32 to vector<1x32xf32>
    %165 = arith.addf %164, %163 : vector<1x32xf32>
    %166 = arith.divf %164, %165 : vector<1x32xf32>
    %167 = vector.extract_strided_slice %160 {offsets = [0, 64], sizes = [1, 32], strides = [1, 1]} : vector<1x128xf32> to vector<1x32xf32>
    %168 = math.tanh %167 : vector<1x32xf32>
    %169 = vector.extract_strided_slice %160 {offsets = [0, 96], sizes = [1, 32], strides = [1, 1]} : vector<1x128xf32> to vector<1x32xf32>
    %170 = arith.negf %169 : vector<1x32xf32>
    %171 = math.exp %170 : vector<1x32xf32>
    %cst_67 = arith.constant 1.000000e+00 : f32
    %172 = vector.broadcast %cst_67 : f32 to vector<1x32xf32>
    %173 = arith.addf %172, %171 : vector<1x32xf32>
    %174 = arith.divf %172, %173 : vector<1x32xf32>
    %175 = arith.mulf %166, %168 : vector<1x32xf32>
    %176 = vector.extract_strided_slice %160 {offsets = [0, 32], sizes = [1, 32], strides = [1, 1]} : vector<1x128xf32> to vector<1x32xf32>
    %177 = arith.negf %176 : vector<1x32xf32>
    %178 = math.exp %177 : vector<1x32xf32>
    %cst_68 = arith.constant 1.000000e+00 : f32
    %179 = vector.broadcast %cst_68 : f32 to vector<1x32xf32>
    %180 = arith.addf %179, %178 : vector<1x32xf32>
    %181 = arith.divf %179, %180 : vector<1x32xf32>
    %182 = arith.mulf %181, %74 : vector<1x32xf32>
    %183 = arith.addf %175, %182 : vector<1x32xf32>
    %184 = math.tanh %183 : vector<1x32xf32>
    %185 = arith.mulf %174, %184 : vector<1x32xf32>
    %cst_69 = arith.constant dense<0.000000e+00> : vector<1x32xf32>
    %186 = tpu.matmul %185, %4, %cst_69 {dimension_numbers = #tpu.dot_dimension_numbers<[1], [0], [0], [1], [0, 0, 1, 1], [], []>} : vector<1x32xf32>, vector<32x32xf32>, vector<1x32xf32> -> vector<1x32xf32>
    %187 = arith.addf %186, %10 : vector<1x32xf32>
    %cst_70 = arith.constant 0.000000e+00 : f32
    %188 = vector.broadcast %cst_70 : f32 to vector<1x32xf32>
    %189 = arith.cmpf ogt, %187, %188 : vector<1x32xf32>
    %cst_71 = arith.constant 0.00999999977 : f32
    %190 = vector.broadcast %cst_71 : f32 to vector<1x32xf32>
    %191 = arith.mulf %190, %187 : vector<1x32xf32>
    %192 = arith.select %189, %187, %191 : vector<1x32xi1>, vector<1x32xf32>
    %c0_72 = arith.constant 0 : index
    %c1_73 = arith.constant 1 : index
    %c0_74 = arith.constant 0 : index
    %193 = vector.load %arg16[%c0_72, %c1_73, %c0_74] : memref<1x6x32xf32, #tpu.memory_space<vmem>>, vector<1x1x32xf32>
    %194 = vector.shape_cast %193 : vector<1x1x32xf32> to vector<1x32xf32>
    %195 = vector.shape_cast %192 : vector<1x32xf32> to vector<1x1x32xf32>
    tpu.vector_store %arg16[%c0_72, %c1_73, %c0_74], %195 {strides = array<i32>} : memref<1x6x32xf32, #tpu.memory_space<vmem>>, vector<1x1x32xf32>,
    %c2 = arith.constant 2 : index
    %196 = arith.index_cast %0 : i32 to index
    %197 = memref.load %arg1[%c2, %196] : memref<6x2xi32, #tpu.memory_space<smem>>
    %198 = arith.index_cast %197 : i32 to index
    %c0_75 = arith.constant 0 : index
    %199 = vector.load %arg2[%198, %c0_75] : memref<128x32xf32, #tpu.memory_space<vmem>>, vector<1x32xf32>
    %c0_76 = arith.constant 0 : index
    %c0_77 = arith.constant 0 : index
    %200 = vector.load %arg8[%c0_76, %c0_77] : memref<32x128xf32, #tpu.memory_space<vmem>>, vector<32x128xf32>
    %cst_78 = arith.constant dense<0.000000e+00> : vector<1x128xf32>
    %201 = tpu.matmul %199, %200, %cst_78 {dimension_numbers = #tpu.dot_dimension_numbers<[1], [0], [0], [1], [0, 0, 1, 1], [], []>} : vector<1x32xf32>, vector<32x128xf32>, vector<1x128xf32> -> vector<1x128xf32>
    %cst_79 = arith.constant dense<0.000000e+00> : vector<1x128xf32>
    %202 = tpu.matmul %185, %2, %cst_79 {dimension_numbers = #tpu.dot_dimension_numbers<[1], [0], [0], [1], [0, 0, 1, 1], [], []>} : vector<1x32xf32>, vector<32x128xf32>, vector<1x128xf32> -> vector<1x128xf32>
    %203 = arith.addf %201, %202 : vector<1x128xf32>
    %c0_80 = arith.constant 0 : index
    %c0_81 = arith.constant 0 : index
    %204 = vector.load %arg9[%c0_80, %c0_81] : memref<32x128xf32, #tpu.memory_space<vmem>>, vector<32x128xf32>
    %cst_82 = arith.constant dense<0.000000e+00> : vector<1x128xf32>
    %205 = tpu.matmul %123, %204, %cst_82 {dimension_numbers = #tpu.dot_dimension_numbers<[1], [0], [0], [1], [0, 0, 1, 1], [], []>} : vector<1x32xf32>, vector<32x128xf32>, vector<1x128xf32> -> vector<1x128xf32>
    %206 = arith.addf %203, %205 : vector<1x128xf32>
    %207 = arith.addf %206, %6 : vector<1x128xf32>
    %208 = vector.extract_strided_slice %207 {offsets = [0, 0], sizes = [1, 32], strides = [1, 1]} : vector<1x128xf32> to vector<1x32xf32>
    %209 = arith.negf %208 : vector<1x32xf32>
    %210 = math.exp %209 : vector<1x32xf32>
    %cst_83 = arith.constant 1.000000e+00 : f32
    %211 = vector.broadcast %cst_83 : f32 to vector<1x32xf32>
    %212 = arith.addf %211, %210 : vector<1x32xf32>
    %213 = arith.divf %211, %212 : vector<1x32xf32>
    %214 = vector.extract_strided_slice %207 {offsets = [0, 64], sizes = [1, 32], strides = [1, 1]} : vector<1x128xf32> to vector<1x32xf32>
    %215 = math.tanh %214 : vector<1x32xf32>
    %216 = vector.extract_strided_slice %207 {offsets = [0, 96], sizes = [1, 32], strides = [1, 1]} : vector<1x128xf32> to vector<1x32xf32>
    %217 = arith.negf %216 : vector<1x32xf32>
    %218 = math.exp %217 : vector<1x32xf32>
    %cst_84 = arith.constant 1.000000e+00 : f32
    %219 = vector.broadcast %cst_84 : f32 to vector<1x32xf32>
    %220 = arith.addf %219, %218 : vector<1x32xf32>
    %221 = arith.divf %219, %220 : vector<1x32xf32>
    %222 = arith.mulf %213, %215 : vector<1x32xf32>
    %223 = vector.extract_strided_slice %207 {offsets = [0, 32], sizes = [1, 32], strides = [1, 1]} : vector<1x128xf32> to vector<1x32xf32>
    %224 = arith.negf %223 : vector<1x32xf32>
    %225 = math.exp %224 : vector<1x32xf32>
    %cst_85 = arith.constant 1.000000e+00 : f32
    %226 = vector.broadcast %cst_85 : f32 to vector<1x32xf32>
    %227 = arith.addf %226, %225 : vector<1x32xf32>
    %228 = arith.divf %226, %227 : vector<1x32xf32>
    %229 = arith.mulf %228, %121 : vector<1x32xf32>
    %230 = arith.addf %222, %229 : vector<1x32xf32>
    %231 = math.tanh %230 : vector<1x32xf32>
    %232 = arith.mulf %221, %231 : vector<1x32xf32>
    %c0_86 = arith.constant 0 : index
    %c0_87 = arith.constant 0 : index
    %233 = vector.load %arg10[%c0_86, %c0_87] : memref<32x128xf32, #tpu.memory_space<vmem>>, vector<32x128xf32>
    %cst_88 = arith.constant dense<0.000000e+00> : vector<1x128xf32>
    %234 = tpu.matmul %232, %233, %cst_88 {dimension_numbers = #tpu.dot_dimension_numbers<[1], [0], [0], [1], [0, 0, 1, 1], [], []>} : vector<1x32xf32>, vector<32x128xf32>, vector<1x128xf32> -> vector<1x128xf32>
    %235 = arith.addf %234, %11 : vector<1x128xf32>
    %c0_89 = arith.constant 0 : index
    %c0_90 = arith.constant 0 : index
    %236 = vector.load %arg11[%c0_89, %c0_90] : memref<32x128xf32, #tpu.memory_space<vmem>>, vector<32x128xf32>
    %cst_91 = arith.constant dense<0.000000e+00> : vector<1x128xf32>
    %237 = tpu.matmul %154, %236, %cst_91 {dimension_numbers = #tpu.dot_dimension_numbers<[1], [0], [0], [1], [0, 0, 1, 1], [], []>} : vector<1x32xf32>, vector<32x128xf32>, vector<1x128xf32> -> vector<1x128xf32>
    %238 = arith.addf %235, %237 : vector<1x128xf32>
    %239 = vector.extract_strided_slice %238 {offsets = [0, 0], sizes = [1, 32], strides = [1, 1]} : vector<1x128xf32> to vector<1x32xf32>
    %240 = arith.negf %239 : vector<1x32xf32>
    %241 = math.exp %240 : vector<1x32xf32>
    %cst_92 = arith.constant 1.000000e+00 : f32
    %242 = vector.broadcast %cst_92 : f32 to vector<1x32xf32>
    %243 = arith.addf %242, %241 : vector<1x32xf32>
    %244 = arith.divf %242, %243 : vector<1x32xf32>
    %245 = vector.extract_strided_slice %238 {offsets = [0, 64], sizes = [1, 32], strides = [1, 1]} : vector<1x128xf32> to vector<1x32xf32>
    %246 = math.tanh %245 : vector<1x32xf32>
    %247 = vector.extract_strided_slice %238 {offsets = [0, 96], sizes = [1, 32], strides = [1, 1]} : vector<1x128xf32> to vector<1x32xf32>
    %248 = arith.negf %247 : vector<1x32xf32>
    %249 = math.exp %248 : vector<1x32xf32>
    %cst_93 = arith.constant 1.000000e+00 : f32
    %250 = vector.broadcast %cst_93 : f32 to vector<1x32xf32>
    %251 = arith.addf %250, %249 : vector<1x32xf32>
    %252 = arith.divf %250, %251 : vector<1x32xf32>
    %253 = arith.mulf %244, %246 : vector<1x32xf32>
    %254 = vector.extract_strided_slice %238 {offsets = [0, 32], sizes = [1, 32], strides = [1, 1]} : vector<1x128xf32> to vector<1x32xf32>
    %255 = arith.negf %254 : vector<1x32xf32>
    %256 = math.exp %255 : vector<1x32xf32>
    %cst_94 = arith.constant 1.000000e+00 : f32
    %257 = vector.broadcast %cst_94 : f32 to vector<1x32xf32>
    %258 = arith.addf %257, %256 : vector<1x32xf32>
    %259 = arith.divf %257, %258 : vector<1x32xf32>
    %260 = arith.mulf %259, %152 : vector<1x32xf32>
    %261 = arith.addf %253, %260 : vector<1x32xf32>
    %262 = math.tanh %261 : vector<1x32xf32>
    %263 = arith.mulf %252, %262 : vector<1x32xf32>
    %c0_95 = arith.constant 0 : index
    %c0_96 = arith.constant 0 : index
    %264 = vector.load %arg13[%c0_95, %c0_96] : memref<32x128xf32, #tpu.memory_space<vmem>>, vector<32x128xf32>
    %cst_97 = arith.constant dense<0.000000e+00> : vector<1x128xf32>
    %265 = tpu.matmul %263, %264, %cst_97 {dimension_numbers = #tpu.dot_dimension_numbers<[1], [0], [0], [1], [0, 0, 1, 1], [], []>} : vector<1x32xf32>, vector<32x128xf32>, vector<1x128xf32> -> vector<1x128xf32>
    %266 = arith.addf %265, %12 : vector<1x128xf32>
    %c0_98 = arith.constant 0 : index
    %c0_99 = arith.constant 0 : index
    %267 = vector.load %arg14[%c0_98, %c0_99] : memref<32x128xf32, #tpu.memory_space<vmem>>, vector<32x128xf32>
    %cst_100 = arith.constant dense<0.000000e+00> : vector<1x128xf32>
    %268 = tpu.matmul %185, %267, %cst_100 {dimension_numbers = #tpu.dot_dimension_numbers<[1], [0], [0], [1], [0, 0, 1, 1], [], []>} : vector<1x32xf32>, vector<32x128xf32>, vector<1x128xf32> -> vector<1x128xf32>
    %269 = arith.addf %266, %268 : vector<1x128xf32>
    %270 = vector.extract_strided_slice %269 {offsets = [0, 0], sizes = [1, 32], strides = [1, 1]} : vector<1x128xf32> to vector<1x32xf32>
    %271 = arith.negf %270 : vector<1x32xf32>
    %272 = math.exp %271 : vector<1x32xf32>
    %cst_101 = arith.constant 1.000000e+00 : f32
    %273 = vector.broadcast %cst_101 : f32 to vector<1x32xf32>
    %274 = arith.addf %273, %272 : vector<1x32xf32>
    %275 = arith.divf %273, %274 : vector<1x32xf32>
    %276 = vector.extract_strided_slice %269 {offsets = [0, 64], sizes = [1, 32], strides = [1, 1]} : vector<1x128xf32> to vector<1x32xf32>
    %277 = math.tanh %276 : vector<1x32xf32>
    %278 = vector.extract_strided_slice %269 {offsets = [0, 96], sizes = [1, 32], strides = [1, 1]} : vector<1x128xf32> to vector<1x32xf32>
    %279 = arith.negf %278 : vector<1x32xf32>
    %280 = math.exp %279 : vector<1x32xf32>
    %cst_102 = arith.constant 1.000000e+00 : f32
    %281 = vector.broadcast %cst_102 : f32 to vector<1x32xf32>
    %282 = arith.addf %281, %280 : vector<1x32xf32>
    %283 = arith.divf %281, %282 : vector<1x32xf32>
    %284 = arith.mulf %275, %277 : vector<1x32xf32>
    %285 = vector.extract_strided_slice %269 {offsets = [0, 32], sizes = [1, 32], strides = [1, 1]} : vector<1x128xf32> to vector<1x32xf32>
    %286 = arith.negf %285 : vector<1x32xf32>
    %287 = math.exp %286 : vector<1x32xf32>
    %cst_103 = arith.constant 1.000000e+00 : f32
    %288 = vector.broadcast %cst_103 : f32 to vector<1x32xf32>
    %289 = arith.addf %288, %287 : vector<1x32xf32>
    %290 = arith.divf %288, %289 : vector<1x32xf32>
    %291 = arith.mulf %290, %183 : vector<1x32xf32>
    %292 = arith.addf %284, %291 : vector<1x32xf32>
    %293 = math.tanh %292 : vector<1x32xf32>
    %294 = arith.mulf %283, %293 : vector<1x32xf32>
    %cst_104 = arith.constant dense<0.000000e+00> : vector<1x32xf32>
    %295 = tpu.matmul %294, %4, %cst_104 {dimension_numbers = #tpu.dot_dimension_numbers<[1], [0], [0], [1], [0, 0, 1, 1], [], []>} : vector<1x32xf32>, vector<32x32xf32>, vector<1x32xf32> -> vector<1x32xf32>
    %296 = arith.addf %295, %10 : vector<1x32xf32>
    %cst_105 = arith.constant 0.000000e+00 : f32
    %297 = vector.broadcast %cst_105 : f32 to vector<1x32xf32>
    %298 = arith.cmpf ogt, %296, %297 : vector<1x32xf32>
    %cst_106 = arith.constant 0.00999999977 : f32
    %299 = vector.broadcast %cst_106 : f32 to vector<1x32xf32>
    %300 = arith.mulf %299, %296 : vector<1x32xf32>
    %301 = arith.select %298, %296, %300 : vector<1x32xi1>, vector<1x32xf32>
    %c0_107 = arith.constant 0 : index
    %c2_108 = arith.constant 2 : index
    %c0_109 = arith.constant 0 : index
    %302 = vector.load %arg16[%c0_107, %c2_108, %c0_109] : memref<1x6x32xf32, #tpu.memory_space<vmem>>, vector<1x1x32xf32>
    %303 = vector.shape_cast %302 : vector<1x1x32xf32> to vector<1x32xf32>
    %304 = vector.shape_cast %301 : vector<1x32xf32> to vector<1x1x32xf32>
    tpu.vector_store %arg16[%c0_107, %c2_108, %c0_109], %304 {strides = array<i32>} : memref<1x6x32xf32, #tpu.memory_space<vmem>>, vector<1x1x32xf32>,
    %c3 = arith.constant 3 : index
    %305 = arith.index_cast %0 : i32 to index
    %306 = memref.load %arg1[%c3, %305] : memref<6x2xi32, #tpu.memory_space<smem>>
    %307 = arith.index_cast %306 : i32 to index
    %c0_110 = arith.constant 0 : index
    %308 = vector.load %arg2[%307, %c0_110] : memref<128x32xf32, #tpu.memory_space<vmem>>, vector<1x32xf32>
    %c0_111 = arith.constant 0 : index
    %c0_112 = arith.constant 0 : index
    %309 = vector.load %arg8[%c0_111, %c0_112] : memref<32x128xf32, #tpu.memory_space<vmem>>, vector<32x128xf32>
    %cst_113 = arith.constant dense<0.000000e+00> : vector<1x128xf32>
    %310 = tpu.matmul %308, %309, %cst_113 {dimension_numbers = #tpu.dot_dimension_numbers<[1], [0], [0], [1], [0, 0, 1, 1], [], []>} : vector<1x32xf32>, vector<32x128xf32>, vector<1x128xf32> -> vector<1x128xf32>
    %cst_114 = arith.constant dense<0.000000e+00> : vector<1x128xf32>
    %311 = tpu.matmul %294, %2, %cst_114 {dimension_numbers = #tpu.dot_dimension_numbers<[1], [0], [0], [1], [0, 0, 1, 1], [], []>} : vector<1x32xf32>, vector<32x128xf32>, vector<1x128xf32> -> vector<1x128xf32>
    %312 = arith.addf %310, %311 : vector<1x128xf32>
    %c0_115 = arith.constant 0 : index
    %c0_116 = arith.constant 0 : index
    %313 = vector.load %arg9[%c0_115, %c0_116] : memref<32x128xf32, #tpu.memory_space<vmem>>, vector<32x128xf32>
    %cst_117 = arith.constant dense<0.000000e+00> : vector<1x128xf32>
    %314 = tpu.matmul %232, %313, %cst_117 {dimension_numbers = #tpu.dot_dimension_numbers<[1], [0], [0], [1], [0, 0, 1, 1], [], []>} : vector<1x32xf32>, vector<32x128xf32>, vector<1x128xf32> -> vector<1x128xf32>
    %315 = arith.addf %312, %314 : vector<1x128xf32>
    %316 = arith.addf %315, %6 : vector<1x128xf32>
    %317 = vector.extract_strided_slice %316 {offsets = [0, 0], sizes = [1, 32], strides = [1, 1]} : vector<1x128xf32> to vector<1x32xf32>
    %318 = arith.negf %317 : vector<1x32xf32>
    %319 = math.exp %318 : vector<1x32xf32>
    %cst_118 = arith.constant 1.000000e+00 : f32
    %320 = vector.broadcast %cst_118 : f32 to vector<1x32xf32>
    %321 = arith.addf %320, %319 : vector<1x32xf32>
    %322 = arith.divf %320, %321 : vector<1x32xf32>
    %323 = vector.extract_strided_slice %316 {offsets = [0, 64], sizes = [1, 32], strides = [1, 1]} : vector<1x128xf32> to vector<1x32xf32>
    %324 = math.tanh %323 : vector<1x32xf32>
    %325 = vector.extract_strided_slice %316 {offsets = [0, 96], sizes = [1, 32], strides = [1, 1]} : vector<1x128xf32> to vector<1x32xf32>
    %326 = arith.negf %325 : vector<1x32xf32>
    %327 = math.exp %326 : vector<1x32xf32>
    %cst_119 = arith.constant 1.000000e+00 : f32
    %328 = vector.broadcast %cst_119 : f32 to vector<1x32xf32>
    %329 = arith.addf %328, %327 : vector<1x32xf32>
    %330 = arith.divf %328, %329 : vector<1x32xf32>
    %331 = arith.mulf %322, %324 : vector<1x32xf32>
    %332 = vector.extract_strided_slice %316 {offsets = [0, 32], sizes = [1, 32], strides = [1, 1]} : vector<1x128xf32> to vector<1x32xf32>
    %333 = arith.negf %332 : vector<1x32xf32>
    %334 = math.exp %333 : vector<1x32xf32>
    %cst_120 = arith.constant 1.000000e+00 : f32
    %335 = vector.broadcast %cst_120 : f32 to vector<1x32xf32>
    %336 = arith.addf %335, %334 : vector<1x32xf32>
    %337 = arith.divf %335, %336 : vector<1x32xf32>
    %338 = arith.mulf %337, %230 : vector<1x32xf32>
    %339 = arith.addf %331, %338 : vector<1x32xf32>
    %340 = math.tanh %339 : vector<1x32xf32>
    %341 = arith.mulf %330, %340 : vector<1x32xf32>
    %c0_121 = arith.constant 0 : index
    %c0_122 = arith.constant 0 : index
    %342 = vector.load %arg10[%c0_121, %c0_122] : memref<32x128xf32, #tpu.memory_space<vmem>>, vector<32x128xf32>
    %cst_123 = arith.constant dense<0.000000e+00> : vector<1x128xf32>
    %343 = tpu.matmul %341, %342, %cst_123 {dimension_numbers = #tpu.dot_dimension_numbers<[1], [0], [0], [1], [0, 0, 1, 1], [], []>} : vector<1x32xf32>, vector<32x128xf32>, vector<1x128xf32> -> vector<1x128xf32>
    %344 = arith.addf %343, %11 : vector<1x128xf32>
    %c0_124 = arith.constant 0 : index
    %c0_125 = arith.constant 0 : index
    %345 = vector.load %arg11[%c0_124, %c0_125] : memref<32x128xf32, #tpu.memory_space<vmem>>, vector<32x128xf32>
    %cst_126 = arith.constant dense<0.000000e+00> : vector<1x128xf32>
    %346 = tpu.matmul %263, %345, %cst_126 {dimension_numbers = #tpu.dot_dimension_numbers<[1], [0], [0], [1], [0, 0, 1, 1], [], []>} : vector<1x32xf32>, vector<32x128xf32>, vector<1x128xf32> -> vector<1x128xf32>
    %347 = arith.addf %344, %346 : vector<1x128xf32>
    %348 = vector.extract_strided_slice %347 {offsets = [0, 0], sizes = [1, 32], strides = [1, 1]} : vector<1x128xf32> to vector<1x32xf32>
    %349 = arith.negf %348 : vector<1x32xf32>
    %350 = math.exp %349 : vector<1x32xf32>
    %cst_127 = arith.constant 1.000000e+00 : f32
    %351 = vector.broadcast %cst_127 : f32 to vector<1x32xf32>
    %352 = arith.addf %351, %350 : vector<1x32xf32>
    %353 = arith.divf %351, %352 : vector<1x32xf32>
    %354 = vector.extract_strided_slice %347 {offsets = [0, 64], sizes = [1, 32], strides = [1, 1]} : vector<1x128xf32> to vector<1x32xf32>
    %355 = math.tanh %354 : vector<1x32xf32>
    %356 = vector.extract_strided_slice %347 {offsets = [0, 96], sizes = [1, 32], strides = [1, 1]} : vector<1x128xf32> to vector<1x32xf32>
    %357 = arith.negf %356 : vector<1x32xf32>
    %358 = math.exp %357 : vector<1x32xf32>
    %cst_128 = arith.constant 1.000000e+00 : f32
    %359 = vector.broadcast %cst_128 : f32 to vector<1x32xf32>
    %360 = arith.addf %359, %358 : vector<1x32xf32>
    %361 = arith.divf %359, %360 : vector<1x32xf32>
    %362 = arith.mulf %353, %355 : vector<1x32xf32>
    %363 = vector.extract_strided_slice %347 {offsets = [0, 32], sizes = [1, 32], strides = [1, 1]} : vector<1x128xf32> to vector<1x32xf32>
    %364 = arith.negf %363 : vector<1x32xf32>
    %365 = math.exp %364 : vector<1x32xf32>
    %cst_129 = arith.constant 1.000000e+00 : f32
    %366 = vector.broadcast %cst_129 : f32 to vector<1x32xf32>
    %367 = arith.addf %366, %365 : vector<1x32xf32>
    %368 = arith.divf %366, %367 : vector<1x32xf32>
    %369 = arith.mulf %368, %261 : vector<1x32xf32>
    %370 = arith.addf %362, %369 : vector<1x32xf32>
    %371 = math.tanh %370 : vector<1x32xf32>
    %372 = arith.mulf %361, %371 : vector<1x32xf32>
    %c0_130 = arith.constant 0 : index
    %c0_131 = arith.constant 0 : index
    %373 = vector.load %arg13[%c0_130, %c0_131] : memref<32x128xf32, #tpu.memory_space<vmem>>, vector<32x128xf32>
    %cst_132 = arith.constant dense<0.000000e+00> : vector<1x128xf32>
    %374 = tpu.matmul %372, %373, %cst_132 {dimension_numbers = #tpu.dot_dimension_numbers<[1], [0], [0], [1], [0, 0, 1, 1], [], []>} : vector<1x32xf32>, vector<32x128xf32>, vector<1x128xf32> -> vector<1x128xf32>
    %375 = arith.addf %374, %12 : vector<1x128xf32>
    %c0_133 = arith.constant 0 : index
    %c0_134 = arith.constant 0 : index
    %376 = vector.load %arg14[%c0_133, %c0_134] : memref<32x128xf32, #tpu.memory_space<vmem>>, vector<32x128xf32>
    %cst_135 = arith.constant dense<0.000000e+00> : vector<1x128xf32>
    %377 = tpu.matmul %294, %376, %cst_135 {dimension_numbers = #tpu.dot_dimension_numbers<[1], [0], [0], [1], [0, 0, 1, 1], [], []>} : vector<1x32xf32>, vector<32x128xf32>, vector<1x128xf32> -> vector<1x128xf32>
    %378 = arith.addf %375, %377 : vector<1x128xf32>
    %379 = vector.extract_strided_slice %378 {offsets = [0, 0], sizes = [1, 32], strides = [1, 1]} : vector<1x128xf32> to vector<1x32xf32>
    %380 = arith.negf %379 : vector<1x32xf32>
    %381 = math.exp %380 : vector<1x32xf32>
    %cst_136 = arith.constant 1.000000e+00 : f32
    %382 = vector.broadcast %cst_136 : f32 to vector<1x32xf32>
    %383 = arith.addf %382, %381 : vector<1x32xf32>
    %384 = arith.divf %382, %383 : vector<1x32xf32>
    %385 = vector.extract_strided_slice %378 {offsets = [0, 64], sizes = [1, 32], strides = [1, 1]} : vector<1x128xf32> to vector<1x32xf32>
    %386 = math.tanh %385 : vector<1x32xf32>
    %387 = vector.extract_strided_slice %378 {offsets = [0, 96], sizes = [1, 32], strides = [1, 1]} : vector<1x128xf32> to vector<1x32xf32>
    %388 = arith.negf %387 : vector<1x32xf32>
    %389 = math.exp %388 : vector<1x32xf32>
    %cst_137 = arith.constant 1.000000e+00 : f32
    %390 = vector.broadcast %cst_137 : f32 to vector<1x32xf32>
    %391 = arith.addf %390, %389 : vector<1x32xf32>
    %392 = arith.divf %390, %391 : vector<1x32xf32>
    %393 = arith.mulf %384, %386 : vector<1x32xf32>
    %394 = vector.extract_strided_slice %378 {offsets = [0, 32], sizes = [1, 32], strides = [1, 1]} : vector<1x128xf32> to vector<1x32xf32>
    %395 = arith.negf %394 : vector<1x32xf32>
    %396 = math.exp %395 : vector<1x32xf32>
    %cst_138 = arith.constant 1.000000e+00 : f32
    %397 = vector.broadcast %cst_138 : f32 to vector<1x32xf32>
    %398 = arith.addf %397, %396 : vector<1x32xf32>
    %399 = arith.divf %397, %398 : vector<1x32xf32>
    %400 = arith.mulf %399, %292 : vector<1x32xf32>
    %401 = arith.addf %393, %400 : vector<1x32xf32>
    %402 = math.tanh %401 : vector<1x32xf32>
    %403 = arith.mulf %392, %402 : vector<1x32xf32>
    %cst_139 = arith.constant dense<0.000000e+00> : vector<1x32xf32>
    %404 = tpu.matmul %403, %4, %cst_139 {dimension_numbers = #tpu.dot_dimension_numbers<[1], [0], [0], [1], [0, 0, 1, 1], [], []>} : vector<1x32xf32>, vector<32x32xf32>, vector<1x32xf32> -> vector<1x32xf32>
    %405 = arith.addf %404, %10 : vector<1x32xf32>
    %cst_140 = arith.constant 0.000000e+00 : f32
    %406 = vector.broadcast %cst_140 : f32 to vector<1x32xf32>
    %407 = arith.cmpf ogt, %405, %406 : vector<1x32xf32>
    %cst_141 = arith.constant 0.00999999977 : f32
    %408 = vector.broadcast %cst_141 : f32 to vector<1x32xf32>
    %409 = arith.mulf %408, %405 : vector<1x32xf32>
    %410 = arith.select %407, %405, %409 : vector<1x32xi1>, vector<1x32xf32>
    %c0_142 = arith.constant 0 : index
    %c3_143 = arith.constant 3 : index
    %c0_144 = arith.constant 0 : index
    %411 = vector.load %arg16[%c0_142, %c3_143, %c0_144] : memref<1x6x32xf32, #tpu.memory_space<vmem>>, vector<1x1x32xf32>
    %412 = vector.shape_cast %411 : vector<1x1x32xf32> to vector<1x32xf32>
    %413 = vector.shape_cast %410 : vector<1x32xf32> to vector<1x1x32xf32>
    tpu.vector_store %arg16[%c0_142, %c3_143, %c0_144], %413 {strides = array<i32>} : memref<1x6x32xf32, #tpu.memory_space<vmem>>, vector<1x1x32xf32>,
    %c4 = arith.constant 4 : index
    %414 = arith.index_cast %0 : i32 to index
    %415 = memref.load %arg1[%c4, %414] : memref<6x2xi32, #tpu.memory_space<smem>>
    %416 = arith.index_cast %415 : i32 to index
    %c0_145 = arith.constant 0 : index
    %417 = vector.load %arg2[%416, %c0_145] : memref<128x32xf32, #tpu.memory_space<vmem>>, vector<1x32xf32>
    %c0_146 = arith.constant 0 : index
    %c0_147 = arith.constant 0 : index
    %418 = vector.load %arg8[%c0_146, %c0_147] : memref<32x128xf32, #tpu.memory_space<vmem>>, vector<32x128xf32>
    %cst_148 = arith.constant dense<0.000000e+00> : vector<1x128xf32>
    %419 = tpu.matmul %417, %418, %cst_148 {dimension_numbers = #tpu.dot_dimension_numbers<[1], [0], [0], [1], [0, 0, 1, 1], [], []>} : vector<1x32xf32>, vector<32x128xf32>, vector<1x128xf32> -> vector<1x128xf32>
    %cst_149 = arith.constant dense<0.000000e+00> : vector<1x128xf32>
    %420 = tpu.matmul %403, %2, %cst_149 {dimension_numbers = #tpu.dot_dimension_numbers<[1], [0], [0], [1], [0, 0, 1, 1], [], []>} : vector<1x32xf32>, vector<32x128xf32>, vector<1x128xf32> -> vector<1x128xf32>
    %421 = arith.addf %419, %420 : vector<1x128xf32>
    %c0_150 = arith.constant 0 : index
    %c0_151 = arith.constant 0 : index
    %422 = vector.load %arg9[%c0_150, %c0_151] : memref<32x128xf32, #tpu.memory_space<vmem>>, vector<32x128xf32>
    %cst_152 = arith.constant dense<0.000000e+00> : vector<1x128xf32>
    %423 = tpu.matmul %341, %422, %cst_152 {dimension_numbers = #tpu.dot_dimension_numbers<[1], [0], [0], [1], [0, 0, 1, 1], [], []>} : vector<1x32xf32>, vector<32x128xf32>, vector<1x128xf32> -> vector<1x128xf32>
    %424 = arith.addf %421, %423 : vector<1x128xf32>
    %425 = arith.addf %424, %6 : vector<1x128xf32>
    %426 = vector.extract_strided_slice %425 {offsets = [0, 0], sizes = [1, 32], strides = [1, 1]} : vector<1x128xf32> to vector<1x32xf32>
    %427 = arith.negf %426 : vector<1x32xf32>
    %428 = math.exp %427 : vector<1x32xf32>
    %cst_153 = arith.constant 1.000000e+00 : f32
    %429 = vector.broadcast %cst_153 : f32 to vector<1x32xf32>
    %430 = arith.addf %429, %428 : vector<1x32xf32>
    %431 = arith.divf %429, %430 : vector<1x32xf32>
    %432 = vector.extract_strided_slice %425 {offsets = [0, 64], sizes = [1, 32], strides = [1, 1]} : vector<1x128xf32> to vector<1x32xf32>
    %433 = math.tanh %432 : vector<1x32xf32>
    %434 = vector.extract_strided_slice %425 {offsets = [0, 96], sizes = [1, 32], strides = [1, 1]} : vector<1x128xf32> to vector<1x32xf32>
    %435 = arith.negf %434 : vector<1x32xf32>
    %436 = math.exp %435 : vector<1x32xf32>
    %cst_154 = arith.constant 1.000000e+00 : f32
    %437 = vector.broadcast %cst_154 : f32 to vector<1x32xf32>
    %438 = arith.addf %437, %436 : vector<1x32xf32>
    %439 = arith.divf %437, %438 : vector<1x32xf32>
    %440 = arith.mulf %431, %433 : vector<1x32xf32>
    %441 = vector.extract_strided_slice %425 {offsets = [0, 32], sizes = [1, 32], strides = [1, 1]} : vector<1x128xf32> to vector<1x32xf32>
    %442 = arith.negf %441 : vector<1x32xf32>
    %443 = math.exp %442 : vector<1x32xf32>
    %cst_155 = arith.constant 1.000000e+00 : f32
    %444 = vector.broadcast %cst_155 : f32 to vector<1x32xf32>
    %445 = arith.addf %444, %443 : vector<1x32xf32>
    %446 = arith.divf %444, %445 : vector<1x32xf32>
    %447 = arith.mulf %446, %339 : vector<1x32xf32>
    %448 = arith.addf %440, %447 : vector<1x32xf32>
    %449 = math.tanh %448 : vector<1x32xf32>
    %450 = arith.mulf %439, %449 : vector<1x32xf32>
    %c0_156 = arith.constant 0 : index
    %c0_157 = arith.constant 0 : index
    %451 = vector.load %arg10[%c0_156, %c0_157] : memref<32x128xf32, #tpu.memory_space<vmem>>, vector<32x128xf32>
    %cst_158 = arith.constant dense<0.000000e+00> : vector<1x128xf32>
    %452 = tpu.matmul %450, %451, %cst_158 {dimension_numbers = #tpu.dot_dimension_numbers<[1], [0], [0], [1], [0, 0, 1, 1], [], []>} : vector<1x32xf32>, vector<32x128xf32>, vector<1x128xf32> -> vector<1x128xf32>
    %453 = arith.addf %452, %11 : vector<1x128xf32>
    %c0_159 = arith.constant 0 : index
    %c0_160 = arith.constant 0 : index
    %454 = vector.load %arg11[%c0_159, %c0_160] : memref<32x128xf32, #tpu.memory_space<vmem>>, vector<32x128xf32>
    %cst_161 = arith.constant dense<0.000000e+00> : vector<1x128xf32>
    %455 = tpu.matmul %372, %454, %cst_161 {dimension_numbers = #tpu.dot_dimension_numbers<[1], [0], [0], [1], [0, 0, 1, 1], [], []>} : vector<1x32xf32>, vector<32x128xf32>, vector<1x128xf32> -> vector<1x128xf32>
    %456 = arith.addf %453, %455 : vector<1x128xf32>
    %457 = vector.extract_strided_slice %456 {offsets = [0, 0], sizes = [1, 32], strides = [1, 1]} : vector<1x128xf32> to vector<1x32xf32>
    %458 = arith.negf %457 : vector<1x32xf32>
    %459 = math.exp %458 : vector<1x32xf32>
    %cst_162 = arith.constant 1.000000e+00 : f32
    %460 = vector.broadcast %cst_162 : f32 to vector<1x32xf32>
    %461 = arith.addf %460, %459 : vector<1x32xf32>
    %462 = arith.divf %460, %461 : vector<1x32xf32>
    %463 = vector.extract_strided_slice %456 {offsets = [0, 64], sizes = [1, 32], strides = [1, 1]} : vector<1x128xf32> to vector<1x32xf32>
    %464 = math.tanh %463 : vector<1x32xf32>
    %465 = vector.extract_strided_slice %456 {offsets = [0, 96], sizes = [1, 32], strides = [1, 1]} : vector<1x128xf32> to vector<1x32xf32>
    %466 = arith.negf %465 : vector<1x32xf32>
    %467 = math.exp %466 : vector<1x32xf32>
    %cst_163 = arith.constant 1.000000e+00 : f32
    %468 = vector.broadcast %cst_163 : f32 to vector<1x32xf32>
    %469 = arith.addf %468, %467 : vector<1x32xf32>
    %470 = arith.divf %468, %469 : vector<1x32xf32>
    %471 = arith.mulf %462, %464 : vector<1x32xf32>
    %472 = vector.extract_strided_slice %456 {offsets = [0, 32], sizes = [1, 32], strides = [1, 1]} : vector<1x128xf32> to vector<1x32xf32>
    %473 = arith.negf %472 : vector<1x32xf32>
    %474 = math.exp %473 : vector<1x32xf32>
    %cst_164 = arith.constant 1.000000e+00 : f32
    %475 = vector.broadcast %cst_164 : f32 to vector<1x32xf32>
    %476 = arith.addf %475, %474 : vector<1x32xf32>
    %477 = arith.divf %475, %476 : vector<1x32xf32>
    %478 = arith.mulf %477, %370 : vector<1x32xf32>
    %479 = arith.addf %471, %478 : vector<1x32xf32>
    %480 = math.tanh %479 : vector<1x32xf32>
    %481 = arith.mulf %470, %480 : vector<1x32xf32>
    %c0_165 = arith.constant 0 : index
    %c0_166 = arith.constant 0 : index
    %482 = vector.load %arg13[%c0_165, %c0_166] : memref<32x128xf32, #tpu.memory_space<vmem>>, vector<32x128xf32>
    %cst_167 = arith.constant dense<0.000000e+00> : vector<1x128xf32>
    %483 = tpu.matmul %481, %482, %cst_167 {dimension_numbers = #tpu.dot_dimension_numbers<[1], [0], [0], [1], [0, 0, 1, 1], [], []>} : vector<1x32xf32>, vector<32x128xf32>, vector<1x128xf32> -> vector<1x128xf32>
    %484 = arith.addf %483, %12 : vector<1x128xf32>
    %c0_168 = arith.constant 0 : index
    %c0_169 = arith.constant 0 : index
    %485 = vector.load %arg14[%c0_168, %c0_169] : memref<32x128xf32, #tpu.memory_space<vmem>>, vector<32x128xf32>
    %cst_170 = arith.constant dense<0.000000e+00> : vector<1x128xf32>
    %486 = tpu.matmul %403, %485, %cst_170 {dimension_numbers = #tpu.dot_dimension_numbers<[1], [0], [0], [1], [0, 0, 1, 1], [], []>} : vector<1x32xf32>, vector<32x128xf32>, vector<1x128xf32> -> vector<1x128xf32>
    %487 = arith.addf %484, %486 : vector<1x128xf32>
    %488 = vector.extract_strided_slice %487 {offsets = [0, 0], sizes = [1, 32], strides = [1, 1]} : vector<1x128xf32> to vector<1x32xf32>
    %489 = arith.negf %488 : vector<1x32xf32>
    %490 = math.exp %489 : vector<1x32xf32>
    %cst_171 = arith.constant 1.000000e+00 : f32
    %491 = vector.broadcast %cst_171 : f32 to vector<1x32xf32>
    %492 = arith.addf %491, %490 : vector<1x32xf32>
    %493 = arith.divf %491, %492 : vector<1x32xf32>
    %494 = vector.extract_strided_slice %487 {offsets = [0, 64], sizes = [1, 32], strides = [1, 1]} : vector<1x128xf32> to vector<1x32xf32>
    %495 = math.tanh %494 : vector<1x32xf32>
    %496 = vector.extract_strided_slice %487 {offsets = [0, 96], sizes = [1, 32], strides = [1, 1]} : vector<1x128xf32> to vector<1x32xf32>
    %497 = arith.negf %496 : vector<1x32xf32>
    %498 = math.exp %497 : vector<1x32xf32>
    %cst_172 = arith.constant 1.000000e+00 : f32
    %499 = vector.broadcast %cst_172 : f32 to vector<1x32xf32>
    %500 = arith.addf %499, %498 : vector<1x32xf32>
    %501 = arith.divf %499, %500 : vector<1x32xf32>
    %502 = arith.mulf %493, %495 : vector<1x32xf32>
    %503 = vector.extract_strided_slice %487 {offsets = [0, 32], sizes = [1, 32], strides = [1, 1]} : vector<1x128xf32> to vector<1x32xf32>
    %504 = arith.negf %503 : vector<1x32xf32>
    %505 = math.exp %504 : vector<1x32xf32>
    %cst_173 = arith.constant 1.000000e+00 : f32
    %506 = vector.broadcast %cst_173 : f32 to vector<1x32xf32>
    %507 = arith.addf %506, %505 : vector<1x32xf32>
    %508 = arith.divf %506, %507 : vector<1x32xf32>
    %509 = arith.mulf %508, %401 : vector<1x32xf32>
    %510 = arith.addf %502, %509 : vector<1x32xf32>
    %511 = math.tanh %510 : vector<1x32xf32>
    %512 = arith.mulf %501, %511 : vector<1x32xf32>
    %cst_174 = arith.constant dense<0.000000e+00> : vector<1x32xf32>
    %513 = tpu.matmul %512, %4, %cst_174 {dimension_numbers = #tpu.dot_dimension_numbers<[1], [0], [0], [1], [0, 0, 1, 1], [], []>} : vector<1x32xf32>, vector<32x32xf32>, vector<1x32xf32> -> vector<1x32xf32>
    %514 = arith.addf %513, %10 : vector<1x32xf32>
    %cst_175 = arith.constant 0.000000e+00 : f32
    %515 = vector.broadcast %cst_175 : f32 to vector<1x32xf32>
    %516 = arith.cmpf ogt, %514, %515 : vector<1x32xf32>
    %cst_176 = arith.constant 0.00999999977 : f32
    %517 = vector.broadcast %cst_176 : f32 to vector<1x32xf32>
    %518 = arith.mulf %517, %514 : vector<1x32xf32>
    %519 = arith.select %516, %514, %518 : vector<1x32xi1>, vector<1x32xf32>
    %c0_177 = arith.constant 0 : index
    %c4_178 = arith.constant 4 : index
    %c0_179 = arith.constant 0 : index
    %520 = vector.load %arg16[%c0_177, %c4_178, %c0_179] : memref<1x6x32xf32, #tpu.memory_space<vmem>>, vector<1x1x32xf32>
    %521 = vector.shape_cast %520 : vector<1x1x32xf32> to vector<1x32xf32>
    %522 = vector.shape_cast %519 : vector<1x32xf32> to vector<1x1x32xf32>
    tpu.vector_store %arg16[%c0_177, %c4_178, %c0_179], %522 {strides = array<i32>} : memref<1x6x32xf32, #tpu.memory_space<vmem>>, vector<1x1x32xf32>,
    %c5 = arith.constant 5 : index
    %523 = arith.index_cast %0 : i32 to index
    %524 = memref.load %arg1[%c5, %523] : memref<6x2xi32, #tpu.memory_space<smem>>
    %525 = arith.index_cast %524 : i32 to index
    %c0_180 = arith.constant 0 : index
    %526 = vector.load %arg2[%525, %c0_180] : memref<128x32xf32, #tpu.memory_space<vmem>>, vector<1x32xf32>
    %c0_181 = arith.constant 0 : index
    %c0_182 = arith.constant 0 : index
    %527 = vector.load %arg8[%c0_181, %c0_182] : memref<32x128xf32, #tpu.memory_space<vmem>>, vector<32x128xf32>
    %cst_183 = arith.constant dense<0.000000e+00> : vector<1x128xf32>
    %528 = tpu.matmul %526, %527, %cst_183 {dimension_numbers = #tpu.dot_dimension_numbers<[1], [0], [0], [1], [0, 0, 1, 1], [], []>} : vector<1x32xf32>, vector<32x128xf32>, vector<1x128xf32> -> vector<1x128xf32>
    %cst_184 = arith.constant dense<0.000000e+00> : vector<1x128xf32>
    %529 = tpu.matmul %512, %2, %cst_184 {dimension_numbers = #tpu.dot_dimension_numbers<[1], [0], [0], [1], [0, 0, 1, 1], [], []>} : vector<1x32xf32>, vector<32x128xf32>, vector<1x128xf32> -> vector<1x128xf32>
    %530 = arith.addf %528, %529 : vector<1x128xf32>
    %c0_185 = arith.constant 0 : index
    %c0_186 = arith.constant 0 : index
    %531 = vector.load %arg9[%c0_185, %c0_186] : memref<32x128xf32, #tpu.memory_space<vmem>>, vector<32x128xf32>
    %cst_187 = arith.constant dense<0.000000e+00> : vector<1x128xf32>
    %532 = tpu.matmul %450, %531, %cst_187 {dimension_numbers = #tpu.dot_dimension_numbers<[1], [0], [0], [1], [0, 0, 1, 1], [], []>} : vector<1x32xf32>, vector<32x128xf32>, vector<1x128xf32> -> vector<1x128xf32>
    %533 = arith.addf %530, %532 : vector<1x128xf32>
    %534 = arith.addf %533, %6 : vector<1x128xf32>
    %535 = vector.extract_strided_slice %534 {offsets = [0, 0], sizes = [1, 32], strides = [1, 1]} : vector<1x128xf32> to vector<1x32xf32>
    %536 = arith.negf %535 : vector<1x32xf32>
    %537 = math.exp %536 : vector<1x32xf32>
    %cst_188 = arith.constant 1.000000e+00 : f32
    %538 = vector.broadcast %cst_188 : f32 to vector<1x32xf32>
    %539 = arith.addf %538, %537 : vector<1x32xf32>
    %540 = arith.divf %538, %539 : vector<1x32xf32>
    %541 = vector.extract_strided_slice %534 {offsets = [0, 64], sizes = [1, 32], strides = [1, 1]} : vector<1x128xf32> to vector<1x32xf32>
    %542 = math.tanh %541 : vector<1x32xf32>
    %543 = vector.extract_strided_slice %534 {offsets = [0, 96], sizes = [1, 32], strides = [1, 1]} : vector<1x128xf32> to vector<1x32xf32>
    %544 = arith.negf %543 : vector<1x32xf32>
    %545 = math.exp %544 : vector<1x32xf32>
    %cst_189 = arith.constant 1.000000e+00 : f32
    %546 = vector.broadcast %cst_189 : f32 to vector<1x32xf32>
    %547 = arith.addf %546, %545 : vector<1x32xf32>
    %548 = arith.divf %546, %547 : vector<1x32xf32>
    %549 = arith.mulf %540, %542 : vector<1x32xf32>
    %550 = vector.extract_strided_slice %534 {offsets = [0, 32], sizes = [1, 32], strides = [1, 1]} : vector<1x128xf32> to vector<1x32xf32>
    %551 = arith.negf %550 : vector<1x32xf32>
    %552 = math.exp %551 : vector<1x32xf32>
    %cst_190 = arith.constant 1.000000e+00 : f32
    %553 = vector.broadcast %cst_190 : f32 to vector<1x32xf32>
    %554 = arith.addf %553, %552 : vector<1x32xf32>
    %555 = arith.divf %553, %554 : vector<1x32xf32>
    %556 = arith.mulf %555, %448 : vector<1x32xf32>
    %557 = arith.addf %549, %556 : vector<1x32xf32>
    %558 = math.tanh %557 : vector<1x32xf32>
    %559 = arith.mulf %548, %558 : vector<1x32xf32>
    %c0_191 = arith.constant 0 : index
    %c0_192 = arith.constant 0 : index
    %560 = vector.load %arg10[%c0_191, %c0_192] : memref<32x128xf32, #tpu.memory_space<vmem>>, vector<32x128xf32>
    %cst_193 = arith.constant dense<0.000000e+00> : vector<1x128xf32>
    %561 = tpu.matmul %559, %560, %cst_193 {dimension_numbers = #tpu.dot_dimension_numbers<[1], [0], [0], [1], [0, 0, 1, 1], [], []>} : vector<1x32xf32>, vector<32x128xf32>, vector<1x128xf32> -> vector<1x128xf32>
    %562 = arith.addf %561, %11 : vector<1x128xf32>
    %c0_194 = arith.constant 0 : index
    %c0_195 = arith.constant 0 : index
    %563 = vector.load %arg11[%c0_194, %c0_195] : memref<32x128xf32, #tpu.memory_space<vmem>>, vector<32x128xf32>
    %cst_196 = arith.constant dense<0.000000e+00> : vector<1x128xf32>
    %564 = tpu.matmul %481, %563, %cst_196 {dimension_numbers = #tpu.dot_dimension_numbers<[1], [0], [0], [1], [0, 0, 1, 1], [], []>} : vector<1x32xf32>, vector<32x128xf32>, vector<1x128xf32> -> vector<1x128xf32>
    %565 = arith.addf %562, %564 : vector<1x128xf32>
    %566 = vector.extract_strided_slice %565 {offsets = [0, 0], sizes = [1, 32], strides = [1, 1]} : vector<1x128xf32> to vector<1x32xf32>
    %567 = arith.negf %566 : vector<1x32xf32>
    %568 = math.exp %567 : vector<1x32xf32>
    %cst_197 = arith.constant 1.000000e+00 : f32
    %569 = vector.broadcast %cst_197 : f32 to vector<1x32xf32>
    %570 = arith.addf %569, %568 : vector<1x32xf32>
    %571 = arith.divf %569, %570 : vector<1x32xf32>
    %572 = vector.extract_strided_slice %565 {offsets = [0, 64], sizes = [1, 32], strides = [1, 1]} : vector<1x128xf32> to vector<1x32xf32>
    %573 = math.tanh %572 : vector<1x32xf32>
    %574 = vector.extract_strided_slice %565 {offsets = [0, 96], sizes = [1, 32], strides = [1, 1]} : vector<1x128xf32> to vector<1x32xf32>
    %575 = arith.negf %574 : vector<1x32xf32>
    %576 = math.exp %575 : vector<1x32xf32>
    %cst_198 = arith.constant 1.000000e+00 : f32
    %577 = vector.broadcast %cst_198 : f32 to vector<1x32xf32>
    %578 = arith.addf %577, %576 : vector<1x32xf32>
    %579 = arith.divf %577, %578 : vector<1x32xf32>
    %580 = arith.mulf %571, %573 : vector<1x32xf32>
    %581 = vector.extract_strided_slice %565 {offsets = [0, 32], sizes = [1, 32], strides = [1, 1]} : vector<1x128xf32> to vector<1x32xf32>
    %582 = arith.negf %581 : vector<1x32xf32>
    %583 = math.exp %582 : vector<1x32xf32>
    %cst_199 = arith.constant 1.000000e+00 : f32
    %584 = vector.broadcast %cst_199 : f32 to vector<1x32xf32>
    %585 = arith.addf %584, %583 : vector<1x32xf32>
    %586 = arith.divf %584, %585 : vector<1x32xf32>
    %587 = arith.mulf %586, %479 : vector<1x32xf32>
    %588 = arith.addf %580, %587 : vector<1x32xf32>
    %589 = math.tanh %588 : vector<1x32xf32>
    %590 = arith.mulf %579, %589 : vector<1x32xf32>
    %c0_200 = arith.constant 0 : index
    %c0_201 = arith.constant 0 : index
    %591 = vector.load %arg13[%c0_200, %c0_201] : memref<32x128xf32, #tpu.memory_space<vmem>>, vector<32x128xf32>
    %cst_202 = arith.constant dense<0.000000e+00> : vector<1x128xf32>
    %592 = tpu.matmul %590, %591, %cst_202 {dimension_numbers = #tpu.dot_dimension_numbers<[1], [0], [0], [1], [0, 0, 1, 1], [], []>} : vector<1x32xf32>, vector<32x128xf32>, vector<1x128xf32> -> vector<1x128xf32>
    %593 = arith.addf %592, %12 : vector<1x128xf32>
    %c0_203 = arith.constant 0 : index
    %c0_204 = arith.constant 0 : index
    %594 = vector.load %arg14[%c0_203, %c0_204] : memref<32x128xf32, #tpu.memory_space<vmem>>, vector<32x128xf32>
    %cst_205 = arith.constant dense<0.000000e+00> : vector<1x128xf32>
    %595 = tpu.matmul %512, %594, %cst_205 {dimension_numbers = #tpu.dot_dimension_numbers<[1], [0], [0], [1], [0, 0, 1, 1], [], []>} : vector<1x32xf32>, vector<32x128xf32>, vector<1x128xf32> -> vector<1x128xf32>
    %596 = arith.addf %593, %595 : vector<1x128xf32>
    %597 = vector.extract_strided_slice %596 {offsets = [0, 0], sizes = [1, 32], strides = [1, 1]} : vector<1x128xf32> to vector<1x32xf32>
    %598 = arith.negf %597 : vector<1x32xf32>
    %599 = math.exp %598 : vector<1x32xf32>
    %cst_206 = arith.constant 1.000000e+00 : f32
    %600 = vector.broadcast %cst_206 : f32 to vector<1x32xf32>
    %601 = arith.addf %600, %599 : vector<1x32xf32>
    %602 = arith.divf %600, %601 : vector<1x32xf32>
    %603 = vector.extract_strided_slice %596 {offsets = [0, 64], sizes = [1, 32], strides = [1, 1]} : vector<1x128xf32> to vector<1x32xf32>
    %604 = math.tanh %603 : vector<1x32xf32>
    %605 = vector.extract_strided_slice %596 {offsets = [0, 96], sizes = [1, 32], strides = [1, 1]} : vector<1x128xf32> to vector<1x32xf32>
    %606 = arith.negf %605 : vector<1x32xf32>
    %607 = math.exp %606 : vector<1x32xf32>
    %cst_207 = arith.constant 1.000000e+00 : f32
    %608 = vector.broadcast %cst_207 : f32 to vector<1x32xf32>
    %609 = arith.addf %608, %607 : vector<1x32xf32>
    %610 = arith.divf %608, %609 : vector<1x32xf32>
    %611 = arith.mulf %602, %604 : vector<1x32xf32>
    %612 = vector.extract_strided_slice %596 {offsets = [0, 32], sizes = [1, 32], strides = [1, 1]} : vector<1x128xf32> to vector<1x32xf32>
    %613 = arith.negf %612 : vector<1x32xf32>
    %614 = math.exp %613 : vector<1x32xf32>
    %cst_208 = arith.constant 1.000000e+00 : f32
    %615 = vector.broadcast %cst_208 : f32 to vector<1x32xf32>
    %616 = arith.addf %615, %614 : vector<1x32xf32>
    %617 = arith.divf %615, %616 : vector<1x32xf32>
    %618 = arith.mulf %617, %510 : vector<1x32xf32>
    %619 = arith.addf %611, %618 : vector<1x32xf32>
    %620 = math.tanh %619 : vector<1x32xf32>
    %621 = arith.mulf %610, %620 : vector<1x32xf32>
    %cst_209 = arith.constant dense<0.000000e+00> : vector<1x32xf32>
    %622 = tpu.matmul %621, %4, %cst_209 {dimension_numbers = #tpu.dot_dimension_numbers<[1], [0], [0], [1], [0, 0, 1, 1], [], []>} : vector<1x32xf32>, vector<32x32xf32>, vector<1x32xf32> -> vector<1x32xf32>
    %623 = arith.addf %622, %10 : vector<1x32xf32>
    %cst_210 = arith.constant 0.000000e+00 : f32
    %624 = vector.broadcast %cst_210 : f32 to vector<1x32xf32>
    %625 = arith.cmpf ogt, %623, %624 : vector<1x32xf32>
    %cst_211 = arith.constant 0.00999999977 : f32
    %626 = vector.broadcast %cst_211 : f32 to vector<1x32xf32>
    %627 = arith.mulf %626, %623 : vector<1x32xf32>
    %628 = arith.select %625, %623, %627 : vector<1x32xi1>, vector<1x32xf32>
    %c0_212 = arith.constant 0 : index
    %c5_213 = arith.constant 5 : index
    %c0_214 = arith.constant 0 : index
    %629 = vector.load %arg16[%c0_212, %c5_213, %c0_214] : memref<1x6x32xf32, #tpu.memory_space<vmem>>, vector<1x1x32xf32>
    %630 = vector.shape_cast %629 : vector<1x1x32xf32> to vector<1x32xf32>
    %631 = vector.shape_cast %628 : vector<1x32xf32> to vector<1x1x32xf32>
    tpu.vector_store %arg16[%c0_212, %c5_213, %c0_214], %631 {strides = array<i32>} : memref<1x6x32xf32, #tpu.memory_space<vmem>>, vector<1x1x32xf32>,
    return
  }
  func.func @transform_0(%arg0: i32, %arg1: memref<6x2xi32, #tpu.memory_space<smem>>) -> (i32, i32) {
    %c0_i32 = arith.constant 0 : i32
    %c0_i32_0 = arith.constant 0 : i32
    %c0_i32_1 = arith.constant 0 : i32
    return %c0_i32, %c0_i32_0 : i32, i32
  }
  func.func @transform_1(%arg0: i32, %arg1: memref<6x2xi32, #tpu.memory_space<smem>>) -> (i32, i32, i32) {
    %c0_i32 = arith.constant 0 : i32
    %c0_i32_0 = arith.constant 0 : i32
    %c0_i32_1 = arith.constant 0 : i32
    return %arg0, %c0_i32, %c0_i32_0 : i32, i32, i32
  }
  func.func @transform_2(%arg0: i32, %arg1: memref<6x2xi32, #tpu.memory_space<smem>>) -> (i32, i32, i32) {
    %c0_i32 = arith.constant 0 : i32
    %c0_i32_0 = arith.constant 0 : i32
    %c0_i32_1 = arith.constant 0 : i32
    return %arg0, %c0_i32, %c0_i32_0 : i32, i32, i32
  }
  func.func @transform_3(%arg0: i32, %arg1: memref<6x2xi32, #tpu.memory_space<smem>>) -> (i32, i32, i32) {
    %c0_i32 = arith.constant 0 : i32
    %c0_i32_0 = arith.constant 0 : i32
    %c0_i32_1 = arith.constant 0 : i32
    return %arg0, %c0_i32, %c0_i32_0 : i32, i32, i32
  }
  func.func @transform_4(%arg0: i32, %arg1: memref<6x2xi32, #tpu.memory_space<smem>>) -> (i32, i32, i32) {
    %c0_i32 = arith.constant 0 : i32
    %c0_i32_0 = arith.constant 0 : i32
    %c0_i32_1 = arith.constant 0 : i32
    return %arg0, %c0_i32, %c0_i32_0 : i32, i32, i32
  }
  func.func @transform_5(%arg0: i32, %arg1: memref<6x2xi32, #tpu.memory_space<smem>>) -> (i32, i32, i32) {
    %c0_i32 = arith.constant 0 : i32
    %c0_i32_0 = arith.constant 0 : i32
    %c0_i32_1 = arith.constant 0 : i32
    return %arg0, %c0_i32, %c0_i32_0 : i32, i32, i32
  }
  func.func @transform_6(%arg0: i32, %arg1: memref<6x2xi32, #tpu.memory_space<smem>>) -> (i32, i32) {
    %c0_i32 = arith.constant 0 : i32
    %c0_i32_0 = arith.constant 0 : i32
    %c0_i32_1 = arith.constant 0 : i32
    return %c0_i32, %c0_i32_0 : i32, i32
  }
  func.func @transform_7(%arg0: i32, %arg1: memref<6x2xi32, #tpu.memory_space<smem>>) -> (i32, i32) {
    %c0_i32 = arith.constant 0 : i32
    %c0_i32_0 = arith.constant 0 : i32
    %c0_i32_1 = arith.constant 0 : i32
    return %c0_i32, %c0_i32_0 : i32, i32
  }
  func.func @transform_8(%arg0: i32, %arg1: memref<6x2xi32, #tpu.memory_space<smem>>) -> (i32, i32) {
    %c0_i32 = arith.constant 0 : i32
    %c0_i32_0 = arith.constant 0 : i32
    %c0_i32_1 = arith.constant 0 : i32
    return %c0_i32, %c0_i32_0 : i32, i32
  }
  func.func @transform_9(%arg0: i32, %arg1: memref<6x2xi32, #tpu.memory_space<smem>>) -> (i32, i32) {
    %c0_i32 = arith.constant 0 : i32
    %c0_i32_0 = arith.constant 0 : i32
    %c0_i32_1 = arith.constant 0 : i32
    return %c0_i32, %c0_i32_0 : i32, i32
  }
  func.func @transform_10(%arg0: i32, %arg1: memref<6x2xi32, #tpu.memory_space<smem>>) -> (i32, i32) {
    %c0_i32 = arith.constant 0 : i32
    %c0_i32_0 = arith.constant 0 : i32
    %c0_i32_1 = arith.constant 0 : i32
    return %c0_i32, %c0_i32_0 : i32, i32
  }
  func.func @transform_11(%arg0: i32, %arg1: memref<6x2xi32, #tpu.memory_space<smem>>) -> (i32, i32) {
    %c0_i32 = arith.constant 0 : i32
    %c0_i32_0 = arith.constant 0 : i32
    %c0_i32_1 = arith.constant 0 : i32
    return %c0_i32, %c0_i32_0 : i32, i32
  }
  func.func @transform_12(%arg0: i32, %arg1: memref<6x2xi32, #tpu.memory_space<smem>>) -> (i32, i32) {
    %c0_i32 = arith.constant 0 : i32
    %c0_i32_0 = arith.constant 0 : i32
    %c0_i32_1 = arith.constant 0 : i32
    return %c0_i32, %c0_i32_0 : i32, i32
  }
  func.func @transform_13(%arg0: i32, %arg1: memref<6x2xi32, #tpu.memory_space<smem>>) -> (i32, i32) {
    %c0_i32 = arith.constant 0 : i32
    %c0_i32_0 = arith.constant 0 : i32
    %c0_i32_1 = arith.constant 0 : i32
    return %c0_i32, %c0_i32_0 : i32, i32
  }
  func.func @transform_14(%arg0: i32, %arg1: memref<6x2xi32, #tpu.memory_space<smem>>) -> (i32, i32, i32) {
    %c0_i32 = arith.constant 0 : i32
    %c0_i32_0 = arith.constant 0 : i32
    %c0_i32_1 = arith.constant 0 : i32
    return %arg0, %c0_i32, %c0_i32_0 : i32, i32, i32
  }
}

</mosaic_0001>

<llo_original>
// kernel: tpu_custom_call.1
$region0: #{tpu_custom_call.1}
  #allocation0 [shape = 'u32[]', space=smem, size = 0x4, offset = 0x4, fixed_abs, tag = 'smem constant byte address 0x4 - core index']
  #allocation1 [shape = 'u32[144,128]{1,0:T(1,128)}', space=vmem, size = 0x12000, scoped, tag = 'internal scratch']
  #allocation2 [shape = 's32[1]{0}', space=sflag, size = 0x4, scoped, tag = 'scoped memory for tpu_custom_call.1']
  #allocation3 [shape = 'u8[4096]{0}', space=smem, size = 0x1000, scoped, tag = 'prefetched SMEM operand 0']
  %s0 = inlined_call_operand.vmem [shape: s32[6,2], index: 0, kind: input, shape index: {}]
  %s1 = inlined_call_operand.vmem [shape: f32[128,32], index: 1, kind: input, shape index: {}]
  %s2 = inlined_call_operand.vmem [shape: f32[2,32,128], index: 2, kind: input, shape index: {}]
  %s3 = inlined_call_operand.hbm [shape: f32[2,1,128], index: 3, kind: input, shape index: {}]
  %s4 = inlined_call_operand.hbm [shape: f32[2,1,128], index: 4, kind: input, shape index: {}]
  %s5 = inlined_call_operand.vmem [shape: f32[2,32,32], index: 5, kind: input, shape index: {}]
  %s6 = inlined_call_operand.hbm [shape: f32[2,1,32], index: 6, kind: input, shape index: {}]
  %s7 = inlined_call_operand.vmem [shape: f32[32,128], index: 7, kind: input, shape index: {}]
  %s8 = inlined_call_operand.vmem [shape: f32[32,128], index: 8, kind: input, shape index: {}]
  %s9 = inlined_call_operand.hbm [shape: f32[32,128], index: 9, kind: input, shape index: {}]
  %s10 = inlined_call_operand.hbm [shape: f32[32,128], index: 10, kind: input, shape index: {}]
  %s11 = inlined_call_operand.vmem [shape: f32[1,128], index: 11, kind: input, shape index: {}]
  %s12 = inlined_call_operand.hbm [shape: f32[32,128], index: 12, kind: input, shape index: {}]
  %s13 = inlined_call_operand.hbm [shape: f32[32,128], index: 13, kind: input, shape index: {}]
  %s14 = inlined_call_operand.vmem [shape: f32[1,128], index: 14, kind: input, shape index: {}]
  %s15 = inlined_call_operand.vmem [shape: f32[2,6,32], index: 15, kind: output, shape index: {}]
  %s16 = sld [smem:[#allocation0]]
  $region117: #{tpu_custom_call.1} parent=0
    _
  %s18 = ssub.s32 1, %s16
  %s19 = scalar_select 0, %s18, %s16
  %s20 = sshll.u32 %s0, 4
  %s21 = int_to_ptr.vmem [resolvable:$true] %s20
  %23 = dma.vmem_to_smem %s21, 128, [#allocation3], [#allocation2]
  %24 = dma.done [#allocation2], 128
  %25 = sfence
  $region1: #{tpu_custom_call.1} parent=0
    #allocation4 [shape = 'u8[1024]{0}', space=vmem, size = 0x400, scoped, tag = 'input window, operand 3']
    #allocation5 [shape = 's32[2]{0}', space=sflag, size = 0x8, scoped, tag = 'scoped memory for tpu_custom_call.1']
    #allocation6 [shape = 'u8[1024]{0}', space=vmem, size = 0x400, scoped, tag = 'input window, operand 4']
    #allocation7 [shape = 's32[2]{0}', space=sflag, size = 0x8, scoped, tag = 'scoped memory for tpu_custom_call.1']
    #allocation8 [shape = 'u8[1024]{0}', space=vmem, size = 0x400, scoped, tag = 'input window, operand 6']
    #allocation9 [shape = 'u8[16384]{0}', space=vmem, size = 0x4000, scoped, tag = 'input window, operand 9, single buffered']
    #allocation10 [shape = 's32[1]{0}', space=sflag, size = 0x4, scoped, tag = 'scoped memory for tpu_custom_call.1']
    #allocation11 [shape = 'u8[16384]{0}', space=vmem, size = 0x4000, scoped, tag = 'input window, operand 10, single buffered']
    #allocation12 [shape = 'u8[16384]{0}', space=vmem, size = 0x4000, scoped, tag = 'input window, operand 12, single buffered']
    #allocation13 [shape = 's32[1]{0}', space=sflag, size = 0x4, scoped, tag = 'scoped memory for tpu_custom_call.1']
    #allocation14 [shape = 'u8[16384]{0}', space=vmem, size = 0x4000, scoped, tag = 'input window, operand 13, single buffered']
    %26 = vsyncpa [#allocation5], 0
    %s27 = scalar_lea.sflag [#allocation5], 1
    %28 = vsyncpa %s27, 0
    %29 = vsyncpa [#allocation7], 0
    %s30 = scalar_lea.sflag [#allocation7], 1
    %31 = vsyncpa %s30, 0
    %32 = vsyncpa [#allocation10], 0
    %33 = vsyncpa [#allocation13], 0
    loop: start=0, step=1, limit=4
    $region2: #{tpu_custom_call.1} parent=1 // loop_pre_header
      _
    $region3: #{tpu_custom_call.1} parent=1 // loop_header
      %s35 = sphi 0, %s39
      %p36 = scmp.ge.s32.totalorder %s35, 4
      %s43 = sphi 0, %s43
      %s45 = sphi 0, %s43
      %s46 = sphi 0, %s45
      %s60 = sphi 0, %s46
      %s66 = sphi 0, %s68
      %s69 = sphi 0, %s66
      %s70 = sphi 0, %s69
      %s86 = sphi 0, %s70
      %s92 = sphi 0, %s94
      %s95 = sphi 0, %s92
      %s96 = sphi 0, %s95
      %s112 = sphi 0, %s96
      %s118 = sphi 0, %s120
      %s121 = sphi 0, %s118
      %s122 = sphi 0, %s121
      %s138 = sphi 0, %s122
      %s144 = sphi 0, %s146
      %s147 = sphi 0, %s144
      %s148 = sphi 0, %s147
      %s164 = sphi 0, %s148
      %s170 = sphi 0, %s172
      %s173 = sphi 0, %s170
      %s174 = sphi 0, %s173
      %s190 = sphi 0, %s174
      %s194 = sphi 0, %s194
      %s196 = sphi 0, %s194
      %s197 = sphi 0, %s196
      %s211 = sphi 0, %s197
      %s215 = sphi 0, %s215
      %s217 = sphi 0, %s215
      %s218 = sphi 0, %s217
      %s232 = sphi 0, %s218
      %s236 = sphi 0, %s236
      %s238 = sphi 0, %s236
      %s239 = sphi 0, %s238
      %s253 = sphi 0, %s239
      %s257 = sphi 0, %s257
      %s259 = sphi 0, %s257
      %s260 = sphi 0, %s259
      %s274 = sphi 0, %s260
      %s278 = sphi 0, %s278
      %s280 = sphi 0, %s278
      %s281 = sphi 0, %s280
      %s295 = sphi 0, %s281
      %s299 = sphi 0, %s299
      %s301 = sphi 0, %s299
      %s302 = sphi 0, %s301
      %s316 = sphi 0, %s302
      %s320 = sphi 0, %s320
      %s322 = sphi 0, %s320
      %s323 = sphi 0, %s322
      %s337 = sphi 0, %s323
      %s341 = sphi 0, %s341
      %s343 = sphi 0, %s341
      %s344 = sphi 0, %s343
      %s358 = sphi 0, %s344
      %s364 = sphi 0, %s366
      %s367 = sphi 0, %s364
      %s368 = sphi 0, %s367
      %s384 = sphi 0, %s368
    $region4: #{tpu_custom_call.1} parent=1 // loop_header_branch
      %38 = sbr.rel (%p36) target = $region8
    $region5: #{tpu_custom_call.1} parent=1 // loop_body
      %s40 = ssub.s32 %s35, 1
      %s41 = ssub.s32 %s35, 2
      %s42 = sadd.s32 %s35, 1
      %s44 = sadd.s32 %s43, 1
      %p47 = scmp.eq.s32.totalorder %s35, 1
      %p48 = scmp.ne.s32.totalorder %s43, %s45
      %p49 = scmp.eq.s32.totalorder %s35, 0
      %p50 = por %p48, %p49
      %p51 = scmp.ne.s32.totalorder %s43, %s45
      %p52 = scmp.eq.s32.totalorder %s40, 1
      %p53 = por %p51, %p52
      %p54 = scmp.ne.s32.totalorder %s45, %s46
      %p55 = scmp.eq.s32.totalorder %s40, 0
      %p56 = por %p54, %p55
      %p57 = scmp.ne.s32.totalorder %s45, %s46
      %p58 = scmp.eq.s32.totalorder %s41, 1
      %p59 = por %p57, %p58
      %p61 = scmp.ne.s32.totalorder %s46, %s60
      %p62 = scmp.eq.s32.totalorder %s41, 0
      %p63 = por %p61, %p62
      %s64 = ssub.s32 %s35, %s42
      %p65 = scmp.eq.s32.totalorder %s64, 0
      %s67 = sadd.s32 %s66, 1
      %s68 = scalar_select %p65, %s66, %s67
      %p71 = pneg %p65
      %p72 = scmp.eq.s32.totalorder %s35, 1
      %p73 = por %p71, %p72
      %p74 = scmp.ne.s32.totalorder %s66, %s69
      %p75 = scmp.eq.s32.totalorder %s35, 0
      %p76 = por %p74, %p75
      %p77 = scmp.ne.s32.totalorder %s66, %s69
      %p78 = scmp.eq.s32.totalorder %s40, 1
      %p79 = por %p77, %p78
      %p80 = scmp.ne.s32.totalorder %s69, %s70
      %p81 = scmp.eq.s32.totalorder %s40, 0
      %p82 = por %p80, %p81
      %p83 = scmp.ne.s32.totalorder %s69, %s70
      %p84 = scmp.eq.s32.totalorder %s41, 1
      %p85 = por %p83, %p84
      %p87 = scmp.ne.s32.totalorder %s70, %s86
      %p88 = scmp.eq.s32.totalorder %s41, 0
      %p89 = por %p87, %p88
      %s90 = ssub.s32 %s35, %s42
      %p91 = scmp.eq.s32.totalorder %s90, 0
      %s93 = sadd.s32 %s92, 1
      %s94 = scalar_select %p91, %s92, %s93
      %p97 = pneg %p91
      %p98 = scmp.eq.s32.totalorder %s35, 1
      %p99 = por %p97, %p98
      %p100 = scmp.ne.s32.totalorder %s92, %s95
      %p101 = scmp.eq.s32.totalorder %s35, 0
      %p102 = por %p100, %p101
      %p103 = scmp.ne.s32.totalorder %s92, %s95
      %p104 = scmp.eq.s32.totalorder %s40, 1
      %p105 = por %p103, %p104
      %p106 = scmp.ne.s32.totalorder %s95, %s96
      %p107 = scmp.eq.s32.totalorder %s40, 0
      %p108 = por %p106, %p107
      %p109 = scmp.ne.s32.totalorder %s95, %s96
      %p110 = scmp.eq.s32.totalorder %s41, 1
      %p111 = por %p109, %p110
      %p113 = scmp.ne.s32.totalorder %s96, %s112
      %p114 = scmp.eq.s32.totalorder %s41, 0
      %p115 = por %p113, %p114
      %s116 = ssub.s32 %s35, %s42
      %p117 = scmp.eq.s32.totalorder %s116, 0
      %s119 = sadd.s32 %s118, 1
      %s120 = scalar_select %p117, %s118, %s119
      %p123 = pneg %p117
      %p124 = scmp.eq.s32.totalorder %s35, 1
      %p125 = por %p123, %p124
      %p126 = scmp.ne.s32.totalorder %s118, %s121
      %p127 = scmp.eq.s32.totalorder %s35, 0
      %p128 = por %p126, %p127
      %p129 = scmp.ne.s32.totalorder %s118, %s121
      %p130 = scmp.eq.s32.totalorder %s40, 1
      %p131 = por %p129, %p130
      %p132 = scmp.ne.s32.totalorder %s121, %s122
      %p133 = scmp.eq.s32.totalorder %s40, 0
      %p134 = por %p132, %p133
      %p135 = scmp.ne.s32.totalorder %s121, %s122
      %p136 = scmp.eq.s32.totalorder %s41, 1
      %p137 = por %p135, %p136
      %p139 = scmp.ne.s32.totalorder %s122, %s138
      %p140 = scmp.eq.s32.totalorder %s41, 0
      %p141 = por %p139, %p140
      %s142 = ssub.s32 %s35, %s42
      %p143 = scmp.eq.s32.totalorder %s142, 0
      %s145 = sadd.s32 %s144, 1
      %s146 = scalar_select %p143, %s144, %s145
      %p149 = pneg %p143
      %p150 = scmp.eq.s32.totalorder %s35, 1
      %p151 = por %p149, %p150
      %p152 = scmp.ne.s32.totalorder %s144, %s147
      %p153 = scmp.eq.s32.totalorder %s35, 0
      %p154 = por %p152, %p153
      %p155 = scmp.ne.s32.totalorder %s144, %s147
      %p156 = scmp.eq.s32.totalorder %s40, 1
      %p157 = por %p155, %p156
      %p158 = scmp.ne.s32.totalorder %s147, %s148
      %p159 = scmp.eq.s32.totalorder %s40, 0
      %p160 = por %p158, %p159
      %p161 = scmp.ne.s32.totalorder %s147, %s148
      %p162 = scmp.eq.s32.totalorder %s41, 1
      %p163 = por %p161, %p162
      %p165 = scmp.ne.s32.totalorder %s148, %s164
      %p166 = scmp.eq.s32.totalorder %s41, 0
      %p167 = por %p165, %p166
      %s168 = ssub.s32 %s35, %s42
      %p169 = scmp.eq.s32.totalorder %s168, 0
      %s171 = sadd.s32 %s170, 1
      %s172 = scalar_select %p169, %s170, %s171
      %p175 = pneg %p169
      %p176 = scmp.eq.s32.totalorder %s35, 1
      %p177 = por %p175, %p176
      %p178 = scmp.ne.s32.totalorder %s170, %s173
      %p179 = scmp.eq.s32.totalorder %s35, 0
      %p180 = por %p178, %p179
      %p181 = scmp.ne.s32.totalorder %s170, %s173
      %p182 = scmp.eq.s32.totalorder %s40, 1
      %p183 = por %p181, %p182
      %p184 = scmp.ne.s32.totalorder %s173, %s174
      %p185 = scmp.eq.s32.totalorder %s40, 0
      %p186 = por %p184, %p185
      %p187 = scmp.ne.s32.totalorder %s173, %s174
      %p188 = scmp.eq.s32.totalorder %s41, 1
      %p189 = por %p187, %p188
      %p191 = scmp.ne.s32.totalorder %s174, %s190
      %p192 = scmp.eq.s32.totalorder %s41, 0
      %p193 = por %p191, %p192
      %s195 = sadd.s32 %s194, 1
      %p198 = scmp.eq.s32.totalorder %s35, 1
      %p199 = scmp.ne.s32.totalorder %s194, %s196
      %p200 = scmp.eq.s32.totalorder %s35, 0
      %p201 = por %p199, %p200
      %p202 = scmp.ne.s32.totalorder %s194, %s196
      %p203 = scmp.eq.s32.totalorder %s40, 1
      %p204 = por %p202, %p203
      %p205 = scmp.ne.s32.totalorder %s196, %s197
      %p206 = scmp.eq.s32.totalorder %s40, 0
      %p207 = por %p205, %p206
      %p208 = scmp.ne.s32.totalorder %s196, %s197
      %p209 = scmp.eq.s32.totalorder %s41, 1
      %p210 = por %p208, %p209
      %p212 = scmp.ne.s32.totalorder %s197, %s211
      %p213 = scmp.eq.s32.totalorder %s41, 0
      %p214 = por %p212, %p213
      %s216 = sadd.s32 %s215, 1
      %p219 = scmp.eq.s32.totalorder %s35, 1
      %p220 = scmp.ne.s32.totalorder %s215, %s217
      %p221 = scmp.eq.s32.totalorder %s35, 0
      %p222 = por %p220, %p221
      %p223 = scmp.ne.s32.totalorder %s215, %s217
      %p224 = scmp.eq.s32.totalorder %s40, 1
      %p225 = por %p223, %p224
      %p226 = scmp.ne.s32.totalorder %s217, %s218
      %p227 = scmp.eq.s32.totalorder %s40, 0
      %p228 = por %p226, %p227
      %p229 = scmp.ne.s32.totalorder %s217, %s218
      %p230 = scmp.eq.s32.totalorder %s41, 1
      %p231 = por %p229, %p230
      %p233 = scmp.ne.s32.totalorder %s218, %s232
      %p234 = scmp.eq.s32.totalorder %s41, 0
      %p235 = por %p233, %p234
      %s237 = sadd.s32 %s236, 1
      %p240 = scmp.eq.s32.totalorder %s35, 1
      %p241 = scmp.ne.s32.totalorder %s236, %s238
      %p242 = scmp.eq.s32.totalorder %s35, 0
      %p243 = por %p241, %p242
      %p244 = scmp.ne.s32.totalorder %s236, %s238
      %p245 = scmp.eq.s32.totalorder %s40, 1
      %p246 = por %p244, %p245
      %p247 = scmp.ne.s32.totalorder %s238, %s239
      %p248 = scmp.eq.s32.totalorder %s40, 0
      %p249 = por %p247, %p248
      %p250 = scmp.ne.s32.totalorder %s238, %s239
      %p251 = scmp.eq.s32.totalorder %s41, 1
      %p252 = por %p250, %p251
      %p254 = scmp.ne.s32.totalorder %s239, %s253
      %p255 = scmp.eq.s32.totalorder %s41, 0
      %p256 = por %p254, %p255
      %s258 = sadd.s32 %s257, 1
      %p261 = scmp.eq.s32.totalorder %s35, 1
      %p262 = scmp.ne.s32.totalorder %s257, %s259
      %p263 = scmp.eq.s32.totalorder %s35, 0
      %p264 = por %p262, %p263
      %p265 = scmp.ne.s32.totalorder %s257, %s259
      %p266 = scmp.eq.s32.totalorder %s40, 1
      %p267 = por %p265, %p266
      %p268 = scmp.ne.s32.totalorder %s259, %s260
      %p269 = scmp.eq.s32.totalorder %s40, 0
      %p270 = por %p268, %p269
      %p271 = scmp.ne.s32.totalorder %s259, %s260
      %p272 = scmp.eq.s32.totalorder %s41, 1
      %p273 = por %p271, %p272
      %p275 = scmp.ne.s32.totalorder %s260, %s274
      %p276 = scmp.eq.s32.totalorder %s41, 0
      %p277 = por %p275, %p276
      %s279 = sadd.s32 %s278, 1
      %p282 = scmp.eq.s32.totalorder %s35, 1
      %p283 = scmp.ne.s32.totalorder %s278, %s280
      %p284 = scmp.eq.s32.totalorder %s35, 0
      %p285 = por %p283, %p284
      %p286 = scmp.ne.s32.totalorder %s278, %s280
      %p287 = scmp.eq.s32.totalorder %s40, 1
      %p288 = por %p286, %p287
      %p289 = scmp.ne.s32.totalorder %s280, %s281
      %p290 = scmp.eq.s32.totalorder %s40, 0
      %p291 = por %p289, %p290
      %p292 = scmp.ne.s32.totalorder %s280, %s281
      %p293 = scmp.eq.s32.totalorder %s41, 1
      %p294 = por %p292, %p293
      %p296 = scmp.ne.s32.totalorder %s281, %s295
      %p297 = scmp.eq.s32.totalorder %s41, 0
      %p298 = por %p296, %p297
      %s300 = sadd.s32 %s299, 1
      %p303 = scmp.eq.s32.totalorder %s35, 1
      %p304 = scmp.ne.s32.totalorder %s299, %s301
      %p305 = scmp.eq.s32.totalorder %s35, 0
      %p306 = por %p304, %p305
      %p307 = scmp.ne.s32.totalorder %s299, %s301
      %p308 = scmp.eq.s32.totalorder %s40, 1
      %p309 = por %p307, %p308
      %p310 = scmp.ne.s32.totalorder %s301, %s302
      %p311 = scmp.eq.s32.totalorder %s40, 0
      %p312 = por %p310, %p311
      %p313 = scmp.ne.s32.totalorder %s301, %s302
      %p314 = scmp.eq.s32.totalorder %s41, 1
      %p315 = por %p313, %p314
      %p317 = scmp.ne.s32.totalorder %s302, %s316
      %p318 = scmp.eq.s32.totalorder %s41, 0
      %p319 = por %p317, %p318
      %s321 = sadd.s32 %s320, 1
      %p324 = scmp.eq.s32.totalorder %s35, 1
      %p325 = scmp.ne.s32.totalorder %s320, %s322
      %p326 = scmp.eq.s32.totalorder %s35, 0
      %p327 = por %p325, %p326
      %p328 = scmp.ne.s32.totalorder %s320, %s322
      %p329 = scmp.eq.s32.totalorder %s40, 1
      %p330 = por %p328, %p329
      %p331 = scmp.ne.s32.totalorder %s322, %s323
      %p332 = scmp.eq.s32.totalorder %s40, 0
      %p333 = por %p331, %p332
      %p334 = scmp.ne.s32.totalorder %s322, %s323
      %p335 = scmp.eq.s32.totalorder %s41, 1
      %p336 = por %p334, %p335
      %p338 = scmp.ne.s32.totalorder %s323, %s337
      %p339 = scmp.eq.s32.totalorder %s41, 0
      %p340 = por %p338, %p339
      %s342 = sadd.s32 %s341, 1
      %p345 = scmp.eq.s32.totalorder %s35, 1
      %p346 = scmp.ne.s32.totalorder %s341, %s343
      %p347 = scmp.eq.s32.totalorder %s35, 0
      %p348 = por %p346, %p347
      %p349 = scmp.ne.s32.totalorder %s341, %s343
      %p350 = scmp.eq.s32.totalorder %s40, 1
      %p351 = por %p349, %p350
      %p352 = scmp.ne.s32.totalorder %s343, %s344
      %p353 = scmp.eq.s32.totalorder %s40, 0
      %p354 = por %p352, %p353
      %p355 = scmp.ne.s32.totalorder %s343, %s344
      %p356 = scmp.eq.s32.totalorder %s41, 1
      %p357 = por %p355, %p356
      %p359 = scmp.ne.s32.totalorder %s344, %s358
      %p360 = scmp.eq.s32.totalorder %s41, 0
      %p361 = por %p359, %p360
      %s362 = ssub.s32 %s35, %s42
      %p363 = scmp.eq.s32.totalorder %s362, 0
      %s365 = sadd.s32 %s364, 1
      %s366 = scalar_select %p363, %s364, %s365
      %p369 = pneg %p363
      %p370 = scmp.eq.s32.totalorder %s35, 1
      %p371 = por %p369, %p370
      %p372 = scmp.ne.s32.totalorder %s364, %s367
      %p373 = scmp.eq.s32.totalorder %s35, 0
      %p374 = por %p372, %p373
      %p375 = scmp.ne.s32.totalorder %s364, %s367
      %p376 = scmp.eq.s32.totalorder %s40, 1
      %p377 = por %p375, %p376
      %p378 = scmp.ne.s32.totalorder %s367, %s368
      %p379 = scmp.eq.s32.totalorder %s40, 0
      %p380 = por %p378, %p379
      %p381 = scmp.ne.s32.totalorder %s367, %s368
      %p382 = scmp.eq.s32.totalorder %s41, 1
      %p383 = por %p381, %p382
      %p385 = scmp.ne.s32.totalorder %s368, %s384
      %p386 = scmp.eq.s32.totalorder %s41, 0
      %p387 = por %p385, %p386
      %p388 = scmp.le.s32.totalorder 1, %s35
      %p389 = scmp.lt.s32.totalorder %s35, 3
      %p390 = pnand %p388, %p389
      %p391 = pneg %p390
      // Predicated region
      $region9: #{tpu_custom_call.1} parent=5 // pred_check
        _
      $region10: #{tpu_custom_call.1} parent=5 // pred_check_branch
        %393 = sbr.rel (%p390) target = $region12
      $region11: #{tpu_custom_call.1} parent=5 // pred_region
        %s394 = ssub.s32 %s35, 1
        // Predicated region
        $region13: #{tpu_custom_call.1} parent=11 // pred_check
          %p395 = pneg %p56
        $region14: #{tpu_custom_call.1} parent=11 // pred_check_branch
          %397 = sbr.rel (%p395) target = $region16
        $region15: #{tpu_custom_call.1} parent=11 // pred_region
          _
        $region16: #{tpu_custom_call.1} parent=11 // pred_fallthru
          _
        // Predicated region
        $region17: #{tpu_custom_call.1} parent=11 // pred_check
          %p398 = pneg %p207
        $region18: #{tpu_custom_call.1} parent=11 // pred_check_branch
          %400 = sbr.rel (%p398) target = $region20
        $region19: #{tpu_custom_call.1} parent=11 // pred_region
          _
        $region20: #{tpu_custom_call.1} parent=11 // pred_fallthru
          _
        // Predicated region
        $region21: #{tpu_custom_call.1} parent=11 // pred_check
          %p401 = pneg %p228
        $region22: #{tpu_custom_call.1} parent=11 // pred_check_branch
          %403 = sbr.rel (%p401) target = $region24
        $region23: #{tpu_custom_call.1} parent=11 // pred_region
          _
        $region24: #{tpu_custom_call.1} parent=11 // pred_fallthru
          _
        // Predicated region
        $region25: #{tpu_custom_call.1} parent=11 // pred_check
          %p404 = pneg %p249
        $region26: #{tpu_custom_call.1} parent=11 // pred_check_branch
          %406 = sbr.rel (%p404) target = $region28
        $region27: #{tpu_custom_call.1} parent=11 // pred_region
          %s408 = ssub.s32 512, 512
          %409 = vsyncadd [#allocation10], %s408
          %s410 = sshll.u32 [#allocation9], 4
          %s411 = int_to_ptr.vmem [resolvable:$true] %s410
          %416 = dma.hbm_to_vmem [thread:$0]  %s9, 512, %s411, [#allocation10], 128, 128, 8
        $region28: #{tpu_custom_call.1} parent=11 // pred_fallthru
          _
        // Predicated region
        $region29: #{tpu_custom_call.1} parent=11 // pred_check
          %p417 = pneg %p270
        $region30: #{tpu_custom_call.1} parent=11 // pred_check_branch
          %419 = sbr.rel (%p417) target = $region32
        $region31: #{tpu_custom_call.1} parent=11 // pred_region
          %s421 = ssub.s32 512, 512
          %422 = vsyncadd [#allocation10], %s421
          %s423 = sshll.u32 [#allocation11], 4
          %s424 = int_to_ptr.vmem [resolvable:$true] %s423
          %429 = dma.hbm_to_vmem [thread:$0]  %s10, 512, %s424, [#allocation10], 128, 128, 8
        $region32: #{tpu_custom_call.1} parent=11 // pred_fallthru
          _
        // Predicated region
        $region33: #{tpu_custom_call.1} parent=11 // pred_check
          %p430 = pneg %p291
        $region34: #{tpu_custom_call.1} parent=11 // pred_check_branch
          %432 = sbr.rel (%p430) target = $region36
        $region35: #{tpu_custom_call.1} parent=11 // pred_region
          _
        $region36: #{tpu_custom_call.1} parent=11 // pred_fallthru
          _
        // Predicated region
        $region37: #{tpu_custom_call.1} parent=11 // pred_check
          %p433 = pneg %p312
        $region38: #{tpu_custom_call.1} parent=11 // pred_check_branch
          %435 = sbr.rel (%p433) target = $region40
        $region39: #{tpu_custom_call.1} parent=11 // pred_region
          %s437 = ssub.s32 512, 512
          %438 = vsyncadd [#allocation13], %s437
          %s439 = sshll.u32 [#allocation12], 4
          %s440 = int_to_ptr.vmem [resolvable:$true] %s439
          %445 = dma.hbm_to_vmem [thread:$0]  %s12, 512, %s440, [#allocation13], 128, 128, 8
        $region40: #{tpu_custom_call.1} parent=11 // pred_fallthru
          _
        // Predicated region
        $region41: #{tpu_custom_call.1} parent=11 // pred_check
          %p446 = pneg %p333
        $region42: #{tpu_custom_call.1} parent=11 // pred_check_branch
          %448 = sbr.rel (%p446) target = $region44
        $region43: #{tpu_custom_call.1} parent=11 // pred_region
          %s450 = ssub.s32 512, 512
          %451 = vsyncadd [#allocation13], %s450
          %s452 = sshll.u32 [#allocation14], 4
          %s453 = int_to_ptr.vmem [resolvable:$true] %s452
          %458 = dma.hbm_to_vmem [thread:$0]  %s13, 512, %s453, [#allocation13], 128, 128, 8
        $region44: #{tpu_custom_call.1} parent=11 // pred_fallthru
          _
        // Predicated region
        $region45: #{tpu_custom_call.1} parent=11 // pred_check
          %p459 = pneg %p354
        $region46: #{tpu_custom_call.1} parent=11 // pred_check_branch
          %461 = sbr.rel (%p459) target = $region48
        $region47: #{tpu_custom_call.1} parent=11 // pred_region
          _
        $region48: #{tpu_custom_call.1} parent=11 // pred_fallthru
          _
      $region12: #{tpu_custom_call.1} parent=5 // pred_fallthru
        _
      %p462 = scmp.lt.s32.totalorder %s35, 2
      // Predicated region
      $region49: #{tpu_custom_call.1} parent=5 // pred_check
        %p463 = pneg %p462
      $region50: #{tpu_custom_call.1} parent=5 // pred_check_branch
        %465 = sbr.rel (%p463) target = $region52
      $region51: #{tpu_custom_call.1} parent=5 // pred_region
        // Predicated region
        $region53: #{tpu_custom_call.1} parent=51 // pred_check
          %p466 = pneg %p76
        $region54: #{tpu_custom_call.1} parent=51 // pred_check_branch
          %468 = sbr.rel (%p466) target = $region56
        $region55: #{tpu_custom_call.1} parent=51 // pred_region
          %p469 = scmp.lt.s32.totalorder %s35, 1
          %s470 = scalar_select %p469, %s35, 1
          %s471 = smul.addr %s470, 4
          %s472 = smul.addr %s471, 8
          %s473 = scalar_lea.vmem %s2, %s472
        $region56: #{tpu_custom_call.1} parent=51 // pred_fallthru
          _
        // Predicated region
        $region57: #{tpu_custom_call.1} parent=51 // pred_check
          %p474 = pneg %p102
        $region58: #{tpu_custom_call.1} parent=51 // pred_check_branch
          %476 = sbr.rel (%p474) target = $region60
        $region59: #{tpu_custom_call.1} parent=51 // pred_region
          %s477 = sand.u32 %s92, 1
          %s478 = scalar_lea.sflag [#allocation5], %s477
          %s479 = sand.u32 %s92, 1
          %s480 = scalar_lea.vmem [#allocation4], %s479
          %s482 = ssub.s32 16, 16
          %483 = vsyncadd %s478, %s482
          %s484 = smul.addr %s35, 16
          %s485 = scalar_lea.hbm %s3, %s484
          %s487 = sshll.u32 %s480, 4
          %s488 = int_to_ptr.vmem [resolvable:$true] %s487
          %490 = dma.hbm_to_vmem [thread:$0]  %s485, 16, %s488, %s478
        $region60: #{tpu_custom_call.1} parent=51 // pred_fallthru
          _
        // Predicated region
        $region61: #{tpu_custom_call.1} parent=51 // pred_check
          %p491 = pneg %p128
        $region62: #{tpu_custom_call.1} parent=51 // pred_check_branch
          %493 = sbr.rel (%p491) target = $region64
        $region63: #{tpu_custom_call.1} parent=51 // pred_region
          %s494 = sand.u32 %s35, 1
          %s495 = scalar_lea.sflag [#allocation7], %s494
          %s496 = sand.u32 %s118, 1
          %s497 = scalar_lea.vmem [#allocation6], %s496
          %s499 = ssub.s32 16, 16
          %500 = vsyncadd %s495, %s499
          %s501 = smul.addr %s35, 16
          %s502 = scalar_lea.hbm %s4, %s501
          %s504 = sshll.u32 %s497, 4
          %s505 = int_to_ptr.vmem [resolvable:$true] %s504
          %507 = dma.hbm_to_vmem [thread:$0]  %s502, 16, %s505, %s495
        $region64: #{tpu_custom_call.1} parent=51 // pred_fallthru
          _
        // Predicated region
        $region65: #{tpu_custom_call.1} parent=51 // pred_check
          %p508 = pneg %p154
        $region66: #{tpu_custom_call.1} parent=51 // pred_check_branch
          %510 = sbr.rel (%p508) target = $region68
        $region67: #{tpu_custom_call.1} parent=51 // pred_region
          %p511 = scmp.lt.s32.totalorder %s35, 1
          %s512 = scalar_select %p511, %s35, 1
          %s513 = smul.addr %s512, 4
          %s514 = smul.addr %s513, 8
          %s515 = scalar_lea.vmem %s5, %s514
        $region68: #{tpu_custom_call.1} parent=51 // pred_fallthru
          _
        // Predicated region
        $region69: #{tpu_custom_call.1} parent=51 // pred_check
          %p516 = pneg %p180
        $region70: #{tpu_custom_call.1} parent=51 // pred_check_branch
          %518 = sbr.rel (%p516) target = $region72
        $region71: #{tpu_custom_call.1} parent=51 // pred_region
          %s519 = sand.u32 %s35, 1
          %s520 = scalar_lea.sflag [#allocation7], %s519
          %s521 = sand.u32 %s170, 1
          %s522 = scalar_lea.vmem [#allocation8], %s521
          %s524 = ssub.s32 16, 16
          %525 = vsyncadd %s520, %s524
          %s526 = smul.addr %s35, 16
          %s527 = scalar_lea.hbm %s6, %s526
          %s529 = sshll.u32 %s522, 4
          %s530 = int_to_ptr.vmem [resolvable:$true] %s529
          %532 = dma.hbm_to_vmem [thread:$0]  %s527, 16, %s530, %s520
        $region72: #{tpu_custom_call.1} parent=51 // pred_fallthru
          _
      $region52: #{tpu_custom_call.1} parent=5 // pred_fallthru
        _
      %p533 = scmp.le.s32.totalorder 1, %s35
      %p534 = scmp.lt.s32.totalorder %s35, 3
      %p535 = pnand %p533, %p534
      %p536 = pneg %p535
      // Predicated region
      $region73: #{tpu_custom_call.1} parent=5 // pred_check
        _
      $region74: #{tpu_custom_call.1} parent=5 // pred_check_branch
        %538 = sbr.rel (%p535) target = $region76
      $region75: #{tpu_custom_call.1} parent=5 // pred_region
        %s539 = ssub.s32 %s35, 1
        %s540 = sand.u32 %s95, 1
        %s541 = scalar_lea.sflag [#allocation5], %s540
        %s542 = sand.u32 %s95, 1
        %s543 = scalar_lea.vmem [#allocation4], %s542
        // Predicated region
        $region77: #{tpu_custom_call.1} parent=75 // pred_check
          %p544 = pneg %p108
        $region78: #{tpu_custom_call.1} parent=75 // pred_check_branch
          %546 = sbr.rel (%p544) target = $region80
        $region79: #{tpu_custom_call.1} parent=75 // pred_region
          %547 = dma.done %s541, 16
        $region80: #{tpu_custom_call.1} parent=75 // pred_fallthru
          _
        %s548 = sand.u32 %s40, 1
        %s549 = scalar_lea.sflag [#allocation7], %s548
        %s550 = sand.u32 %s121, 1
        %s551 = scalar_lea.vmem [#allocation6], %s550
        // Predicated region
        $region81: #{tpu_custom_call.1} parent=75 // pred_check
          %p552 = pneg %p134
        $region82: #{tpu_custom_call.1} parent=75 // pred_check_branch
          %554 = sbr.rel (%p552) target = $region84
        $region83: #{tpu_custom_call.1} parent=75 // pred_region
          %555 = dma.done %s549, 16
        $region84: #{tpu_custom_call.1} parent=75 // pred_fallthru
          _
        %s556 = sand.u32 %s40, 1
        %s557 = scalar_lea.sflag [#allocation7], %s556
        %s558 = sand.u32 %s173, 1
        %s559 = scalar_lea.vmem [#allocation8], %s558
        // Predicated region
        $region85: #{tpu_custom_call.1} parent=75 // pred_check
          %p560 = pneg %p186
        $region86: #{tpu_custom_call.1} parent=75 // pred_check_branch
          %562 = sbr.rel (%p560) target = $region88
        $region87: #{tpu_custom_call.1} parent=75 // pred_region
          %563 = dma.done %s557, 16
        $region88: #{tpu_custom_call.1} parent=75 // pred_fallthru
          _
        // Predicated region
        $region89: #{tpu_custom_call.1} parent=75 // pred_check
          %p564 = pneg %p249
        $region90: #{tpu_custom_call.1} parent=75 // pred_check_branch
          %566 = sbr.rel (%p564) target = $region92
        $region91: #{tpu_custom_call.1} parent=75 // pred_region
          %567 = dma.done [#allocation10], 512
        $region92: #{tpu_custom_call.1} parent=75 // pred_fallthru
          _
        // Predicated region
        $region93: #{tpu_custom_call.1} parent=75 // pred_check
          %p568 = pneg %p270
        $region94: #{tpu_custom_call.1} parent=75 // pred_check_branch
          %570 = sbr.rel (%p568) target = $region96
        $region95: #{tpu_custom_call.1} parent=75 // pred_region
          %571 = dma.done [#allocation10], 512
        $region96: #{tpu_custom_call.1} parent=75 // pred_fallthru
          _
        // Predicated region
        $region97: #{tpu_custom_call.1} parent=75 // pred_check
          %p572 = pneg %p312
        $region98: #{tpu_custom_call.1} parent=75 // pred_check_branch
          %574 = sbr.rel (%p572) target = $region100
        $region99: #{tpu_custom_call.1} parent=75 // pred_region
          %575 = dma.done [#allocation13], 512
        $region100: #{tpu_custom_call.1} parent=75 // pred_fallthru
          _
        // Predicated region
        $region101: #{tpu_custom_call.1} parent=75 // pred_check
          %p576 = pneg %p333
        $region102: #{tpu_custom_call.1} parent=75 // pred_check_branch
          %578 = sbr.rel (%p576) target = $region104
        $region103: #{tpu_custom_call.1} parent=75 // pred_region
          %579 = dma.done [#allocation13], 512
        $region104: #{tpu_custom_call.1} parent=75 // pred_fallthru
          _
        %p580 = pneg %p56
        %p581 = pneg %p53
        %p582 = scmp.lt.s32.totalorder %s40, 1
        %s583 = scalar_select %p582, %s40, 1
        %s584 = smul.addr %s583, 4
        %s585 = smul.addr %s584, 8
        %s586 = scalar_lea.vmem %s2, %s585
        %p587 = pneg %p82
        %p588 = pneg %p79
        %s589 = sand.u32 %s95, 1
        %s590 = scalar_lea.sflag [#allocation5], %s589
        %s591 = sand.u32 %s95, 1
        %s592 = scalar_lea.vmem [#allocation4], %s591
        %p593 = pneg %p108
        %p594 = pneg %p105
        %s595 = sand.u32 %s40, 1
        %s596 = scalar_lea.sflag [#allocation7], %s595
        %s597 = sand.u32 %s121, 1
        %s598 = scalar_lea.vmem [#allocation6], %s597
        %p599 = pneg %p134
        %p600 = pneg %p131
        %p601 = scmp.lt.s32.totalorder %s40, 1
        %s602 = scalar_select %p601, %s40, 1
        %s603 = smul.addr %s602, 4
        %s604 = smul.addr %s603, 8
        %s605 = scalar_lea.vmem %s5, %s604
        %p606 = pneg %p160
        %p607 = pneg %p157
        %s608 = sand.u32 %s40, 1
        %s609 = scalar_lea.sflag [#allocation7], %s608
        %s610 = sand.u32 %s173, 1
        %s611 = scalar_lea.vmem [#allocation8], %s610
        %p612 = pneg %p186
        %p613 = pneg %p183
        %p614 = pneg %p207
        %p615 = pneg %p204
        %p616 = pneg %p228
        %p617 = pneg %p225
        %p618 = pneg %p249
        %p619 = pneg %p246
        %p620 = pneg %p270
        %p621 = pneg %p267
        %p622 = pneg %p291
        %p623 = pneg %p288
        %p624 = pneg %p312
        %p625 = pneg %p309
        %p626 = pneg %p333
        %p627 = pneg %p330
        %p628 = pneg %p354
        %p629 = pneg %p351
        %p630 = pneg %p380
        %p631 = pneg %p377
        %p632 = scmp.lt.s32.totalorder %s40, 1
        %s633 = scalar_select %p632, %s40, 1
        %s634 = smul.addr %s633, 8
        %s635 = scalar_lea.vmem %s15, %s634
        %p636 = scmp.lt.s32.totalorder %s40, 1
        %s637 = scalar_select %p636, %s40, 1
        %s638 = smul.addr %s637, 4
        %s639 = smul.addr %s638, 8
        %s640 = scalar_lea.vmem %s2, %s639
        %p641 = scmp.lt.s32.totalorder %s40, 1
        %s642 = scalar_select %p641, %s40, 1
        %s643 = smul.addr %s642, 4
        %s644 = smul.addr %s643, 8
        %s645 = scalar_lea.vmem %s5, %s644
        %p646 = scmp.lt.s32.totalorder %s40, 1
        %s647 = scalar_select %p646, %s40, 1
        %s648 = smul.addr %s647, 8
        %s649 = scalar_lea.vmem %s15, %s648
        %v650 = vld [vmem:[%s640] sm:$0xff]
        %v651 = vld [vmem:[%s640 + $0x8] sm:$0xff]
        %v652 = vld [vmem:[%s640 + $0x10] sm:$0xff]
        %v653 = vld [vmem:[%s640 + $0x18] sm:$0xff]
        %v654 = vld [vmem:[%s645] sm:$0xff]
        %v655 = vld [vmem:[%s645 + $0x8] sm:$0xff]
        %v656 = vld [vmem:[%s645 + $0x10] sm:$0xff]
        %v657 = vld [vmem:[%s645 + $0x18] sm:$0xff]
        %v658 = vld [vmem:[%s543] sm:$0x1]
        %v659 = vld [vmem:[%s551] sm:$0x1]
        %v660 = vld [vmem:[%s559] sm:$0x1]
        %v661 = vld [vmem:[%s11] sm:$0x1]
        %v662 = vld [vmem:[%s14] sm:$0x1]
        %s663 = sld [smem:[#allocation3 + %s40]]
        %s664 = scalar_lea.vmem %s1, %s663
        %v665 = vld [vmem:[%s664] sm:$0x1]
        %v666 = vld [vmem:[%s7] sm:$0xff]
        %v667 = vld [vmem:[%s7 + $0x8] sm:$0xff]
        %v668 = vld [vmem:[%s7 + $0x10] sm:$0xff]
        %v669 = vld [vmem:[%s7 + $0x18] sm:$0xff]
        %vm670 = vcmask 261120
        %v672 = vsel %vm670, %v665, 0
        %674 = vmatprep.subr.mxu0 0.0
        %675 = vmatpush1.msra.mxu0 %v666
        %676 = vmatprep.subr.mxu0 0.0
        %677 = vmatpush1.msra.mxu0 %v667
        %678 = vmatprep.subr.mxu0 0.0
        %679 = vmatpush1.msra.mxu0 %v668
        %680 = vmatprep.subr.mxu0 0.0
        %681 = vmatpush1.msra.mxu0 %v669
        %682 = vmatprep.subr.mxu0 0.0
        %683 = vmatpush1.msra.mxu0 0.0
        %684 = vmatprep.subr.mxu0 0.0
        %685 = vmatpush1.msra.mxu0 0.0
        %686 = vmatprep.subr.mxu0 0.0
        %687 = vmatpush1.msra.mxu0 0.0
        %688 = vmatprep.subr.mxu0 0.0
        %689 = vmatpush1.msra.mxu0 0.0
        %690 = vmatprep.subr.mxu0 0.0
        %691 = vmatpush1.msra.mxu0 0.0
        %692 = vmatprep.subr.mxu0 0.0
        %693 = vmatpush1.msra.mxu0 0.0
        %694 = vmatprep.subr.mxu0 0.0
        %695 = vmatpush1.msra.mxu0 0.0
        %696 = vmatprep.subr.mxu0 0.0
        %697 = vmatpush1.msra.mxu0 0.0
        %698 = vmatprep.subr.mxu0 0.0
        %699 = vmatpush1.msra.mxu0 0.0
        %700 = vmatprep.subr.mxu0 0.0
        %701 = vmatpush1.msra.mxu0 0.0
        %702 = vmatprep.subr.mxu0 0.0
        %703 = vmatpush1.msra.mxu0 0.0
        %704 = vmatprep.subr.mxu0 0.0
        %705 = vmatpush1.msra.mxu0 0.0
        %706 = vmatprep.subr.mxu0 0.0
        %707 = vmatpush1.msra.mxu0 0.0
        %708 = vmatprep.subr.mxu0 0.0
        %709 = vmatpush1.msra.mxu0 0.0
        %710 = vmatprep.subr.mxu0 0.0
        %711 = vmatpush1.msra.mxu0 0.0
        %712 = vmatprep.subr.mxu0 0.0
        %713 = vmatpush1.msra.mxu0 0.0
        %714 = vmatprep.subr.mxu0 0.0
        %715 = vmatpush1.msra.mxu0 0.0
        %716 = vmatprep.subr.mxu0 0.0
        %717 = vmatpush1.msra.mxu0 0.0
        %718 = vmatprep.subr.mxu0 0.0
        %719 = vmatpush1.msra.mxu0 0.0
        %720 = vmatprep.subr.mxu0 0.0
        %721 = vmatpush1.msra.mxu0 0.0
        %722 = vmatprep.subr.mxu0 0.0
        %723 = vmatpush1.msra.mxu0 0.0
        %724 = vmatprep.subr.mxu0 0.0
        %725 = vmatpush1.msra.mxu0 0.0
        %726 = vmatprep.subr.mxu0 0.0
        %727 = vmatpush1.msra.mxu0 0.0
        %728 = vmatprep.subr.mxu0 0.0
        %729 = vmatpush1.msra.mxu0 0.0
        %730 = vmatprep.subr.mxu0 0.0
        %731 = vmatpush1.msra.mxu0 0.0
        %732 = vmatprep.subr.mxu0 0.0
        %733 = vmatpush1.msra.mxu0 0.0
        %734 = vmatprep.subr.mxu0 0.0
        %735 = vmatpush1.msra.mxu0 0.0
        %736 = vmatprep.subr.mxu0 0.0
        %737 = vmatpush1.msra.mxu0 0.0
        %738 = vmatprep.mubr.f32.mxu0 0.0
        %739 = vmatmul.mubr.f32.gmra.mrb[0].mxu0 %v672
        %v740 = vpop.f32.mrb[0].mxu0
        %v741 = vadd.f32 %v659, %v740
        %v742 = vpop.f32.mrb[0].mxu0
        %743 = vdwg.mxu0
        %v744 = vxor.u32 %v741, 2147483648
        %v745 = vmul.f32 %v744, 1.442695
        %v746 = vpow.pop %v745
        %v747 = vadd.f32 %v746, 1.0
        %v748 = vrcp.pop %v747
        %v749 = vmul.f32 1.0, %v748
        %v750 = vtanh.pop %v741
        %752 = vrot.lane.b32.xlu0 %v750, 64
        %v753 = vpop.permute.xlu0 %752
        %v755 = vmul.f32 %v749, %v753
        %v756 = vtanh.pop %v755
        %758 = vrot.lane.b32.xlu0 %v756, 96
        %v759 = vpop.permute.xlu0 %758
        %v761 = vmul.f32 %v749, %v759
        %v762 = vld [vmem:[#allocation9] sm:$0xff]
        %v763 = vld [vmem:[#allocation9 + $0x8] sm:$0xff]
        %v764 = vld [vmem:[#allocation9 + $0x10] sm:$0xff]
        %v765 = vld [vmem:[#allocation9 + $0x18] sm:$0xff]
        %767 = vrot.lane.b32.xlu0 %v761, 32
        %v768 = vpop.permute.xlu0 %767
        %v769 = vsel %vm670, %v768, 0
        %771 = vmatprep.subr.mxu0 0.0
        %772 = vmatpush1.msra.mxu0 %v762
        %773 = vmatprep.subr.mxu0 0.0
        %774 = vmatpush1.msra.mxu0 %v763
        %775 = vmatprep.subr.mxu0 0.0
        %776 = vmatpush1.msra.mxu0 %v764
        %777 = vmatprep.subr.mxu0 0.0
        %778 = vmatpush1.msra.mxu0 %v765
        %779 = vmatprep.subr.mxu0 0.0
        %780 = vmatpush1.msra.mxu0 0.0
        %781 = vmatprep.subr.mxu0 0.0
        %782 = vmatpush1.msra.mxu0 0.0
        %783 = vmatprep.subr.mxu0 0.0
        %784 = vmatpush1.msra.mxu0 0.0
        %785 = vmatprep.subr.mxu0 0.0
        %786 = vmatpush1.msra.mxu0 0.0
        %787 = vmatprep.subr.mxu0 0.0
        %788 = vmatpush1.msra.mxu0 0.0
        %789 = vmatprep.subr.mxu0 0.0
        %790 = vmatpush1.msra.mxu0 0.0
        %791 = vmatprep.subr.mxu0 0.0
        %792 = vmatpush1.msra.mxu0 0.0
        %793 = vmatprep.subr.mxu0 0.0
        %794 = vmatpush1.msra.mxu0 0.0
        %795 = vmatprep.subr.mxu0 0.0
        %796 = vmatpush1.msra.mxu0 0.0
        %797 = vmatprep.subr.mxu0 0.0
        %798 = vmatpush1.msra.mxu0 0.0
        %799 = vmatprep.subr.mxu0 0.0
        %800 = vmatpush1.msra.mxu0 0.0
        %801 = vmatprep.subr.mxu0 0.0
        %802 = vmatpush1.msra.mxu0 0.0
        %803 = vmatprep.subr.mxu0 0.0
        %804 = vmatpush1.msra.mxu0 0.0
        %805 = vmatprep.subr.mxu0 0.0
        %806 = vmatpush1.msra.mxu0 0.0
        %807 = vmatprep.subr.mxu0 0.0
        %808 = vmatpush1.msra.mxu0 0.0
        %809 = vmatprep.subr.mxu0 0.0
        %810 = vmatpush1.msra.mxu0 0.0
        %811 = vmatprep.subr.mxu0 0.0
        %812 = vmatpush1.msra.mxu0 0.0
        %813 = vmatprep.subr.mxu0 0.0
        %814 = vmatpush1.msra.mxu0 0.0
        %815 = vmatprep.subr.mxu0 0.0
        %816 = vmatpush1.msra.mxu0 0.0
        %817 = vmatprep.subr.mxu0 0.0
        %818 = vmatpush1.msra.mxu0 0.0
        %819 = vmatprep.subr.mxu0 0.0
        %820 = vmatpush1.msra.mxu0 0.0
        %821 = vmatprep.subr.mxu0 0.0
        %822 = vmatpush1.msra.mxu0 0.0
        %823 = vmatprep.subr.mxu0 0.0
        %824 = vmatpush1.msra.mxu0 0.0
        %825 = vmatprep.subr.mxu0 0.0
        %826 = vmatpush1.msra.mxu0 0.0
        %827 = vmatprep.subr.mxu0 0.0
        %828 = vmatpush1.msra.mxu0 0.0
        %829 = vmatprep.subr.mxu0 0.0
        %830 = vmatpush1.msra.mxu0 0.0
        %831 = vmatprep.subr.mxu0 0.0
        %832 = vmatpush1.msra.mxu0 0.0
        %833 = vmatprep.subr.mxu0 0.0
        %834 = vmatpush1.msra.mxu0 0.0
        %835 = vmatprep.mubr.f32.mxu0 0.0
        %836 = vmatmul.mubr.f32.gmra.mrb[0].mxu0 %v769
        %v837 = vpop.f32.mrb[0].mxu0
        %v838 = vadd.f32 %v661, %v837
        %v839 = vpop.f32.mrb[0].mxu0
        %840 = vdwg.mxu0
        %v841 = vxor.u32 %v838, 2147483648
        %v842 = vmul.f32 %v841, 1.442695
        %v843 = vpow.pop %v842
        %v844 = vadd.f32 %v843, 1.0
        %v845 = vrcp.pop %v844
        %v846 = vmul.f32 1.0, %v845
        %v847 = vtanh.pop %v838
        %849 = vrot.lane.b32.xlu0 %v847, 64
        %v850 = vpop.permute.xlu0 %849
        %v852 = vmul.f32 %v846, %v850
        %v853 = vtanh.pop %v852
        %855 = vrot.lane.b32.xlu0 %v853, 96
        %v856 = vpop.permute.xlu0 %855
        %v858 = vmul.f32 %v846, %v856
        %v859 = vld [vmem:[#allocation12] sm:$0xff]
        %v860 = vld [vmem:[#allocation12 + $0x8] sm:$0xff]
        %v861 = vld [vmem:[#allocation12 + $0x10] sm:$0xff]
        %v862 = vld [vmem:[#allocation12 + $0x18] sm:$0xff]
        %864 = vrot.lane.b32.xlu0 %v858, 32
        %v865 = vpop.permute.xlu0 %864
        %v866 = vsel %vm670, %v865, 0
        %868 = vmatprep.subr.mxu0 0.0
        %869 = vmatpush1.msra.mxu0 %v859
        %870 = vmatprep.subr.mxu0 0.0
        %871 = vmatpush1.msra.mxu0 %v860
        %872 = vmatprep.subr.mxu0 0.0
        %873 = vmatpush1.msra.mxu0 %v861
        %874 = vmatprep.subr.mxu0 0.0
        %875 = vmatpush1.msra.mxu0 %v862
        %876 = vmatprep.subr.mxu0 0.0
        %877 = vmatpush1.msra.mxu0 0.0
        %878 = vmatprep.subr.mxu0 0.0
        %879 = vmatpush1.msra.mxu0 0.0
        %880 = vmatprep.subr.mxu0 0.0
        %881 = vmatpush1.msra.mxu0 0.0
        %882 = vmatprep.subr.mxu0 0.0
        %883 = vmatpush1.msra.mxu0 0.0
        %884 = vmatprep.subr.mxu0 0.0
        %885 = vmatpush1.msra.mxu0 0.0
        %886 = vmatprep.subr.mxu0 0.0
        %887 = vmatpush1.msra.mxu0 0.0
        %888 = vmatprep.subr.mxu0 0.0
        %889 = vmatpush1.msra.mxu0 0.0
        %890 = vmatprep.subr.mxu0 0.0
        %891 = vmatpush1.msra.mxu0 0.0
        %892 = vmatprep.subr.mxu0 0.0
        %893 = vmatpush1.msra.mxu0 0.0
        %894 = vmatprep.subr.mxu0 0.0
        %895 = vmatpush1.msra.mxu0 0.0
        %896 = vmatprep.subr.mxu0 0.0
        %897 = vmatpush1.msra.mxu0 0.0
        %898 = vmatprep.subr.mxu0 0.0
        %899 = vmatpush1.msra.mxu0 0.0
        %900 = vmatprep.subr.mxu0 0.0
        %901 = vmatpush1.msra.mxu0 0.0
        %902 = vmatprep.subr.mxu0 0.0
        %903 = vmatpush1.msra.mxu0 0.0
        %904 = vmatprep.subr.mxu0 0.0
        %905 = vmatpush1.msra.mxu0 0.0
        %906 = vmatprep.subr.mxu0 0.0
        %907 = vmatpush1.msra.mxu0 0.0
        %908 = vmatprep.subr.mxu0 0.0
        %909 = vmatpush1.msra.mxu0 0.0
        %910 = vmatprep.subr.mxu0 0.0
        %911 = vmatpush1.msra.mxu0 0.0
        %912 = vmatprep.subr.mxu0 0.0
        %913 = vmatpush1.msra.mxu0 0.0
        %914 = vmatprep.subr.mxu0 0.0
        %915 = vmatpush1.msra.mxu0 0.0
        %916 = vmatprep.subr.mxu0 0.0
        %917 = vmatpush1.msra.mxu0 0.0
        %918 = vmatprep.subr.mxu0 0.0
        %919 = vmatpush1.msra.mxu0 0.0
        %920 = vmatprep.subr.mxu0 0.0
        %921 = vmatpush1.msra.mxu0 0.0
        %922 = vmatprep.subr.mxu0 0.0
        %923 = vmatpush1.msra.mxu0 0.0
        %924 = vmatprep.subr.mxu0 0.0
        %925 = vmatpush1.msra.mxu0 0.0
        %926 = vmatprep.subr.mxu0 0.0
        %927 = vmatpush1.msra.mxu0 0.0
        %928 = vmatprep.subr.mxu0 0.0
        %929 = vmatpush1.msra.mxu0 0.0
        %930 = vmatprep.subr.mxu0 0.0
        %931 = vmatpush1.msra.mxu0 0.0
        %932 = vmatprep.mubr.f32.mxu0 0.0
        %933 = vmatmul.mubr.f32.gmra.mrb[0].mxu0 %v866
        %v934 = vpop.f32.mrb[0].mxu0
        %v935 = vadd.f32 %v662, %v934
        %v936 = vpop.f32.mrb[0].mxu0
        %937 = vdwg.mxu0
        %v938 = vxor.u32 %v935, 2147483648
        %v939 = vmul.f32 %v938, 1.442695
        %v940 = vpow.pop %v939
        %v941 = vadd.f32 %v940, 1.0
        %v942 = vrcp.pop %v941
        %v943 = vmul.f32 1.0, %v942
        %v944 = vtanh.pop %v935
        %946 = vrot.lane.b32.xlu0 %v944, 64
        %v947 = vpop.permute.xlu0 %946
        %v949 = vmul.f32 %v943, %v947
        %v950 = vtanh.pop %v949
        %952 = vrot.lane.b32.xlu0 %v950, 96
        %v953 = vpop.permute.xlu0 %952
        %v955 = vmul.f32 %v943, %v953
        %957 = vrot.lane.b32.xlu0 %v955, 32
        %v958 = vpop.permute.xlu0 %957
        %v959 = vsel %vm670, %v958, 0
        %961 = vmatprep.subr.mxu0 0.0
        %962 = vmatpush1.msra.mxu0 %v654
        %963 = vmatprep.subr.mxu0 0.0
        %964 = vmatpush1.msra.mxu0 %v655
        %965 = vmatprep.subr.mxu0 0.0
        %966 = vmatpush1.msra.mxu0 %v656
        %967 = vmatprep.subr.mxu0 0.0
        %968 = vmatpush1.msra.mxu0 %v657
        %969 = vmatprep.subr.mxu0 0.0
        %970 = vmatpush1.msra.mxu0 0.0
        %971 = vmatprep.subr.mxu0 0.0
        %972 = vmatpush1.msra.mxu0 0.0
        %973 = vmatprep.subr.mxu0 0.0
        %974 = vmatpush1.msra.mxu0 0.0
        %975 = vmatprep.subr.mxu0 0.0
        %976 = vmatpush1.msra.mxu0 0.0
        %977 = vmatprep.subr.mxu0 0.0
        %978 = vmatpush1.msra.mxu0 0.0
        %979 = vmatprep.subr.mxu0 0.0
        %980 = vmatpush1.msra.mxu0 0.0
        %981 = vmatprep.subr.mxu0 0.0
        %982 = vmatpush1.msra.mxu0 0.0
        %983 = vmatprep.subr.mxu0 0.0
        %984 = vmatpush1.msra.mxu0 0.0
        %985 = vmatprep.subr.mxu0 0.0
        %986 = vmatpush1.msra.mxu0 0.0
        %987 = vmatprep.subr.mxu0 0.0
        %988 = vmatpush1.msra.mxu0 0.0
        %989 = vmatprep.subr.mxu0 0.0
        %990 = vmatpush1.msra.mxu0 0.0
        %991 = vmatprep.subr.mxu0 0.0
        %992 = vmatpush1.msra.mxu0 0.0
        %993 = vmatprep.subr.mxu0 0.0
        %994 = vmatpush1.msra.mxu0 0.0
        %995 = vmatprep.subr.mxu0 0.0
        %996 = vmatpush1.msra.mxu0 0.0
        %997 = vmatprep.subr.mxu0 0.0
        %998 = vmatpush1.msra.mxu0 0.0
        %999 = vmatprep.subr.mxu0 0.0
        %1000 = vmatpush1.msra.mxu0 0.0
        %1001 = vmatprep.subr.mxu0 0.0
        %1002 = vmatpush1.msra.mxu0 0.0
        %1003 = vmatprep.subr.mxu0 0.0
        %1004 = vmatpush1.msra.mxu0 0.0
        %1005 = vmatprep.subr.mxu0 0.0
        %1006 = vmatpush1.msra.mxu0 0.0
        %1007 = vmatprep.subr.mxu0 0.0
        %1008 = vmatpush1.msra.mxu0 0.0
        %1009 = vmatprep.subr.mxu0 0.0
        %1010 = vmatpush1.msra.mxu0 0.0
        %1011 = vmatprep.subr.mxu0 0.0
        %1012 = vmatpush1.msra.mxu0 0.0
        %1013 = vmatprep.subr.mxu0 0.0
        %1014 = vmatpush1.msra.mxu0 0.0
        %1015 = vmatprep.subr.mxu0 0.0
        %1016 = vmatpush1.msra.mxu0 0.0
        %1017 = vmatprep.subr.mxu0 0.0
        %1018 = vmatpush1.msra.mxu0 0.0
        %1019 = vmatprep.subr.mxu0 0.0
        %1020 = vmatpush1.msra.mxu0 0.0
        %1021 = vmatprep.subr.mxu0 0.0
        %1022 = vmatpush1.msra.mxu0 0.0
        %1023 = vmatprep.subr.mxu0 0.0
        %1024 = vmatpush1.msra.mxu0 0.0
        %1025 = vmatprep.mubr.f32.mxu0 0.0
        %1026 = vmatmul.mubr.f32.gmra.mrb[0].mxu0 %v959
        %v1027 = vpop.f32.mrb[0].mxu0
        %v1028 = vadd.f32 %v660, %v1027
        %v1029 = vpop.f32.mrb[0].mxu0
        %1030 = vdwg.mxu0
        %vm1031 = vcmp.gt.f32.partialorder %v1028, 0.0
        %v1032 = vmul.f32 %v1028, 0.01
        %v1033 = vsel %vm1031, %v1028, %v1032
        %vm1034 = vcmask 253952
        %1035 = vst.msk [vmem:[%s649] sm:$0x1] %vm1034, %v1033
        %s1036 = sshra.s32 %s40, 7
        %s1037 = sand.u32 %s40, 127
        %s1038 = sadd.s32 %s1036, 1
        %s1039 = smul.u32 %s1038, 128
        %s1040 = sshra.s32 %s40, 7
        %s1041 = sand.u32 %s40, 127
        %s1042 = sadd.s32 %s1039, %s1041
        %s1043 = sld [smem:[#allocation3 + %s1042]]
        %s1044 = scalar_lea.vmem %s1, %s1043
        %v1045 = vld [vmem:[%s1044] sm:$0x1]
        %v1046 = vld [vmem:[%s7] sm:$0xff]
        %v1047 = vld [vmem:[%s7 + $0x8] sm:$0xff]
        %v1048 = vld [vmem:[%s7 + $0x10] sm:$0xff]
        %v1049 = vld [vmem:[%s7 + $0x18] sm:$0xff]
        %1050 = vmatprep.subr.mxu0 0.0
        %1051 = vmatpush1.msra.mxu0 %v650
        %1052 = vmatprep.subr.mxu0 0.0
        %1053 = vmatpush1.msra.mxu0 %v651
        %1054 = vmatprep.subr.mxu0 0.0
        %1055 = vmatpush1.msra.mxu0 %v652
        %1056 = vmatprep.subr.mxu0 0.0
        %1057 = vmatpush1.msra.mxu0 %v653
        %1058 = vmatprep.subr.mxu0 0.0
        %1059 = vmatpush1.msra.mxu0 0.0
        %1060 = vmatprep.subr.mxu0 0.0
        %1061 = vmatpush1.msra.mxu0 0.0
        %1062 = vmatprep.subr.mxu0 0.0
        %1063 = vmatpush1.msra.mxu0 0.0
        %1064 = vmatprep.subr.mxu0 0.0
        %1065 = vmatpush1.msra.mxu0 0.0
        %1066 = vmatprep.subr.mxu0 0.0
        %1067 = vmatpush1.msra.mxu0 0.0
        %1068 = vmatprep.subr.mxu0 0.0
        %1069 = vmatpush1.msra.mxu0 0.0
        %1070 = vmatprep.subr.mxu0 0.0
        %1071 = vmatpush1.msra.mxu0 0.0
        %1072 = vmatprep.subr.mxu0 0.0
        %1073 = vmatpush1.msra.mxu0 0.0
        %1074 = vmatprep.subr.mxu0 0.0
        %1075 = vmatpush1.msra.mxu0 0.0
        %1076 = vmatprep.subr.mxu0 0.0
        %1077 = vmatpush1.msra.mxu0 0.0
        %1078 = vmatprep.subr.mxu0 0.0
        %1079 = vmatpush1.msra.mxu0 0.0
        %1080 = vmatprep.subr.mxu0 0.0
        %1081 = vmatpush1.msra.mxu0 0.0
        %1082 = vmatprep.subr.mxu0 0.0
        %1083 = vmatpush1.msra.mxu0 0.0
        %1084 = vmatprep.subr.mxu0 0.0
        %1085 = vmatpush1.msra.mxu0 0.0
        %1086 = vmatprep.subr.mxu0 0.0
        %1087 = vmatpush1.msra.mxu0 0.0
        %1088 = vmatprep.subr.mxu0 0.0
        %1089 = vmatpush1.msra.mxu0 0.0
        %1090 = vmatprep.subr.mxu0 0.0
        %1091 = vmatpush1.msra.mxu0 0.0
        %1092 = vmatprep.subr.mxu0 0.0
        %1093 = vmatpush1.msra.mxu0 0.0
        %1094 = vmatprep.subr.mxu0 0.0
        %1095 = vmatpush1.msra.mxu0 0.0
        %1096 = vmatprep.subr.mxu0 0.0
        %1097 = vmatpush1.msra.mxu0 0.0
        %1098 = vmatprep.subr.mxu0 0.0
        %1099 = vmatpush1.msra.mxu0 0.0
        %1100 = vmatprep.subr.mxu0 0.0
        %1101 = vmatpush1.msra.mxu0 0.0
        %1102 = vmatprep.subr.mxu0 0.0
        %1103 = vmatpush1.msra.mxu0 0.0
        %1104 = vmatprep.subr.mxu0 0.0
        %1105 = vmatpush1.msra.mxu0 0.0
        %1106 = vmatprep.subr.mxu0 0.0
        %1107 = vmatpush1.msra.mxu0 0.0
        %1108 = vmatprep.subr.mxu0 0.0
        %1109 = vmatpush1.msra.mxu0 0.0
        %1110 = vmatprep.subr.mxu0 0.0
        %1111 = vmatpush1.msra.mxu0 0.0
        %1112 = vmatprep.subr.mxu0 0.0
        %1113 = vmatpush1.msra.mxu0 0.0
        %1114 = vmatprep.mubr.f32.mxu0 0.0
        %1115 = vmatmul.mubr.f32.gmra.mrb[0].mxu0 %v959
        %v1116 = vpop.f32.mrb[0].mxu0
        %v1117 = vadd.f32 0.0, %v1116
        %v1118 = vpop.f32.mrb[0].mxu0
        %1119 = vdwg.mxu0
        %v1121 = vsel %vm670, %v1045, 0
        %1123 = vmatprep.subr.mxu0 0.0
        %1124 = vmatpush1.msra.mxu0 %v1046
        %1125 = vmatprep.subr.mxu0 0.0
        %1126 = vmatpush1.msra.mxu0 %v1047
        %1127 = vmatprep.subr.mxu0 0.0
        %1128 = vmatpush1.msra.mxu0 %v1048
        %1129 = vmatprep.subr.mxu0 0.0
        %1130 = vmatpush1.msra.mxu0 %v1049
        %1131 = vmatprep.subr.mxu0 0.0
        %1132 = vmatpush1.msra.mxu0 0.0
        %1133 = vmatprep.subr.mxu0 0.0
        %1134 = vmatpush1.msra.mxu0 0.0
        %1135 = vmatprep.subr.mxu0 0.0
        %1136 = vmatpush1.msra.mxu0 0.0
        %1137 = vmatprep.subr.mxu0 0.0
        %1138 = vmatpush1.msra.mxu0 0.0
        %1139 = vmatprep.subr.mxu0 0.0
        %1140 = vmatpush1.msra.mxu0 0.0
        %1141 = vmatprep.subr.mxu0 0.0
        %1142 = vmatpush1.msra.mxu0 0.0
        %1143 = vmatprep.subr.mxu0 0.0
        %1144 = vmatpush1.msra.mxu0 0.0
        %1145 = vmatprep.subr.mxu0 0.0
        %1146 = vmatpush1.msra.mxu0 0.0
        %1147 = vmatprep.subr.mxu0 0.0
        %1148 = vmatpush1.msra.mxu0 0.0
        %1149 = vmatprep.subr.mxu0 0.0
        %1150 = vmatpush1.msra.mxu0 0.0
        %1151 = vmatprep.subr.mxu0 0.0
        %1152 = vmatpush1.msra.mxu0 0.0
        %1153 = vmatprep.subr.mxu0 0.0
        %1154 = vmatpush1.msra.mxu0 0.0
        %1155 = vmatprep.subr.mxu0 0.0
        %1156 = vmatpush1.msra.mxu0 0.0
        %1157 = vmatprep.subr.mxu0 0.0
        %1158 = vmatpush1.msra.mxu0 0.0
        %1159 = vmatprep.subr.mxu0 0.0
        %1160 = vmatpush1.msra.mxu0 0.0
        %1161 = vmatprep.subr.mxu0 0.0
        %1162 = vmatpush1.msra.mxu0 0.0
        %1163 = vmatprep.subr.mxu0 0.0
        %1164 = vmatpush1.msra.mxu0 0.0
        %1165 = vmatprep.subr.mxu0 0.0
        %1166 = vmatpush1.msra.mxu0 0.0
        %1167 = vmatprep.subr.mxu0 0.0
        %1168 = vmatpush1.msra.mxu0 0.0
        %1169 = vmatprep.subr.mxu0 0.0
        %1170 = vmatpush1.msra.mxu0 0.0
        %1171 = vmatprep.subr.mxu0 0.0
        %1172 = vmatpush1.msra.mxu0 0.0
        %1173 = vmatprep.subr.mxu0 0.0
        %1174 = vmatpush1.msra.mxu0 0.0
        %1175 = vmatprep.subr.mxu0 0.0
        %1176 = vmatpush1.msra.mxu0 0.0
        %1177 = vmatprep.subr.mxu0 0.0
        %1178 = vmatpush1.msra.mxu0 0.0
        %1179 = vmatprep.subr.mxu0 0.0
        %1180 = vmatpush1.msra.mxu0 0.0
        %1181 = vmatprep.subr.mxu0 0.0
        %1182 = vmatpush1.msra.mxu0 0.0
        %1183 = vmatprep.subr.mxu0 0.0
        %1184 = vmatpush1.msra.mxu0 0.0
        %1185 = vmatprep.subr.mxu0 0.0
        %1186 = vmatpush1.msra.mxu0 0.0
        %1187 = vmatprep.mubr.f32.mxu0 0.0
        %1188 = vmatmul.mubr.f32.gmra.mrb[0].mxu0 %v1121
        %v1189 = vpop.f32.mrb[0].mxu0
        %v1190 = vadd.f32 %v1117, %v1189
        %v1191 = vpop.f32.mrb[0].mxu0
        %1192 = vdwg.mxu0
        %v1193 = vld [vmem:[%s8] sm:$0xff]
        %v1194 = vld [vmem:[%s8 + $0x8] sm:$0xff]
        %v1195 = vld [vmem:[%s8 + $0x10] sm:$0xff]
        %v1196 = vld [vmem:[%s8 + $0x18] sm:$0xff]
        %1197 = vmatprep.subr.mxu0 0.0
        %1198 = vmatpush1.msra.mxu0 %v1193
        %1199 = vmatprep.subr.mxu0 0.0
        %1200 = vmatpush1.msra.mxu0 %v1194
        %1201 = vmatprep.subr.mxu0 0.0
        %1202 = vmatpush1.msra.mxu0 %v1195
        %1203 = vmatprep.subr.mxu0 0.0
        %1204 = vmatpush1.msra.mxu0 %v1196
        %1205 = vmatprep.subr.mxu0 0.0
        %1206 = vmatpush1.msra.mxu0 0.0
        %1207 = vmatprep.subr.mxu0 0.0
        %1208 = vmatpush1.msra.mxu0 0.0
        %1209 = vmatprep.subr.mxu0 0.0
        %1210 = vmatpush1.msra.mxu0 0.0
        %1211 = vmatprep.subr.mxu0 0.0
        %1212 = vmatpush1.msra.mxu0 0.0
        %1213 = vmatprep.subr.mxu0 0.0
        %1214 = vmatpush1.msra.mxu0 0.0
        %1215 = vmatprep.subr.mxu0 0.0
        %1216 = vmatpush1.msra.mxu0 0.0
        %1217 = vmatprep.subr.mxu0 0.0
        %1218 = vmatpush1.msra.mxu0 0.0
        %1219 = vmatprep.subr.mxu0 0.0
        %1220 = vmatpush1.msra.mxu0 0.0
        %1221 = vmatprep.subr.mxu0 0.0
        %1222 = vmatpush1.msra.mxu0 0.0
        %1223 = vmatprep.subr.mxu0 0.0
        %1224 = vmatpush1.msra.mxu0 0.0
        %1225 = vmatprep.subr.mxu0 0.0
        %1226 = vmatpush1.msra.mxu0 0.0
        %1227 = vmatprep.subr.mxu0 0.0
        %1228 = vmatpush1.msra.mxu0 0.0
        %1229 = vmatprep.subr.mxu0 0.0
        %1230 = vmatpush1.msra.mxu0 0.0
        %1231 = vmatprep.subr.mxu0 0.0
        %1232 = vmatpush1.msra.mxu0 0.0
        %1233 = vmatprep.subr.mxu0 0.0
        %1234 = vmatpush1.msra.mxu0 0.0
        %1235 = vmatprep.subr.mxu0 0.0
        %1236 = vmatpush1.msra.mxu0 0.0
        %1237 = vmatprep.subr.mxu0 0.0
        %1238 = vmatpush1.msra.mxu0 0.0
        %1239 = vmatprep.subr.mxu0 0.0
        %1240 = vmatpush1.msra.mxu0 0.0
        %1241 = vmatprep.subr.mxu0 0.0
        %1242 = vmatpush1.msra.mxu0 0.0
        %1243 = vmatprep.subr.mxu0 0.0
        %1244 = vmatpush1.msra.mxu0 0.0
        %1245 = vmatprep.subr.mxu0 0.0
        %1246 = vmatpush1.msra.mxu0 0.0
        %1247 = vmatprep.subr.mxu0 0.0
        %1248 = vmatpush1.msra.mxu0 0.0
        %1249 = vmatprep.subr.mxu0 0.0
        %1250 = vmatpush1.msra.mxu0 0.0
        %1251 = vmatprep.subr.mxu0 0.0
        %1252 = vmatpush1.msra.mxu0 0.0
        %1253 = vmatprep.subr.mxu0 0.0
        %1254 = vmatpush1.msra.mxu0 0.0
        %1255 = vmatprep.subr.mxu0 0.0
        %1256 = vmatpush1.msra.mxu0 0.0
        %1257 = vmatprep.subr.mxu0 0.0
        %1258 = vmatpush1.msra.mxu0 0.0
        %1259 = vmatprep.subr.mxu0 0.0
        %1260 = vmatpush1.msra.mxu0 0.0
        %1261 = vmatprep.mubr.f32.mxu0 0.0
        %1262 = vmatmul.mubr.f32.gmra.mrb[0].mxu0 %v769
        %v1263 = vpop.f32.mrb[0].mxu0
        %v1264 = vadd.f32 0.0, %v1263
        %v1265 = vpop.f32.mrb[0].mxu0
        %1266 = vdwg.mxu0
        %v1267 = vadd.f32 %v1190, %v1264
        %v1268 = vadd.f32 %v1267, %v658
        %v1269 = vxor.u32 %v1268, 2147483648
        %v1270 = vmul.f32 %v1269, 1.442695
        %v1271 = vpow.pop %v1270
        %v1272 = vadd.f32 %v1271, 1.0
        %v1273 = vrcp.pop %v1272
        %v1274 = vmul.f32 1.0, %v1273
        %v1275 = vtanh.pop %v1268
        %1277 = vrot.lane.b32.xlu0 %v1275, 64
        %v1278 = vpop.permute.xlu0 %1277
        %v1280 = vmul.f32 %v1274, %v1278
        %1282 = vrot.lane.b32.xlu0 %v755, 32
        %v1283 = vpop.permute.xlu0 %1282
        %v1285 = vmul.f32 %v1274, %v1283
        %1287 = vrot.lane.b32.xlu0 %v1285, 96
        %v1288 = vpop.permute.xlu0 %1287
        %v1290 = vadd.f32 %v1280, %v1288
        %v1291 = vtanh.pop %v1290
        %1293 = vrot.lane.b32.xlu0 %v1291, 96
        %v1294 = vpop.permute.xlu0 %1293
        %v1296 = vmul.f32 %v1274, %v1294
        %v1297 = vld [vmem:[#allocation9] sm:$0xff]
        %v1298 = vld [vmem:[#allocation9 + $0x8] sm:$0xff]
        %v1299 = vld [vmem:[#allocation9 + $0x10] sm:$0xff]
        %v1300 = vld [vmem:[#allocation9 + $0x18] sm:$0xff]
        %1302 = vrot.lane.b32.xlu0 %v1296, 32
        %v1303 = vpop.permute.xlu0 %1302
        %v1304 = vsel %vm670, %v1303, 0
        %1306 = vmatprep.subr.mxu0 0.0
        %1307 = vmatpush1.msra.mxu0 %v1297
        %1308 = vmatprep.subr.mxu0 0.0
        %1309 = vmatpush1.msra.mxu0 %v1298
        %1310 = vmatprep.subr.mxu0 0.0
        %1311 = vmatpush1.msra.mxu0 %v1299
        %1312 = vmatprep.subr.mxu0 0.0
        %1313 = vmatpush1.msra.mxu0 %v1300
        %1314 = vmatprep.subr.mxu0 0.0
        %1315 = vmatpush1.msra.mxu0 0.0
        %1316 = vmatprep.subr.mxu0 0.0
        %1317 = vmatpush1.msra.mxu0 0.0
        %1318 = vmatprep.subr.mxu0 0.0
        %1319 = vmatpush1.msra.mxu0 0.0
        %1320 = vmatprep.subr.mxu0 0.0
        %1321 = vmatpush1.msra.mxu0 0.0
        %1322 = vmatprep.subr.mxu0 0.0
        %1323 = vmatpush1.msra.mxu0 0.0
        %1324 = vmatprep.subr.mxu0 0.0
        %1325 = vmatpush1.msra.mxu0 0.0
        %1326 = vmatprep.subr.mxu0 0.0
        %1327 = vmatpush1.msra.mxu0 0.0
        %1328 = vmatprep.subr.mxu0 0.0
        %1329 = vmatpush1.msra.mxu0 0.0
        %1330 = vmatprep.subr.mxu0 0.0
        %1331 = vmatpush1.msra.mxu0 0.0
        %1332 = vmatprep.subr.mxu0 0.0
        %1333 = vmatpush1.msra.mxu0 0.0
        %1334 = vmatprep.subr.mxu0 0.0
        %1335 = vmatpush1.msra.mxu0 0.0
        %1336 = vmatprep.subr.mxu0 0.0
        %1337 = vmatpush1.msra.mxu0 0.0
        %1338 = vmatprep.subr.mxu0 0.0
        %1339 = vmatpush1.msra.mxu0 0.0
        %1340 = vmatprep.subr.mxu0 0.0
        %1341 = vmatpush1.msra.mxu0 0.0
        %1342 = vmatprep.subr.mxu0 0.0
        %1343 = vmatpush1.msra.mxu0 0.0
        %1344 = vmatprep.subr.mxu0 0.0
        %1345 = vmatpush1.msra.mxu0 0.0
        %1346 = vmatprep.subr.mxu0 0.0
        %1347 = vmatpush1.msra.mxu0 0.0
        %1348 = vmatprep.subr.mxu0 0.0
        %1349 = vmatpush1.msra.mxu0 0.0
        %1350 = vmatprep.subr.mxu0 0.0
        %1351 = vmatpush1.msra.mxu0 0.0
        %1352 = vmatprep.subr.mxu0 0.0
        %1353 = vmatpush1.msra.mxu0 0.0
        %1354 = vmatprep.subr.mxu0 0.0
        %1355 = vmatpush1.msra.mxu0 0.0
        %1356 = vmatprep.subr.mxu0 0.0
        %1357 = vmatpush1.msra.mxu0 0.0
        %1358 = vmatprep.subr.mxu0 0.0
        %1359 = vmatpush1.msra.mxu0 0.0
        %1360 = vmatprep.subr.mxu0 0.0
        %1361 = vmatpush1.msra.mxu0 0.0
        %1362 = vmatprep.subr.mxu0 0.0
        %1363 = vmatpush1.msra.mxu0 0.0
        %1364 = vmatprep.subr.mxu0 0.0
        %1365 = vmatpush1.msra.mxu0 0.0
        %1366 = vmatprep.subr.mxu0 0.0
        %1367 = vmatpush1.msra.mxu0 0.0
        %1368 = vmatprep.subr.mxu0 0.0
        %1369 = vmatpush1.msra.mxu0 0.0
        %1370 = vmatprep.mubr.f32.mxu0 0.0
        %1371 = vmatmul.mubr.f32.gmra.mrb[0].mxu0 %v1304
        %v1372 = vpop.f32.mrb[0].mxu0
        %v1373 = vadd.f32 %v661, %v1372
        %v1374 = vpop.f32.mrb[0].mxu0
        %1375 = vdwg.mxu0
        %v1376 = vld [vmem:[#allocation11] sm:$0xff]
        %v1377 = vld [vmem:[#allocation11 + $0x8] sm:$0xff]
        %v1378 = vld [vmem:[#allocation11 + $0x10] sm:$0xff]
        %v1379 = vld [vmem:[#allocation11 + $0x18] sm:$0xff]
        %1380 = vmatprep.subr.mxu0 0.0
        %1381 = vmatpush1.msra.mxu0 %v1376
        %1382 = vmatprep.subr.mxu0 0.0
        %1383 = vmatpush1.msra.mxu0 %v1377
        %1384 = vmatprep.subr.mxu0 0.0
        %1385 = vmatpush1.msra.mxu0 %v1378
        %1386 = vmatprep.subr.mxu0 0.0
        %1387 = vmatpush1.msra.mxu0 %v1379
        %1388 = vmatprep.subr.mxu0 0.0
        %1389 = vmatpush1.msra.mxu0 0.0
        %1390 = vmatprep.subr.mxu0 0.0
        %1391 = vmatpush1.msra.mxu0 0.0
        %1392 = vmatprep.subr.mxu0 0.0
        %1393 = vmatpush1.msra.mxu0 0.0
        %1394 = vmatprep.subr.mxu0 0.0
        %1395 = vmatpush1.msra.mxu0 0.0
        %1396 = vmatprep.subr.mxu0 0.0
        %1397 = vmatpush1.msra.mxu0 0.0
        %1398 = vmatprep.subr.mxu0 0.0
        %1399 = vmatpush1.msra.mxu0 0.0
        %1400 = vmatprep.subr.mxu0 0.0
        %1401 = vmatpush1.msra.mxu0 0.0
        %1402 = vmatprep.subr.mxu0 0.0
        %1403 = vmatpush1.msra.mxu0 0.0
        %1404 = vmatprep.subr.mxu0 0.0
        %1405 = vmatpush1.msra.mxu0 0.0
        %1406 = vmatprep.subr.mxu0 0.0
        %1407 = vmatpush1.msra.mxu0 0.0
        %1408 = vmatprep.subr.mxu0 0.0
        %1409 = vmatpush1.msra.mxu0 0.0
        %1410 = vmatprep.subr.mxu0 0.0
        %1411 = vmatpush1.msra.mxu0 0.0
        %1412 = vmatprep.subr.mxu0 0.0
        %1413 = vmatpush1.msra.mxu0 0.0
        %1414 = vmatprep.subr.mxu0 0.0
        %1415 = vmatpush1.msra.mxu0 0.0
        %1416 = vmatprep.subr.mxu0 0.0
        %1417 = vmatpush1.msra.mxu0 0.0
        %1418 = vmatprep.subr.mxu0 0.0
        %1419 = vmatpush1.msra.mxu0 0.0
        %1420 = vmatprep.subr.mxu0 0.0
        %1421 = vmatpush1.msra.mxu0 0.0
        %1422 = vmatprep.subr.mxu0 0.0
        %1423 = vmatpush1.msra.mxu0 0.0
        %1424 = vmatprep.subr.mxu0 0.0
        %1425 = vmatpush1.msra.mxu0 0.0
        %1426 = vmatprep.subr.mxu0 0.0
        %1427 = vmatpush1.msra.mxu0 0.0
        %1428 = vmatprep.subr.mxu0 0.0
        %1429 = vmatpush1.msra.mxu0 0.0
        %1430 = vmatprep.subr.mxu0 0.0
        %1431 = vmatpush1.msra.mxu0 0.0
        %1432 = vmatprep.subr.mxu0 0.0
        %1433 = vmatpush1.msra.mxu0 0.0
        %1434 = vmatprep.subr.mxu0 0.0
        %1435 = vmatpush1.msra.mxu0 0.0
        %1436 = vmatprep.subr.mxu0 0.0
        %1437 = vmatpush1.msra.mxu0 0.0
        %1438 = vmatprep.subr.mxu0 0.0
        %1439 = vmatpush1.msra.mxu0 0.0
        %1440 = vmatprep.subr.mxu0 0.0
        %1441 = vmatpush1.msra.mxu0 0.0
        %1442 = vmatprep.subr.mxu0 0.0
        %1443 = vmatpush1.msra.mxu0 0.0
        %1444 = vmatprep.mubr.f32.mxu0 0.0
        %1445 = vmatmul.mubr.f32.gmra.mrb[0].mxu0 %v866
        %v1446 = vpop.f32.mrb[0].mxu0
        %v1447 = vadd.f32 0.0, %v1446
        %v1448 = vpop.f32.mrb[0].mxu0
        %1449 = vdwg.mxu0
        %v1450 = vadd.f32 %v1373, %v1447
        %v1451 = vxor.u32 %v1450, 2147483648
        %v1452 = vmul.f32 %v1451, 1.442695
        %v1453 = vpow.pop %v1452
        %v1454 = vadd.f32 %v1453, 1.0
        %v1455 = vrcp.pop %v1454
        %v1456 = vmul.f32 1.0, %v1455
        %v1457 = vtanh.pop %v1450
        %1459 = vrot.lane.b32.xlu0 %v1457, 64
        %v1460 = vpop.permute.xlu0 %1459
        %v1462 = vmul.f32 %v1456, %v1460
        %1464 = vrot.lane.b32.xlu0 %v852, 32
        %v1465 = vpop.permute.xlu0 %1464
        %v1467 = vmul.f32 %v1456, %v1465
        %1469 = vrot.lane.b32.xlu0 %v1467, 96
        %v1470 = vpop.permute.xlu0 %1469
        %v1472 = vadd.f32 %v1462, %v1470
        %v1473 = vtanh.pop %v1472
        %1475 = vrot.lane.b32.xlu0 %v1473, 96
        %v1476 = vpop.permute.xlu0 %1475
        %v1478 = vmul.f32 %v1456, %v1476
        %v1479 = vld [vmem:[#allocation12] sm:$0xff]
        %v1480 = vld [vmem:[#allocation12 + $0x8] sm:$0xff]
        %v1481 = vld [vmem:[#allocation12 + $0x10] sm:$0xff]
        %v1482 = vld [vmem:[#allocation12 + $0x18] sm:$0xff]
        %1484 = vrot.lane.b32.xlu0 %v1478, 32
        %v1485 = vpop.permute.xlu0 %1484
        %v1486 = vsel %vm670, %v1485, 0
        %1488 = vmatprep.subr.mxu0 0.0
        %1489 = vmatpush1.msra.mxu0 %v1479
        %1490 = vmatprep.subr.mxu0 0.0
        %1491 = vmatpush1.msra.mxu0 %v1480
        %1492 = vmatprep.subr.mxu0 0.0
        %1493 = vmatpush1.msra.mxu0 %v1481
        %1494 = vmatprep.subr.mxu0 0.0
        %1495 = vmatpush1.msra.mxu0 %v1482
        %1496 = vmatprep.subr.mxu0 0.0
        %1497 = vmatpush1.msra.mxu0 0.0
        %1498 = vmatprep.subr.mxu0 0.0
        %1499 = vmatpush1.msra.mxu0 0.0
        %1500 = vmatprep.subr.mxu0 0.0
        %1501 = vmatpush1.msra.mxu0 0.0
        %1502 = vmatprep.subr.mxu0 0.0
        %1503 = vmatpush1.msra.mxu0 0.0
        %1504 = vmatprep.subr.mxu0 0.0
        %1505 = vmatpush1.msra.mxu0 0.0
        %1506 = vmatprep.subr.mxu0 0.0
        %1507 = vmatpush1.msra.mxu0 0.0
        %1508 = vmatprep.subr.mxu0 0.0
        %1509 = vmatpush1.msra.mxu0 0.0
        %1510 = vmatprep.subr.mxu0 0.0
        %1511 = vmatpush1.msra.mxu0 0.0
        %1512 = vmatprep.subr.mxu0 0.0
        %1513 = vmatpush1.msra.mxu0 0.0
        %1514 = vmatprep.subr.mxu0 0.0
        %1515 = vmatpush1.msra.mxu0 0.0
        %1516 = vmatprep.subr.mxu0 0.0
        %1517 = vmatpush1.msra.mxu0 0.0
        %1518 = vmatprep.subr.mxu0 0.0
        %1519 = vmatpush1.msra.mxu0 0.0
        %1520 = vmatprep.subr.mxu0 0.0
        %1521 = vmatpush1.msra.mxu0 0.0
        %1522 = vmatprep.subr.mxu0 0.0
        %1523 = vmatpush1.msra.mxu0 0.0
        %1524 = vmatprep.subr.mxu0 0.0
        %1525 = vmatpush1.msra.mxu0 0.0
        %1526 = vmatprep.subr.mxu0 0.0
        %1527 = vmatpush1.msra.mxu0 0.0
        %1528 = vmatprep.subr.mxu0 0.0
        %1529 = vmatpush1.msra.mxu0 0.0
        %1530 = vmatprep.subr.mxu0 0.0
        %1531 = vmatpush1.msra.mxu0 0.0
        %1532 = vmatprep.subr.mxu0 0.0
        %1533 = vmatpush1.msra.mxu0 0.0
        %1534 = vmatprep.subr.mxu0 0.0
        %1535 = vmatpush1.msra.mxu0 0.0
        %1536 = vmatprep.subr.mxu0 0.0
        %1537 = vmatpush1.msra.mxu0 0.0
        %1538 = vmatprep.subr.mxu0 0.0
        %1539 = vmatpush1.msra.mxu0 0.0
        %1540 = vmatprep.subr.mxu0 0.0
        %1541 = vmatpush1.msra.mxu0 0.0
        %1542 = vmatprep.subr.mxu0 0.0
        %1543 = vmatpush1.msra.mxu0 0.0
        %1544 = vmatprep.subr.mxu0 0.0
        %1545 = vmatpush1.msra.mxu0 0.0
        %1546 = vmatprep.subr.mxu0 0.0
        %1547 = vmatpush1.msra.mxu0 0.0
        %1548 = vmatprep.subr.mxu0 0.0
        %1549 = vmatpush1.msra.mxu0 0.0
        %1550 = vmatprep.subr.mxu0 0.0
        %1551 = vmatpush1.msra.mxu0 0.0
        %1552 = vmatprep.mubr.f32.mxu0 0.0
        %1553 = vmatmul.mubr.f32.gmra.mrb[0].mxu0 %v1486
        %v1554 = vpop.f32.mrb[0].mxu0
        %v1555 = vadd.f32 %v662, %v1554
        %v1556 = vpop.f32.mrb[0].mxu0
        %1557 = vdwg.mxu0
        %v1558 = vld [vmem:[#allocation14] sm:$0xff]
        %v1559 = vld [vmem:[#allocation14 + $0x8] sm:$0xff]
        %v1560 = vld [vmem:[#allocation14 + $0x10] sm:$0xff]
        %v1561 = vld [vmem:[#allocation14 + $0x18] sm:$0xff]
        %1562 = vmatprep.subr.mxu0 0.0
        %1563 = vmatpush1.msra.mxu0 %v1558
        %1564 = vmatprep.subr.mxu0 0.0
        %1565 = vmatpush1.msra.mxu0 %v1559
        %1566 = vmatprep.subr.mxu0 0.0
        %1567 = vmatpush1.msra.mxu0 %v1560
        %1568 = vmatprep.subr.mxu0 0.0
        %1569 = vmatpush1.msra.mxu0 %v1561
        %1570 = vmatprep.subr.mxu0 0.0
        %1571 = vmatpush1.msra.mxu0 0.0
        %1572 = vmatprep.subr.mxu0 0.0
        %1573 = vmatpush1.msra.mxu0 0.0
        %1574 = vmatprep.subr.mxu0 0.0
        %1575 = vmatpush1.msra.mxu0 0.0
        %1576 = vmatprep.subr.mxu0 0.0
        %1577 = vmatpush1.msra.mxu0 0.0
        %1578 = vmatprep.subr.mxu0 0.0
        %1579 = vmatpush1.msra.mxu0 0.0
        %1580 = vmatprep.subr.mxu0 0.0
        %1581 = vmatpush1.msra.mxu0 0.0
        %1582 = vmatprep.subr.mxu0 0.0
        %1583 = vmatpush1.msra.mxu0 0.0
        %1584 = vmatprep.subr.mxu0 0.0
        %1585 = vmatpush1.msra.mxu0 0.0
        %1586 = vmatprep.subr.mxu0 0.0
        %1587 = vmatpush1.msra.mxu0 0.0
        %1588 = vmatprep.subr.mxu0 0.0
        %1589 = vmatpush1.msra.mxu0 0.0
        %1590 = vmatprep.subr.mxu0 0.0
        %1591 = vmatpush1.msra.mxu0 0.0
        %1592 = vmatprep.subr.mxu0 0.0
        %1593 = vmatpush1.msra.mxu0 0.0
        %1594 = vmatprep.subr.mxu0 0.0
        %1595 = vmatpush1.msra.mxu0 0.0
        %1596 = vmatprep.subr.mxu0 0.0
        %1597 = vmatpush1.msra.mxu0 0.0
        %1598 = vmatprep.subr.mxu0 0.0
        %1599 = vmatpush1.msra.mxu0 0.0
        %1600 = vmatprep.subr.mxu0 0.0
        %1601 = vmatpush1.msra.mxu0 0.0
        %1602 = vmatprep.subr.mxu0 0.0
        %1603 = vmatpush1.msra.mxu0 0.0
        %1604 = vmatprep.subr.mxu0 0.0
        %1605 = vmatpush1.msra.mxu0 0.0
        %1606 = vmatprep.subr.mxu0 0.0
        %1607 = vmatpush1.msra.mxu0 0.0
        %1608 = vmatprep.subr.mxu0 0.0
        %1609 = vmatpush1.msra.mxu0 0.0
        %1610 = vmatprep.subr.mxu0 0.0
        %1611 = vmatpush1.msra.mxu0 0.0
        %1612 = vmatprep.subr.mxu0 0.0
        %1613 = vmatpush1.msra.mxu0 0.0
        %1614 = vmatprep.subr.mxu0 0.0
        %1615 = vmatpush1.msra.mxu0 0.0
        %1616 = vmatprep.subr.mxu0 0.0
        %1617 = vmatpush1.msra.mxu0 0.0
        %1618 = vmatprep.subr.mxu0 0.0
        %1619 = vmatpush1.msra.mxu0 0.0
        %1620 = vmatprep.subr.mxu0 0.0
        %1621 = vmatpush1.msra.mxu0 0.0
        %1622 = vmatprep.subr.mxu0 0.0
        %1623 = vmatpush1.msra.mxu0 0.0
        %1624 = vmatprep.subr.mxu0 0.0
        %1625 = vmatpush1.msra.mxu0 0.0
        %1626 = vmatprep.mubr.f32.mxu0 0.0
        %1627 = vmatmul.mubr.f32.gmra.mrb[0].mxu0 %v959
        %v1628 = vpop.f32.mrb[0].mxu0
        %v1629 = vadd.f32 0.0, %v1628
        %v1630 = vpop.f32.mrb[0].mxu0
        %1631 = vdwg.mxu0
        %v1632 = vadd.f32 %v1555, %v1629
        %v1633 = vxor.u32 %v1632, 2147483648
        %v1634 = vmul.f32 %v1633, 1.442695
        %v1635 = vpow.pop %v1634
        %v1636 = vadd.f32 %v1635, 1.0
        %v1637 = vrcp.pop %v1636
        %v1638 = vmul.f32 1.0, %v1637
        %v1639 = vtanh.pop %v1632
        %1641 = vrot.lane.b32.xlu0 %v1639, 64
        %v1642 = vpop.permute.xlu0 %1641
        %v1644 = vmul.f32 %v1638, %v1642
        %1646 = vrot.lane.b32.xlu0 %v949, 32
        %v1647 = vpop.permute.xlu0 %1646
        %v1649 = vmul.f32 %v1638, %v1647
        %1651 = vrot.lane.b32.xlu0 %v1649, 96
        %v1652 = vpop.permute.xlu0 %1651
        %v1654 = vadd.f32 %v1644, %v1652
        %v1655 = vtanh.pop %v1654
        %1657 = vrot.lane.b32.xlu0 %v1655, 96
        %v1658 = vpop.permute.xlu0 %1657
        %v1660 = vmul.f32 %v1638, %v1658
        %1662 = vrot.lane.b32.xlu0 %v1660, 32
        %v1663 = vpop.permute.xlu0 %1662
        %v1664 = vsel %vm670, %v1663, 0
        %1666 = vmatprep.subr.mxu0 0.0
        %1667 = vmatpush1.msra.mxu0 %v654
        %1668 = vmatprep.subr.mxu0 0.0
        %1669 = vmatpush1.msra.mxu0 %v655
        %1670 = vmatprep.subr.mxu0 0.0
        %1671 = vmatpush1.msra.mxu0 %v656
        %1672 = vmatprep.subr.mxu0 0.0
        %1673 = vmatpush1.msra.mxu0 %v657
        %1674 = vmatprep.subr.mxu0 0.0
        %1675 = vmatpush1.msra.mxu0 0.0
        %1676 = vmatprep.subr.mxu0 0.0
        %1677 = vmatpush1.msra.mxu0 0.0
        %1678 = vmatprep.subr.mxu0 0.0
        %1679 = vmatpush1.msra.mxu0 0.0
        %1680 = vmatprep.subr.mxu0 0.0
        %1681 = vmatpush1.msra.mxu0 0.0
        %1682 = vmatprep.subr.mxu0 0.0
        %1683 = vmatpush1.msra.mxu0 0.0
        %1684 = vmatprep.subr.mxu0 0.0
        %1685 = vmatpush1.msra.mxu0 0.0
        %1686 = vmatprep.subr.mxu0 0.0
        %1687 = vmatpush1.msra.mxu0 0.0
        %1688 = vmatprep.subr.mxu0 0.0
        %1689 = vmatpush1.msra.mxu0 0.0
        %1690 = vmatprep.subr.mxu0 0.0
        %1691 = vmatpush1.msra.mxu0 0.0
        %1692 = vmatprep.subr.mxu0 0.0
        %1693 = vmatpush1.msra.mxu0 0.0
        %1694 = vmatprep.subr.mxu0 0.0
        %1695 = vmatpush1.msra.mxu0 0.0
        %1696 = vmatprep.subr.mxu0 0.0
        %1697 = vmatpush1.msra.mxu0 0.0
        %1698 = vmatprep.subr.mxu0 0.0
        %1699 = vmatpush1.msra.mxu0 0.0
        %1700 = vmatprep.subr.mxu0 0.0
        %1701 = vmatpush1.msra.mxu0 0.0
        %1702 = vmatprep.subr.mxu0 0.0
        %1703 = vmatpush1.msra.mxu0 0.0
        %1704 = vmatprep.subr.mxu0 0.0
        %1705 = vmatpush1.msra.mxu0 0.0
        %1706 = vmatprep.subr.mxu0 0.0
        %1707 = vmatpush1.msra.mxu0 0.0
        %1708 = vmatprep.subr.mxu0 0.0
        %1709 = vmatpush1.msra.mxu0 0.0
        %1710 = vmatprep.subr.mxu0 0.0
        %1711 = vmatpush1.msra.mxu0 0.0
        %1712 = vmatprep.subr.mxu0 0.0
        %1713 = vmatpush1.msra.mxu0 0.0
        %1714 = vmatprep.subr.mxu0 0.0
        %1715 = vmatpush1.msra.mxu0 0.0
        %1716 = vmatprep.subr.mxu0 0.0
        %1717 = vmatpush1.msra.mxu0 0.0
        %1718 = vmatprep.subr.mxu0 0.0
        %1719 = vmatpush1.msra.mxu0 0.0
        %1720 = vmatprep.subr.mxu0 0.0
        %1721 = vmatpush1.msra.mxu0 0.0
        %1722 = vmatprep.subr.mxu0 0.0
        %1723 = vmatpush1.msra.mxu0 0.0
        %1724 = vmatprep.subr.mxu0 0.0
        %1725 = vmatpush1.msra.mxu0 0.0
        %1726 = vmatprep.subr.mxu0 0.0
        %1727 = vmatpush1.msra.mxu0 0.0
        %1728 = vmatprep.subr.mxu0 0.0
        %1729 = vmatpush1.msra.mxu0 0.0
        %1730 = vmatprep.mubr.f32.mxu0 0.0
        %1731 = vmatmul.mubr.f32.gmra.mrb[0].mxu0 %v1664
        %v1732 = vpop.f32.mrb[0].mxu0
        %v1733 = vadd.f32 %v660, %v1732
        %v1734 = vpop.f32.mrb[0].mxu0
        %1735 = vdwg.mxu0
        %vm1736 = vcmp.gt.f32.partialorder %v1733, 0.0
        %v1737 = vmul.f32 %v1733, 0.01
        %v1738 = vsel %vm1736, %v1733, %v1737
        %1739 = vst.msk [vmem:[%s649 + $0x1] sm:$0x1] %vm1034, %v1738
        %s1740 = sadd.s32 %s1036, 2
        %s1741 = smul.u32 %s1740, 128
        %s1742 = sadd.s32 %s1741, %s1041
        %s1743 = sld [smem:[#allocation3 + %s1742]]
        %s1744 = scalar_lea.vmem %s1, %s1743
        %v1745 = vld [vmem:[%s1744] sm:$0x1]
        %v1746 = vld [vmem:[%s7] sm:$0xff]
        %v1747 = vld [vmem:[%s7 + $0x8] sm:$0xff]
        %v1748 = vld [vmem:[%s7 + $0x10] sm:$0xff]
        %v1749 = vld [vmem:[%s7 + $0x18] sm:$0xff]
        %1750 = vmatprep.subr.mxu0 0.0
        %1751 = vmatpush1.msra.mxu0 %v650
        %1752 = vmatprep.subr.mxu0 0.0
        %1753 = vmatpush1.msra.mxu0 %v651
        %1754 = vmatprep.subr.mxu0 0.0
        %1755 = vmatpush1.msra.mxu0 %v652
        %1756 = vmatprep.subr.mxu0 0.0
        %1757 = vmatpush1.msra.mxu0 %v653
        %1758 = vmatprep.subr.mxu0 0.0
        %1759 = vmatpush1.msra.mxu0 0.0
        %1760 = vmatprep.subr.mxu0 0.0
        %1761 = vmatpush1.msra.mxu0 0.0
        %1762 = vmatprep.subr.mxu0 0.0
        %1763 = vmatpush1.msra.mxu0 0.0
        %1764 = vmatprep.subr.mxu0 0.0
        %1765 = vmatpush1.msra.mxu0 0.0
        %1766 = vmatprep.subr.mxu0 0.0
        %1767 = vmatpush1.msra.mxu0 0.0
        %1768 = vmatprep.subr.mxu0 0.0
        %1769 = vmatpush1.msra.mxu0 0.0
        %1770 = vmatprep.subr.mxu0 0.0
        %1771 = vmatpush1.msra.mxu0 0.0
        %1772 = vmatprep.subr.mxu0 0.0
        %1773 = vmatpush1.msra.mxu0 0.0
        %1774 = vmatprep.subr.mxu0 0.0
        %1775 = vmatpush1.msra.mxu0 0.0
        %1776 = vmatprep.subr.mxu0 0.0
        %1777 = vmatpush1.msra.mxu0 0.0
        %1778 = vmatprep.subr.mxu0 0.0
        %1779 = vmatpush1.msra.mxu0 0.0
        %1780 = vmatprep.subr.mxu0 0.0
        %1781 = vmatpush1.msra.mxu0 0.0
        %1782 = vmatprep.subr.mxu0 0.0
        %1783 = vmatpush1.msra.mxu0 0.0
        %1784 = vmatprep.subr.mxu0 0.0
        %1785 = vmatpush1.msra.mxu0 0.0
        %1786 = vmatprep.subr.mxu0 0.0
        %1787 = vmatpush1.msra.mxu0 0.0
        %1788 = vmatprep.subr.mxu0 0.0
        %1789 = vmatpush1.msra.mxu0 0.0
        %1790 = vmatprep.subr.mxu0 0.0
        %1791 = vmatpush1.msra.mxu0 0.0
        %1792 = vmatprep.subr.mxu0 0.0
        %1793 = vmatpush1.msra.mxu0 0.0
        %1794 = vmatprep.subr.mxu0 0.0
        %1795 = vmatpush1.msra.mxu0 0.0
        %1796 = vmatprep.subr.mxu0 0.0
        %1797 = vmatpush1.msra.mxu0 0.0
        %1798 = vmatprep.subr.mxu0 0.0
        %1799 = vmatpush1.msra.mxu0 0.0
        %1800 = vmatprep.subr.mxu0 0.0
        %1801 = vmatpush1.msra.mxu0 0.0
        %1802 = vmatprep.subr.mxu0 0.0
        %1803 = vmatpush1.msra.mxu0 0.0
        %1804 = vmatprep.subr.mxu0 0.0
        %1805 = vmatpush1.msra.mxu0 0.0
        %1806 = vmatprep.subr.mxu0 0.0
        %1807 = vmatpush1.msra.mxu0 0.0
        %1808 = vmatprep.subr.mxu0 0.0
        %1809 = vmatpush1.msra.mxu0 0.0
        %1810 = vmatprep.subr.mxu0 0.0
        %1811 = vmatpush1.msra.mxu0 0.0
        %1812 = vmatprep.subr.mxu0 0.0
        %1813 = vmatpush1.msra.mxu0 0.0
        %1814 = vmatprep.mubr.f32.mxu0 0.0
        %1815 = vmatmul.mubr.f32.gmra.mrb[0].mxu0 %v1664
        %v1816 = vpop.f32.mrb[0].mxu0
        %v1817 = vadd.f32 0.0, %v1816
        %v1818 = vpop.f32.mrb[0].mxu0
        %1819 = vdwg.mxu0
        %v1821 = vsel %vm670, %v1745, 0
        %1823 = vmatprep.subr.mxu0 0.0
        %1824 = vmatpush1.msra.mxu0 %v1746
        %1825 = vmatprep.subr.mxu0 0.0
        %1826 = vmatpush1.msra.mxu0 %v1747
        %1827 = vmatprep.subr.mxu0 0.0
        %1828 = vmatpush1.msra.mxu0 %v1748
        %1829 = vmatprep.subr.mxu0 0.0
        %1830 = vmatpush1.msra.mxu0 %v1749
        %1831 = vmatprep.subr.mxu0 0.0
        %1832 = vmatpush1.msra.mxu0 0.0
        %1833 = vmatprep.subr.mxu0 0.0
        %1834 = vmatpush1.msra.mxu0 0.0
        %1835 = vmatprep.subr.mxu0 0.0
        %1836 = vmatpush1.msra.mxu0 0.0
        %1837 = vmatprep.subr.mxu0 0.0
        %1838 = vmatpush1.msra.mxu0 0.0
        %1839 = vmatprep.subr.mxu0 0.0
        %1840 = vmatpush1.msra.mxu0 0.0
        %1841 = vmatprep.subr.mxu0 0.0
        %1842 = vmatpush1.msra.mxu0 0.0
        %1843 = vmatprep.subr.mxu0 0.0
        %1844 = vmatpush1.msra.mxu0 0.0
        %1845 = vmatprep.subr.mxu0 0.0
        %1846 = vmatpush1.msra.mxu0 0.0
        %1847 = vmatprep.subr.mxu0 0.0
        %1848 = vmatpush1.msra.mxu0 0.0
        %1849 = vmatprep.subr.mxu0 0.0
        %1850 = vmatpush1.msra.mxu0 0.0
        %1851 = vmatprep.subr.mxu0 0.0
        %1852 = vmatpush1.msra.mxu0 0.0
        %1853 = vmatprep.subr.mxu0 0.0
        %1854 = vmatpush1.msra.mxu0 0.0
        %1855 = vmatprep.subr.mxu0 0.0
        %1856 = vmatpush1.msra.mxu0 0.0
        %1857 = vmatprep.subr.mxu0 0.0
        %1858 = vmatpush1.msra.mxu0 0.0
        %1859 = vmatprep.subr.mxu0 0.0
        %1860 = vmatpush1.msra.mxu0 0.0
        %1861 = vmatprep.subr.mxu0 0.0
        %1862 = vmatpush1.msra.mxu0 0.0
        %1863 = vmatprep.subr.mxu0 0.0
        %1864 = vmatpush1.msra.mxu0 0.0
        %1865 = vmatprep.subr.mxu0 0.0
        %1866 = vmatpush1.msra.mxu0 0.0
        %1867 = vmatprep.subr.mxu0 0.0
        %1868 = vmatpush1.msra.mxu0 0.0
        %1869 = vmatprep.subr.mxu0 0.0
        %1870 = vmatpush1.msra.mxu0 0.0
        %1871 = vmatprep.subr.mxu0 0.0
        %1872 = vmatpush1.msra.mxu0 0.0
        %1873 = vmatprep.subr.mxu0 0.0
        %1874 = vmatpush1.msra.mxu0 0.0
        %1875 = vmatprep.subr.mxu0 0.0
        %1876 = vmatpush1.msra.mxu0 0.0
        %1877 = vmatprep.subr.mxu0 0.0
        %1878 = vmatpush1.msra.mxu0 0.0
        %1879 = vmatprep.subr.mxu0 0.0
        %1880 = vmatpush1.msra.mxu0 0.0
        %1881 = vmatprep.subr.mxu0 0.0
        %1882 = vmatpush1.msra.mxu0 0.0
        %1883 = vmatprep.subr.mxu0 0.0
        %1884 = vmatpush1.msra.mxu0 0.0
        %1885 = vmatprep.subr.mxu0 0.0
        %1886 = vmatpush1.msra.mxu0 0.0
        %1887 = vmatprep.mubr.f32.mxu0 0.0
        %1888 = vmatmul.mubr.f32.gmra.mrb[0].mxu0 %v1821
        %v1889 = vpop.f32.mrb[0].mxu0
        %v1890 = vadd.f32 %v1817, %v1889
        %v1891 = vpop.f32.mrb[0].mxu0
        %1892 = vdwg.mxu0
        %v1893 = vld [vmem:[%s8] sm:$0xff]
        %v1894 = vld [vmem:[%s8 + $0x8] sm:$0xff]
        %v1895 = vld [vmem:[%s8 + $0x10] sm:$0xff]
        %v1896 = vld [vmem:[%s8 + $0x18] sm:$0xff]
        %1897 = vmatprep.subr.mxu0 0.0
        %1898 = vmatpush1.msra.mxu0 %v1893
        %1899 = vmatprep.subr.mxu0 0.0
        %1900 = vmatpush1.msra.mxu0 %v1894
        %1901 = vmatprep.subr.mxu0 0.0
        %1902 = vmatpush1.msra.mxu0 %v1895
        %1903 = vmatprep.subr.mxu0 0.0
        %1904 = vmatpush1.msra.mxu0 %v1896
        %1905 = vmatprep.subr.mxu0 0.0
        %1906 = vmatpush1.msra.mxu0 0.0
        %1907 = vmatprep.subr.mxu0 0.0
        %1908 = vmatpush1.msra.mxu0 0.0
        %1909 = vmatprep.subr.mxu0 0.0
        %1910 = vmatpush1.msra.mxu0 0.0
        %1911 = vmatprep.subr.mxu0 0.0
        %1912 = vmatpush1.msra.mxu0 0.0
        %1913 = vmatprep.subr.mxu0 0.0
        %1914 = vmatpush1.msra.mxu0 0.0
        %1915 = vmatprep.subr.mxu0 0.0
        %1916 = vmatpush1.msra.mxu0 0.0
        %1917 = vmatprep.subr.mxu0 0.0
        %1918 = vmatpush1.msra.mxu0 0.0
        %1919 = vmatprep.subr.mxu0 0.0
        %1920 = vmatpush1.msra.mxu0 0.0
        %1921 = vmatprep.subr.mxu0 0.0
        %1922 = vmatpush1.msra.mxu0 0.0
        %1923 = vmatprep.subr.mxu0 0.0
        %1924 = vmatpush1.msra.mxu0 0.0
        %1925 = vmatprep.subr.mxu0 0.0
        %1926 = vmatpush1.msra.mxu0 0.0
        %1927 = vmatprep.subr.mxu0 0.0
        %1928 = vmatpush1.msra.mxu0 0.0
        %1929 = vmatprep.subr.mxu0 0.0
        %1930 = vmatpush1.msra.mxu0 0.0
        %1931 = vmatprep.subr.mxu0 0.0
        %1932 = vmatpush1.msra.mxu0 0.0
        %1933 = vmatprep.subr.mxu0 0.0
        %1934 = vmatpush1.msra.mxu0 0.0
        %1935 = vmatprep.subr.mxu0 0.0
        %1936 = vmatpush1.msra.mxu0 0.0
        %1937 = vmatprep.subr.mxu0 0.0
        %1938 = vmatpush1.msra.mxu0 0.0
        %1939 = vmatprep.subr.mxu0 0.0
        %1940 = vmatpush1.msra.mxu0 0.0
        %1941 = vmatprep.subr.mxu0 0.0
        %1942 = vmatpush1.msra.mxu0 0.0
        %1943 = vmatprep.subr.mxu0 0.0
        %1944 = vmatpush1.msra.mxu0 0.0
        %1945 = vmatprep.subr.mxu0 0.0
        %1946 = vmatpush1.msra.mxu0 0.0
        %1947 = vmatprep.subr.mxu0 0.0
        %1948 = vmatpush1.msra.mxu0 0.0
        %1949 = vmatprep.subr.mxu0 0.0
        %1950 = vmatpush1.msra.mxu0 0.0
        %1951 = vmatprep.subr.mxu0 0.0
        %1952 = vmatpush1.msra.mxu0 0.0
        %1953 = vmatprep.subr.mxu0 0.0
        %1954 = vmatpush1.msra.mxu0 0.0
        %1955 = vmatprep.subr.mxu0 0.0
        %1956 = vmatpush1.msra.mxu0 0.0
        %1957 = vmatprep.subr.mxu0 0.0
        %1958 = vmatpush1.msra.mxu0 0.0
        %1959 = vmatprep.subr.mxu0 0.0
        %1960 = vmatpush1.msra.mxu0 0.0
        %1961 = vmatprep.mubr.f32.mxu0 0.0
        %1962 = vmatmul.mubr.f32.gmra.mrb[0].mxu0 %v1304
        %v1963 = vpop.f32.mrb[0].mxu0
        %v1964 = vadd.f32 0.0, %v1963
        %v1965 = vpop.f32.mrb[0].mxu0
        %1966 = vdwg.mxu0
        %v1967 = vadd.f32 %v1890, %v1964
        %v1968 = vadd.f32 %v1967, %v658
        %v1969 = vxor.u32 %v1968, 2147483648
        %v1970 = vmul.f32 %v1969, 1.442695
        %v1971 = vpow.pop %v1970
        %v1972 = vadd.f32 %v1971, 1.0
        %v1973 = vrcp.pop %v1972
        %v1974 = vmul.f32 1.0, %v1973
        %v1975 = vtanh.pop %v1968
        %1977 = vrot.lane.b32.xlu0 %v1975, 64
        %v1978 = vpop.permute.xlu0 %1977
        %v1980 = vmul.f32 %v1974, %v1978
        %1982 = vrot.lane.b32.xlu0 %v1290, 32
        %v1983 = vpop.permute.xlu0 %1982
        %v1985 = vmul.f32 %v1974, %v1983
        %1987 = vrot.lane.b32.xlu0 %v1985, 96
        %v1988 = vpop.permute.xlu0 %1987
        %v1990 = vadd.f32 %v1980, %v1988
        %v1991 = vtanh.pop %v1990
        %1993 = vrot.lane.b32.xlu0 %v1991, 96
        %v1994 = vpop.permute.xlu0 %1993
        %v1996 = vmul.f32 %v1974, %v1994
        %v1997 = vld [vmem:[#allocation9] sm:$0xff]
        %v1998 = vld [vmem:[#allocation9 + $0x8] sm:$0xff]
        %v1999 = vld [vmem:[#allocation9 + $0x10] sm:$0xff]
        %v2000 = vld [vmem:[#allocation9 + $0x18] sm:$0xff]
        %2002 = vrot.lane.b32.xlu0 %v1996, 32
        %v2003 = vpop.permute.xlu0 %2002
        %v2004 = vsel %vm670, %v2003, 0
        %2006 = vmatprep.subr.mxu0 0.0
        %2007 = vmatpush1.msra.mxu0 %v1997
        %2008 = vmatprep.subr.mxu0 0.0
        %2009 = vmatpush1.msra.mxu0 %v1998
        %2010 = vmatprep.subr.mxu0 0.0
        %2011 = vmatpush1.msra.mxu0 %v1999
        %2012 = vmatprep.subr.mxu0 0.0
        %2013 = vmatpush1.msra.mxu0 %v2000
        %2014 = vmatprep.subr.mxu0 0.0
        %2015 = vmatpush1.msra.mxu0 0.0
        %2016 = vmatprep.subr.mxu0 0.0
        %2017 = vmatpush1.msra.mxu0 0.0
        %2018 = vmatprep.subr.mxu0 0.0
        %2019 = vmatpush1.msra.mxu0 0.0
        %2020 = vmatprep.subr.mxu0 0.0
        %2021 = vmatpush1.msra.mxu0 0.0
        %2022 = vmatprep.subr.mxu0 0.0
        %2023 = vmatpush1.msra.mxu0 0.0
        %2024 = vmatprep.subr.mxu0 0.0
        %2025 = vmatpush1.msra.mxu0 0.0
        %2026 = vmatprep.subr.mxu0 0.0
        %2027 = vmatpush1.msra.mxu0 0.0
        %2028 = vmatprep.subr.mxu0 0.0
        %2029 = vmatpush1.msra.mxu0 0.0
        %2030 = vmatprep.subr.mxu0 0.0
        %2031 = vmatpush1.msra.mxu0 0.0
        %2032 = vmatprep.subr.mxu0 0.0
        %2033 = vmatpush1.msra.mxu0 0.0
        %2034 = vmatprep.subr.mxu0 0.0
        %2035 = vmatpush1.msra.mxu0 0.0
        %2036 = vmatprep.subr.mxu0 0.0
        %2037 = vmatpush1.msra.mxu0 0.0
        %2038 = vmatprep.subr.mxu0 0.0
        %2039 = vmatpush1.msra.mxu0 0.0
        %2040 = vmatprep.subr.mxu0 0.0
        %2041 = vmatpush1.msra.mxu0 0.0
        %2042 = vmatprep.subr.mxu0 0.0
        %2043 = vmatpush1.msra.mxu0 0.0
        %2044 = vmatprep.subr.mxu0 0.0
        %2045 = vmatpush1.msra.mxu0 0.0
        %2046 = vmatprep.subr.mxu0 0.0
        %2047 = vmatpush1.msra.mxu0 0.0
        %2048 = vmatprep.subr.mxu0 0.0
        %2049 = vmatpush1.msra.mxu0 0.0
        %2050 = vmatprep.subr.mxu0 0.0
        %2051 = vmatpush1.msra.mxu0 0.0
        %2052 = vmatprep.subr.mxu0 0.0
        %2053 = vmatpush1.msra.mxu0 0.0
        %2054 = vmatprep.subr.mxu0 0.0
        %2055 = vmatpush1.msra.mxu0 0.0
        %2056 = vmatprep.subr.mxu0 0.0
        %2057 = vmatpush1.msra.mxu0 0.0
        %2058 = vmatprep.subr.mxu0 0.0
        %2059 = vmatpush1.msra.mxu0 0.0
        %2060 = vmatprep.subr.mxu0 0.0
        %2061 = vmatpush1.msra.mxu0 0.0
        %2062 = vmatprep.subr.mxu0 0.0
        %2063 = vmatpush1.msra.mxu0 0.0
        %2064 = vmatprep.subr.mxu0 0.0
        %2065 = vmatpush1.msra.mxu0 0.0
        %2066 = vmatprep.subr.mxu0 0.0
        %2067 = vmatpush1.msra.mxu0 0.0
        %2068 = vmatprep.subr.mxu0 0.0
        %2069 = vmatpush1.msra.mxu0 0.0
        %2070 = vmatprep.mubr.f32.mxu0 0.0
        %2071 = vmatmul.mubr.f32.gmra.mrb[0].mxu0 %v2004
        %v2072 = vpop.f32.mrb[0].mxu0
        %v2073 = vadd.f32 %v661, %v2072
        %v2074 = vpop.f32.mrb[0].mxu0
        %2075 = vdwg.mxu0
        %v2076 = vld [vmem:[#allocation11] sm:$0xff]
        %v2077 = vld [vmem:[#allocation11 + $0x8] sm:$0xff]
        %v2078 = vld [vmem:[#allocation11 + $0x10] sm:$0xff]
        %v2079 = vld [vmem:[#allocation11 + $0x18] sm:$0xff]
        %2080 = vmatprep.subr.mxu0 0.0
        %2081 = vmatpush1.msra.mxu0 %v2076
        %2082 = vmatprep.subr.mxu0 0.0
        %2083 = vmatpush1.msra.mxu0 %v2077
        %2084 = vmatprep.subr.mxu0 0.0
        %2085 = vmatpush1.msra.mxu0 %v2078
        %2086 = vmatprep.subr.mxu0 0.0
        %2087 = vmatpush1.msra.mxu0 %v2079
        %2088 = vmatprep.subr.mxu0 0.0
        %2089 = vmatpush1.msra.mxu0 0.0
        %2090 = vmatprep.subr.mxu0 0.0
        %2091 = vmatpush1.msra.mxu0 0.0
        %2092 = vmatprep.subr.mxu0 0.0
        %2093 = vmatpush1.msra.mxu0 0.0
        %2094 = vmatprep.subr.mxu0 0.0
        %2095 = vmatpush1.msra.mxu0 0.0
        %2096 = vmatprep.subr.mxu0 0.0
        %2097 = vmatpush1.msra.mxu0 0.0
        %2098 = vmatprep.subr.mxu0 0.0
        %2099 = vmatpush1.msra.mxu0 0.0
        %2100 = vmatprep.subr.mxu0 0.0
        %2101 = vmatpush1.msra.mxu0 0.0
        %2102 = vmatprep.subr.mxu0 0.0
        %2103 = vmatpush1.msra.mxu0 0.0
        %2104 = vmatprep.subr.mxu0 0.0
        %2105 = vmatpush1.msra.mxu0 0.0
        %2106 = vmatprep.subr.mxu0 0.0
        %2107 = vmatpush1.msra.mxu0 0.0
        %2108 = vmatprep.subr.mxu0 0.0
        %2109 = vmatpush1.msra.mxu0 0.0
        %2110 = vmatprep.subr.mxu0 0.0
        %2111 = vmatpush1.msra.mxu0 0.0
        %2112 = vmatprep.subr.mxu0 0.0
        %2113 = vmatpush1.msra.mxu0 0.0
        %2114 = vmatprep.subr.mxu0 0.0
        %2115 = vmatpush1.msra.mxu0 0.0
        %2116 = vmatprep.subr.mxu0 0.0
        %2117 = vmatpush1.msra.mxu0 0.0
        %2118 = vmatprep.subr.mxu0 0.0
        %2119 = vmatpush1.msra.mxu0 0.0
        %2120 = vmatprep.subr.mxu0 0.0
        %2121 = vmatpush1.msra.mxu0 0.0
        %2122 = vmatprep.subr.mxu0 0.0
        %2123 = vmatpush1.msra.mxu0 0.0
        %2124 = vmatprep.subr.mxu0 0.0
        %2125 = vmatpush1.msra.mxu0 0.0
        %2126 = vmatprep.subr.mxu0 0.0
        %2127 = vmatpush1.msra.mxu0 0.0
        %2128 = vmatprep.subr.mxu0 0.0
        %2129 = vmatpush1.msra.mxu0 0.0
        %2130 = vmatprep.subr.mxu0 0.0
        %2131 = vmatpush1.msra.mxu0 0.0
        %2132 = vmatprep.subr.mxu0 0.0
        %2133 = vmatpush1.msra.mxu0 0.0
        %2134 = vmatprep.subr.mxu0 0.0
        %2135 = vmatpush1.msra.mxu0 0.0
        %2136 = vmatprep.subr.mxu0 0.0
        %2137 = vmatpush1.msra.mxu0 0.0
        %2138 = vmatprep.subr.mxu0 0.0
        %2139 = vmatpush1.msra.mxu0 0.0
        %2140 = vmatprep.subr.mxu0 0.0
        %2141 = vmatpush1.msra.mxu0 0.0
        %2142 = vmatprep.subr.mxu0 0.0
        %2143 = vmatpush1.msra.mxu0 0.0
        %2144 = vmatprep.mubr.f32.mxu0 0.0
        %2145 = vmatmul.mubr.f32.gmra.mrb[0].mxu0 %v1486
        %v2146 = vpop.f32.mrb[0].mxu0
        %v2147 = vadd.f32 0.0, %v2146
        %v2148 = vpop.f32.mrb[0].mxu0
        %2149 = vdwg.mxu0
        %v2150 = vadd.f32 %v2073, %v2147
        %v2151 = vxor.u32 %v2150, 2147483648
        %v2152 = vmul.f32 %v2151, 1.442695
        %v2153 = vpow.pop %v2152
        %v2154 = vadd.f32 %v2153, 1.0
        %v2155 = vrcp.pop %v2154
        %v2156 = vmul.f32 1.0, %v2155
        %v2157 = vtanh.pop %v2150
        %2159 = vrot.lane.b32.xlu0 %v2157, 64
        %v2160 = vpop.permute.xlu0 %2159
        %v2162 = vmul.f32 %v2156, %v2160
        %2164 = vrot.lane.b32.xlu0 %v1472, 32
        %v2165 = vpop.permute.xlu0 %2164
        %v2167 = vmul.f32 %v2156, %v2165
        %2169 = vrot.lane.b32.xlu0 %v2167, 96
        %v2170 = vpop.permute.xlu0 %2169
        %v2172 = vadd.f32 %v2162, %v2170
        %v2173 = vtanh.pop %v2172
        %2175 = vrot.lane.b32.xlu0 %v2173, 96
        %v2176 = vpop.permute.xlu0 %2175
        %v2178 = vmul.f32 %v2156, %v2176
        %v2179 = vld [vmem:[#allocation12] sm:$0xff]
        %v2180 = vld [vmem:[#allocation12 + $0x8] sm:$0xff]
        %v2181 = vld [vmem:[#allocation12 + $0x10] sm:$0xff]
        %v2182 = vld [vmem:[#allocation12 + $0x18] sm:$0xff]
        %2184 = vrot.lane.b32.xlu0 %v2178, 32
        %v2185 = vpop.permute.xlu0 %2184
        %v2186 = vsel %vm670, %v2185, 0
        %2188 = vmatprep.subr.mxu0 0.0
        %2189 = vmatpush1.msra.mxu0 %v2179
        %2190 = vmatprep.subr.mxu0 0.0
        %2191 = vmatpush1.msra.mxu0 %v2180
        %2192 = vmatprep.subr.mxu0 0.0
        %2193 = vmatpush1.msra.mxu0 %v2181
        %2194 = vmatprep.subr.mxu0 0.0
        %2195 = vmatpush1.msra.mxu0 %v2182
        %2196 = vmatprep.subr.mxu0 0.0
        %2197 = vmatpush1.msra.mxu0 0.0
        %2198 = vmatprep.subr.mxu0 0.0
        %2199 = vmatpush1.msra.mxu0 0.0
        %2200 = vmatprep.subr.mxu0 0.0
        %2201 = vmatpush1.msra.mxu0 0.0
        %2202 = vmatprep.subr.mxu0 0.0
        %2203 = vmatpush1.msra.mxu0 0.0
        %2204 = vmatprep.subr.mxu0 0.0
        %2205 = vmatpush1.msra.mxu0 0.0
        %2206 = vmatprep.subr.mxu0 0.0
        %2207 = vmatpush1.msra.mxu0 0.0
        %2208 = vmatprep.subr.mxu0 0.0
        %2209 = vmatpush1.msra.mxu0 0.0
        %2210 = vmatprep.subr.mxu0 0.0
        %2211 = vmatpush1.msra.mxu0 0.0
        %2212 = vmatprep.subr.mxu0 0.0
        %2213 = vmatpush1.msra.mxu0 0.0
        %2214 = vmatprep.subr.mxu0 0.0
        %2215 = vmatpush1.msra.mxu0 0.0
        %2216 = vmatprep.subr.mxu0 0.0
        %2217 = vmatpush1.msra.mxu0 0.0
        %2218 = vmatprep.subr.mxu0 0.0
        %2219 = vmatpush1.msra.mxu0 0.0
        %2220 = vmatprep.subr.mxu0 0.0
        %2221 = vmatpush1.msra.mxu0 0.0
        %2222 = vmatprep.subr.mxu0 0.0
        %2223 = vmatpush1.msra.mxu0 0.0
        %2224 = vmatprep.subr.mxu0 0.0
        %2225 = vmatpush1.msra.mxu0 0.0
        %2226 = vmatprep.subr.mxu0 0.0
        %2227 = vmatpush1.msra.mxu0 0.0
        %2228 = vmatprep.subr.mxu0 0.0
        %2229 = vmatpush1.msra.mxu0 0.0
        %2230 = vmatprep.subr.mxu0 0.0
        %2231 = vmatpush1.msra.mxu0 0.0
        %2232 = vmatprep.subr.mxu0 0.0
        %2233 = vmatpush1.msra.mxu0 0.0
        %2234 = vmatprep.subr.mxu0 0.0
        %2235 = vmatpush1.msra.mxu0 0.0
        %2236 = vmatprep.subr.mxu0 0.0
        %2237 = vmatpush1.msra.mxu0 0.0
        %2238 = vmatprep.subr.mxu0 0.0
        %2239 = vmatpush1.msra.mxu0 0.0
        %2240 = vmatprep.subr.mxu0 0.0
        %2241 = vmatpush1.msra.mxu0 0.0
        %2242 = vmatprep.subr.mxu0 0.0
        %2243 = vmatpush1.msra.mxu0 0.0
        %2244 = vmatprep.subr.mxu0 0.0
        %2245 = vmatpush1.msra.mxu0 0.0
        %2246 = vmatprep.subr.mxu0 0.0
        %2247 = vmatpush1.msra.mxu0 0.0
        %2248 = vmatprep.subr.mxu0 0.0
        %2249 = vmatpush1.msra.mxu0 0.0
        %2250 = vmatprep.subr.mxu0 0.0
        %2251 = vmatpush1.msra.mxu0 0.0
        %2252 = vmatprep.mubr.f32.mxu0 0.0
        %2253 = vmatmul.mubr.f32.gmra.mrb[0].mxu0 %v2186
        %v2254 = vpop.f32.mrb[0].mxu0
        %v2255 = vadd.f32 %v662, %v2254
        %v2256 = vpop.f32.mrb[0].mxu0
        %2257 = vdwg.mxu0
        %v2258 = vld [vmem:[#allocation14] sm:$0xff]
        %v2259 = vld [vmem:[#allocation14 + $0x8] sm:$0xff]
        %v2260 = vld [vmem:[#allocation14 + $0x10] sm:$0xff]
        %v2261 = vld [vmem:[#allocation14 + $0x18] sm:$0xff]
        %2262 = vmatprep.subr.mxu0 0.0
        %2263 = vmatpush1.msra.mxu0 %v2258
        %2264 = vmatprep.subr.mxu0 0.0
        %2265 = vmatpush1.msra.mxu0 %v2259
        %2266 = vmatprep.subr.mxu0 0.0
        %2267 = vmatpush1.msra.mxu0 %v2260
        %2268 = vmatprep.subr.mxu0 0.0
        %2269 = vmatpush1.msra.mxu0 %v2261
        %2270 = vmatprep.subr.mxu0 0.0
        %2271 = vmatpush1.msra.mxu0 0.0
        %2272 = vmatprep.subr.mxu0 0.0
        %2273 = vmatpush1.msra.mxu0 0.0
        %2274 = vmatprep.subr.mxu0 0.0
        %2275 = vmatpush1.msra.mxu0 0.0
        %2276 = vmatprep.subr.mxu0 0.0
        %2277 = vmatpush1.msra.mxu0 0.0
        %2278 = vmatprep.subr.mxu0 0.0
        %2279 = vmatpush1.msra.mxu0 0.0
        %2280 = vmatprep.subr.mxu0 0.0
        %2281 = vmatpush1.msra.mxu0 0.0
        %2282 = vmatprep.subr.mxu0 0.0
        %2283 = vmatpush1.msra.mxu0 0.0
        %2284 = vmatprep.subr.mxu0 0.0
        %2285 = vmatpush1.msra.mxu0 0.0
        %2286 = vmatprep.subr.mxu0 0.0
        %2287 = vmatpush1.msra.mxu0 0.0
        %2288 = vmatprep.subr.mxu0 0.0
        %2289 = vmatpush1.msra.mxu0 0.0
        %2290 = vmatprep.subr.mxu0 0.0
        %2291 = vmatpush1.msra.mxu0 0.0
        %2292 = vmatprep.subr.mxu0 0.0
        %2293 = vmatpush1.msra.mxu0 0.0
        %2294 = vmatprep.subr.mxu0 0.0
        %2295 = vmatpush1.msra.mxu0 0.0
        %2296 = vmatprep.subr.mxu0 0.0
        %2297 = vmatpush1.msra.mxu0 0.0
        %2298 = vmatprep.subr.mxu0 0.0
        %2299 = vmatpush1.msra.mxu0 0.0
        %2300 = vmatprep.subr.mxu0 0.0
        %2301 = vmatpush1.msra.mxu0 0.0
        %2302 = vmatprep.subr.mxu0 0.0
        %2303 = vmatpush1.msra.mxu0 0.0
        %2304 = vmatprep.subr.mxu0 0.0
        %2305 = vmatpush1.msra.mxu0 0.0
        %2306 = vmatprep.subr.mxu0 0.0
        %2307 = vmatpush1.msra.mxu0 0.0
        %2308 = vmatprep.subr.mxu0 0.0
        %2309 = vmatpush1.msra.mxu0 0.0
        %2310 = vmatprep.subr.mxu0 0.0
        %2311 = vmatpush1.msra.mxu0 0.0
        %2312 = vmatprep.subr.mxu0 0.0
        %2313 = vmatpush1.msra.mxu0 0.0
        %2314 = vmatprep.subr.mxu0 0.0
        %2315 = vmatpush1.msra.mxu0 0.0
        %2316 = vmatprep.subr.mxu0 0.0
        %2317 = vmatpush1.msra.mxu0 0.0
        %2318 = vmatprep.subr.mxu0 0.0
        %2319 = vmatpush1.msra.mxu0 0.0
        %2320 = vmatprep.subr.mxu0 0.0
        %2321 = vmatpush1.msra.mxu0 0.0
        %2322 = vmatprep.subr.mxu0 0.0
        %2323 = vmatpush1.msra.mxu0 0.0
        %2324 = vmatprep.subr.mxu0 0.0
        %2325 = vmatpush1.msra.mxu0 0.0
        %2326 = vmatprep.mubr.f32.mxu0 0.0
        %2327 = vmatmul.mubr.f32.gmra.mrb[0].mxu0 %v1664
        %v2328 = vpop.f32.mrb[0].mxu0
        %v2329 = vadd.f32 0.0, %v2328
        %v2330 = vpop.f32.mrb[0].mxu0
        %2331 = vdwg.mxu0
        %v2332 = vadd.f32 %v2255, %v2329
        %v2333 = vxor.u32 %v2332, 2147483648
        %v2334 = vmul.f32 %v2333, 1.442695
        %v2335 = vpow.pop %v2334
        %v2336 = vadd.f32 %v2335, 1.0
        %v2337 = vrcp.pop %v2336
        %v2338 = vmul.f32 1.0, %v2337
        %v2339 = vtanh.pop %v2332
        %2341 = vrot.lane.b32.xlu0 %v2339, 64
        %v2342 = vpop.permute.xlu0 %2341
        %v2344 = vmul.f32 %v2338, %v2342
        %2346 = vrot.lane.b32.xlu0 %v1654, 32
        %v2347 = vpop.permute.xlu0 %2346
        %v2349 = vmul.f32 %v2338, %v2347
        %2351 = vrot.lane.b32.xlu0 %v2349, 96
        %v2352 = vpop.permute.xlu0 %2351
        %v2354 = vadd.f32 %v2344, %v2352
        %v2355 = vtanh.pop %v2354
        %2357 = vrot.lane.b32.xlu0 %v2355, 96
        %v2358 = vpop.permute.xlu0 %2357
        %v2360 = vmul.f32 %v2338, %v2358
        %2362 = vrot.lane.b32.xlu0 %v2360, 32
        %v2363 = vpop.permute.xlu0 %2362
        %v2364 = vsel %vm670, %v2363, 0
        %2366 = vmatprep.subr.mxu0 0.0
        %2367 = vmatpush1.msra.mxu0 %v654
        %2368 = vmatprep.subr.mxu0 0.0
        %2369 = vmatpush1.msra.mxu0 %v655
        %2370 = vmatprep.subr.mxu0 0.0
        %2371 = vmatpush1.msra.mxu0 %v656
        %2372 = vmatprep.subr.mxu0 0.0
        %2373 = vmatpush1.msra.mxu0 %v657
        %2374 = vmatprep.subr.mxu0 0.0
        %2375 = vmatpush1.msra.mxu0 0.0
        %2376 = vmatprep.subr.mxu0 0.0
        %2377 = vmatpush1.msra.mxu0 0.0
        %2378 = vmatprep.subr.mxu0 0.0
        %2379 = vmatpush1.msra.mxu0 0.0
        %2380 = vmatprep.subr.mxu0 0.0
        %2381 = vmatpush1.msra.mxu0 0.0
        %2382 = vmatprep.subr.mxu0 0.0
        %2383 = vmatpush1.msra.mxu0 0.0
        %2384 = vmatprep.subr.mxu0 0.0
        %2385 = vmatpush1.msra.mxu0 0.0
        %2386 = vmatprep.subr.mxu0 0.0
        %2387 = vmatpush1.msra.mxu0 0.0
        %2388 = vmatprep.subr.mxu0 0.0
        %2389 = vmatpush1.msra.mxu0 0.0
        %2390 = vmatprep.subr.mxu0 0.0
        %2391 = vmatpush1.msra.mxu0 0.0
        %2392 = vmatprep.subr.mxu0 0.0
        %2393 = vmatpush1.msra.mxu0 0.0
        %2394 = vmatprep.subr.mxu0 0.0
        %2395 = vmatpush1.msra.mxu0 0.0
        %2396 = vmatprep.subr.mxu0 0.0
        %2397 = vmatpush1.msra.mxu0 0.0
        %2398 = vmatprep.subr.mxu0 0.0
        %2399 = vmatpush1.msra.mxu0 0.0
        %2400 = vmatprep.subr.mxu0 0.0
        %2401 = vmatpush1.msra.mxu0 0.0
        %2402 = vmatprep.subr.mxu0 0.0
        %2403 = vmatpush1.msra.mxu0 0.0
        %2404 = vmatprep.subr.mxu0 0.0
        %2405 = vmatpush1.msra.mxu0 0.0
        %2406 = vmatprep.subr.mxu0 0.0
        %2407 = vmatpush1.msra.mxu0 0.0
        %2408 = vmatprep.subr.mxu0 0.0
        %2409 = vmatpush1.msra.mxu0 0.0
        %2410 = vmatprep.subr.mxu0 0.0
        %2411 = vmatpush1.msra.mxu0 0.0
        %2412 = vmatprep.subr.mxu0 0.0
        %2413 = vmatpush1.msra.mxu0 0.0
        %2414 = vmatprep.subr.mxu0 0.0
        %2415 = vmatpush1.msra.mxu0 0.0
        %2416 = vmatprep.subr.mxu0 0.0
        %2417 = vmatpush1.msra.mxu0 0.0
        %2418 = vmatprep.subr.mxu0 0.0
        %2419 = vmatpush1.msra.mxu0 0.0
        %2420 = vmatprep.subr.mxu0 0.0
        %2421 = vmatpush1.msra.mxu0 0.0
        %2422 = vmatprep.subr.mxu0 0.0
        %2423 = vmatpush1.msra.mxu0 0.0
        %2424 = vmatprep.subr.mxu0 0.0
        %2425 = vmatpush1.msra.mxu0 0.0
        %2426 = vmatprep.subr.mxu0 0.0
        %2427 = vmatpush1.msra.mxu0 0.0
        %2428 = vmatprep.subr.mxu0 0.0
        %2429 = vmatpush1.msra.mxu0 0.0
        %2430 = vmatprep.mubr.f32.mxu0 0.0
        %2431 = vmatmul.mubr.f32.gmra.mrb[0].mxu0 %v2364
        %v2432 = vpop.f32.mrb[0].mxu0
        %v2433 = vadd.f32 %v660, %v2432
        %v2434 = vpop.f32.mrb[0].mxu0
        %2435 = vdwg.mxu0
        %vm2436 = vcmp.gt.f32.partialorder %v2433, 0.0
        %v2437 = vmul.f32 %v2433, 0.01
        %v2438 = vsel %vm2436, %v2433, %v2437
        %2439 = vst.msk [vmem:[%s649 + $0x2] sm:$0x1] %vm1034, %v2438
        %s2440 = sadd.s32 %s1036, 3
        %s2441 = smul.u32 %s2440, 128
        %s2442 = sadd.s32 %s2441, %s1041
        %s2443 = sld [smem:[#allocation3 + %s2442]]
        %s2444 = scalar_lea.vmem %s1, %s2443
        %v2445 = vld [vmem:[%s2444] sm:$0x1]
        %v2446 = vld [vmem:[%s7] sm:$0xff]
        %v2447 = vld [vmem:[%s7 + $0x8] sm:$0xff]
        %v2448 = vld [vmem:[%s7 + $0x10] sm:$0xff]
        %v2449 = vld [vmem:[%s7 + $0x18] sm:$0xff]
        %2450 = vmatprep.subr.mxu0 0.0
        %2451 = vmatpush1.msra.mxu0 %v650
        %2452 = vmatprep.subr.mxu0 0.0
        %2453 = vmatpush1.msra.mxu0 %v651
        %2454 = vmatprep.subr.mxu0 0.0
        %2455 = vmatpush1.msra.mxu0 %v652
        %2456 = vmatprep.subr.mxu0 0.0
        %2457 = vmatpush1.msra.mxu0 %v653
        %2458 = vmatprep.subr.mxu0 0.0
        %2459 = vmatpush1.msra.mxu0 0.0
        %2460 = vmatprep.subr.mxu0 0.0
        %2461 = vmatpush1.msra.mxu0 0.0
        %2462 = vmatprep.subr.mxu0 0.0
        %2463 = vmatpush1.msra.mxu0 0.0
        %2464 = vmatprep.subr.mxu0 0.0
        %2465 = vmatpush1.msra.mxu0 0.0
        %2466 = vmatprep.subr.mxu0 0.0
        %2467 = vmatpush1.msra.mxu0 0.0
        %2468 = vmatprep.subr.mxu0 0.0
        %2469 = vmatpush1.msra.mxu0 0.0
        %2470 = vmatprep.subr.mxu0 0.0
        %2471 = vmatpush1.msra.mxu0 0.0
        %2472 = vmatprep.subr.mxu0 0.0
        %2473 = vmatpush1.msra.mxu0 0.0
        %2474 = vmatprep.subr.mxu0 0.0
        %2475 = vmatpush1.msra.mxu0 0.0
        %2476 = vmatprep.subr.mxu0 0.0
        %2477 = vmatpush1.msra.mxu0 0.0
        %2478 = vmatprep.subr.mxu0 0.0
        %2479 = vmatpush1.msra.mxu0 0.0
        %2480 = vmatprep.subr.mxu0 0.0
        %2481 = vmatpush1.msra.mxu0 0.0
        %2482 = vmatprep.subr.mxu0 0.0
        %2483 = vmatpush1.msra.mxu0 0.0
        %2484 = vmatprep.subr.mxu0 0.0
        %2485 = vmatpush1.msra.mxu0 0.0
        %2486 = vmatprep.subr.mxu0 0.0
        %2487 = vmatpush1.msra.mxu0 0.0
        %2488 = vmatprep.subr.mxu0 0.0
        %2489 = vmatpush1.msra.mxu0 0.0
        %2490 = vmatprep.subr.mxu0 0.0
        %2491 = vmatpush1.msra.mxu0 0.0
        %2492 = vmatprep.subr.mxu0 0.0
        %2493 = vmatpush1.msra.mxu0 0.0
        %2494 = vmatprep.subr.mxu0 0.0
        %2495 = vmatpush1.msra.mxu0 0.0
        %2496 = vmatprep.subr.mxu0 0.0
        %2497 = vmatpush1.msra.mxu0 0.0
        %2498 = vmatprep.subr.mxu0 0.0
        %2499 = vmatpush1.msra.mxu0 0.0
        %2500 = vmatprep.subr.mxu0 0.0
        %2501 = vmatpush1.msra.mxu0 0.0
        %2502 = vmatprep.subr.mxu0 0.0
        %2503 = vmatpush1.msra.mxu0 0.0
        %2504 = vmatprep.subr.mxu0 0.0
        %2505 = vmatpush1.msra.mxu0 0.0
        %2506 = vmatprep.subr.mxu0 0.0
        %2507 = vmatpush1.msra.mxu0 0.0
        %2508 = vmatprep.subr.mxu0 0.0
        %2509 = vmatpush1.msra.mxu0 0.0
        %2510 = vmatprep.subr.mxu0 0.0
        %2511 = vmatpush1.msra.mxu0 0.0
        %2512 = vmatprep.subr.mxu0 0.0
        %2513 = vmatpush1.msra.mxu0 0.0
        %2514 = vmatprep.mubr.f32.mxu0 0.0
        %2515 = vmatmul.mubr.f32.gmra.mrb[0].mxu0 %v2364
        %v2516 = vpop.f32.mrb[0].mxu0
        %v2517 = vadd.f32 0.0, %v2516
        %v2518 = vpop.f32.mrb[0].mxu0
        %2519 = vdwg.mxu0
        %v2521 = vsel %vm670, %v2445, 0
        %2523 = vmatprep.subr.mxu0 0.0
        %2524 = vmatpush1.msra.mxu0 %v2446
        %2525 = vmatprep.subr.mxu0 0.0
        %2526 = vmatpush1.msra.mxu0 %v2447
        %2527 = vmatprep.subr.mxu0 0.0
        %2528 = vmatpush1.msra.mxu0 %v2448
        %2529 = vmatprep.subr.mxu0 0.0
        %2530 = vmatpush1.msra.mxu0 %v2449
        %2531 = vmatprep.subr.mxu0 0.0
        %2532 = vmatpush1.msra.mxu0 0.0
        %2533 = vmatprep.subr.mxu0 0.0
        %2534 = vmatpush1.msra.mxu0 0.0
        %2535 = vmatprep.subr.mxu0 0.0
        %2536 = vmatpush1.msra.mxu0 0.0
        %2537 = vmatprep.subr.mxu0 0.0
        %2538 = vmatpush1.msra.mxu0 0.0
        %2539 = vmatprep.subr.mxu0 0.0
        %2540 = vmatpush1.msra.mxu0 0.0
        %2541 = vmatprep.subr.mxu0 0.0
        %2542 = vmatpush1.msra.mxu0 0.0
        %2543 = vmatprep.subr.mxu0 0.0
        %2544 = vmatpush1.msra.mxu0 0.0
        %2545 = vmatprep.subr.mxu0 0.0
        %2546 = vmatpush1.msra.mxu0 0.0
        %2547 = vmatprep.subr.mxu0 0.0
        %2548 = vmatpush1.msra.mxu0 0.0
        %2549 = vmatprep.subr.mxu0 0.0
        %2550 = vmatpush1.msra.mxu0 0.0
        %2551 = vmatprep.subr.mxu0 0.0
        %2552 = vmatpush1.msra.mxu0 0.0
        %2553 = vmatprep.subr.mxu0 0.0
        %2554 = vmatpush1.msra.mxu0 0.0
        %2555 = vmatprep.subr.mxu0 0.0
        %2556 = vmatpush1.msra.mxu0 0.0
        %2557 = vmatprep.subr.mxu0 0.0
        %2558 = vmatpush1.msra.mxu0 0.0
        %2559 = vmatprep.subr.mxu0 0.0
        %2560 = vmatpush1.msra.mxu0 0.0
        %2561 = vmatprep.subr.mxu0 0.0
        %2562 = vmatpush1.msra.mxu0 0.0
        %2563 = vmatprep.subr.mxu0 0.0
        %2564 = vmatpush1.msra.mxu0 0.0
        %2565 = vmatprep.subr.mxu0 0.0
        %2566 = vmatpush1.msra.mxu0 0.0
        %2567 = vmatprep.subr.mxu0 0.0
        %2568 = vmatpush1.msra.mxu0 0.0
        %2569 = vmatprep.subr.mxu0 0.0
        %2570 = vmatpush1.msra.mxu0 0.0
        %2571 = vmatprep.subr.mxu0 0.0
        %2572 = vmatpush1.msra.mxu0 0.0
        %2573 = vmatprep.subr.mxu0 0.0
        %2574 = vmatpush1.msra.mxu0 0.0
        %2575 = vmatprep.subr.mxu0 0.0
        %2576 = vmatpush1.msra.mxu0 0.0
        %2577 = vmatprep.subr.mxu0 0.0
        %2578 = vmatpush1.msra.mxu0 0.0
        %2579 = vmatprep.subr.mxu0 0.0
        %2580 = vmatpush1.msra.mxu0 0.0
        %2581 = vmatprep.subr.mxu0 0.0
        %2582 = vmatpush1.msra.mxu0 0.0
        %2583 = vmatprep.subr.mxu0 0.0
        %2584 = vmatpush1.msra.mxu0 0.0
        %2585 = vmatprep.subr.mxu0 0.0
        %2586 = vmatpush1.msra.mxu0 0.0
        %2587 = vmatprep.mubr.f32.mxu0 0.0
        %2588 = vmatmul.mubr.f32.gmra.mrb[0].mxu0 %v2521
        %v2589 = vpop.f32.mrb[0].mxu0
        %v2590 = vadd.f32 %v2517, %v2589
        %v2591 = vpop.f32.mrb[0].mxu0
        %2592 = vdwg.mxu0
        %v2593 = vld [vmem:[%s8] sm:$0xff]
        %v2594 = vld [vmem:[%s8 + $0x8] sm:$0xff]
        %v2595 = vld [vmem:[%s8 + $0x10] sm:$0xff]
        %v2596 = vld [vmem:[%s8 + $0x18] sm:$0xff]
        %2597 = vmatprep.subr.mxu0 0.0
        %2598 = vmatpush1.msra.mxu0 %v2593
        %2599 = vmatprep.subr.mxu0 0.0
        %2600 = vmatpush1.msra.mxu0 %v2594
        %2601 = vmatprep.subr.mxu0 0.0
        %2602 = vmatpush1.msra.mxu0 %v2595
        %2603 = vmatprep.subr.mxu0 0.0
        %2604 = vmatpush1.msra.mxu0 %v2596
        %2605 = vmatprep.subr.mxu0 0.0
        %2606 = vmatpush1.msra.mxu0 0.0
        %2607 = vmatprep.subr.mxu0 0.0
        %2608 = vmatpush1.msra.mxu0 0.0
        %2609 = vmatprep.subr.mxu0 0.0
        %2610 = vmatpush1.msra.mxu0 0.0
        %2611 = vmatprep.subr.mxu0 0.0
        %2612 = vmatpush1.msra.mxu0 0.0
        %2613 = vmatprep.subr.mxu0 0.0
        %2614 = vmatpush1.msra.mxu0 0.0
        %2615 = vmatprep.subr.mxu0 0.0
        %2616 = vmatpush1.msra.mxu0 0.0
        %2617 = vmatprep.subr.mxu0 0.0
        %2618 = vmatpush1.msra.mxu0 0.0
        %2619 = vmatprep.subr.mxu0 0.0
        %2620 = vmatpush1.msra.mxu0 0.0
        %2621 = vmatprep.subr.mxu0 0.0
        %2622 = vmatpush1.msra.mxu0 0.0
        %2623 = vmatprep.subr.mxu0 0.0
        %2624 = vmatpush1.msra.mxu0 0.0
        %2625 = vmatprep.subr.mxu0 0.0
        %2626 = vmatpush1.msra.mxu0 0.0
        %2627 = vmatprep.subr.mxu0 0.0
        %2628 = vmatpush1.msra.mxu0 0.0
        %2629 = vmatprep.subr.mxu0 0.0
        %2630 = vmatpush1.msra.mxu0 0.0
        %2631 = vmatprep.subr.mxu0 0.0
        %2632 = vmatpush1.msra.mxu0 0.0
        %2633 = vmatprep.subr.mxu0 0.0
        %2634 = vmatpush1.msra.mxu0 0.0
        %2635 = vmatprep.subr.mxu0 0.0
        %2636 = vmatpush1.msra.mxu0 0.0
        %2637 = vmatprep.subr.mxu0 0.0
        %2638 = vmatpush1.msra.mxu0 0.0
        %2639 = vmatprep.subr.mxu0 0.0
        %2640 = vmatpush1.msra.mxu0 0.0
        %2641 = vmatprep.subr.mxu0 0.0
        %2642 = vmatpush1.msra.mxu0 0.0
        %2643 = vmatprep.subr.mxu0 0.0
        %2644 = vmatpush1.msra.mxu0 0.0
        %2645 = vmatprep.subr.mxu0 0.0
        %2646 = vmatpush1.msra.mxu0 0.0
        %2647 = vmatprep.subr.mxu0 0.0
        %2648 = vmatpush1.msra.mxu0 0.0
        %2649 = vmatprep.subr.mxu0 0.0
        %2650 = vmatpush1.msra.mxu0 0.0
        %2651 = vmatprep.subr.mxu0 0.0
        %2652 = vmatpush1.msra.mxu0 0.0
        %2653 = vmatprep.subr.mxu0 0.0
        %2654 = vmatpush1.msra.mxu0 0.0
        %2655 = vmatprep.subr.mxu0 0.0
        %2656 = vmatpush1.msra.mxu0 0.0
        %2657 = vmatprep.subr.mxu0 0.0
        %2658 = vmatpush1.msra.mxu0 0.0
        %2659 = vmatprep.subr.mxu0 0.0
        %2660 = vmatpush1.msra.mxu0 0.0
        %2661 = vmatprep.mubr.f32.mxu0 0.0
        %2662 = vmatmul.mubr.f32.gmra.mrb[0].mxu0 %v2004
        %v2663 = vpop.f32.mrb[0].mxu0
        %v2664 = vadd.f32 0.0, %v2663
        %v2665 = vpop.f32.mrb[0].mxu0
        %2666 = vdwg.mxu0
        %v2667 = vadd.f32 %v2590, %v2664
        %v2668 = vadd.f32 %v2667, %v658
        %v2669 = vxor.u32 %v2668, 2147483648
        %v2670 = vmul.f32 %v2669, 1.442695
        %v2671 = vpow.pop %v2670
        %v2672 = vadd.f32 %v2671, 1.0
        %v2673 = vrcp.pop %v2672
        %v2674 = vmul.f32 1.0, %v2673
        %v2675 = vtanh.pop %v2668
        %2677 = vrot.lane.b32.xlu0 %v2675, 64
        %v2678 = vpop.permute.xlu0 %2677
        %v2680 = vmul.f32 %v2674, %v2678
        %2682 = vrot.lane.b32.xlu0 %v1990, 32
        %v2683 = vpop.permute.xlu0 %2682
        %v2685 = vmul.f32 %v2674, %v2683
        %2687 = vrot.lane.b32.xlu0 %v2685, 96
        %v2688 = vpop.permute.xlu0 %2687
        %v2690 = vadd.f32 %v2680, %v2688
        %v2691 = vtanh.pop %v2690
        %2693 = vrot.lane.b32.xlu0 %v2691, 96
        %v2694 = vpop.permute.xlu0 %2693
        %v2696 = vmul.f32 %v2674, %v2694
        %v2697 = vld [vmem:[#allocation9] sm:$0xff]
        %v2698 = vld [vmem:[#allocation9 + $0x8] sm:$0xff]
        %v2699 = vld [vmem:[#allocation9 + $0x10] sm:$0xff]
        %v2700 = vld [vmem:[#allocation9 + $0x18] sm:$0xff]
        %2702 = vrot.lane.b32.xlu0 %v2696, 32
        %v2703 = vpop.permute.xlu0 %2702
        %v2704 = vsel %vm670, %v2703, 0
        %2706 = vmatprep.subr.mxu0 0.0
        %2707 = vmatpush1.msra.mxu0 %v2697
        %2708 = vmatprep.subr.mxu0 0.0
        %2709 = vmatpush1.msra.mxu0 %v2698
        %2710 = vmatprep.subr.mxu0 0.0
        %2711 = vmatpush1.msra.mxu0 %v2699
        %2712 = vmatprep.subr.mxu0 0.0
        %2713 = vmatpush1.msra.mxu0 %v2700
        %2714 = vmatprep.subr.mxu0 0.0
        %2715 = vmatpush1.msra.mxu0 0.0
        %2716 = vmatprep.subr.mxu0 0.0
        %2717 = vmatpush1.msra.mxu0 0.0
        %2718 = vmatprep.subr.mxu0 0.0
        %2719 = vmatpush1.msra.mxu0 0.0
        %2720 = vmatprep.subr.mxu0 0.0
        %2721 = vmatpush1.msra.mxu0 0.0
        %2722 = vmatprep.subr.mxu0 0.0
        %2723 = vmatpush1.msra.mxu0 0.0
        %2724 = vmatprep.subr.mxu0 0.0
        %2725 = vmatpush1.msra.mxu0 0.0
        %2726 = vmatprep.subr.mxu0 0.0
        %2727 = vmatpush1.msra.mxu0 0.0
        %2728 = vmatprep.subr.mxu0 0.0
        %2729 = vmatpush1.msra.mxu0 0.0
        %2730 = vmatprep.subr.mxu0 0.0
        %2731 = vmatpush1.msra.mxu0 0.0
        %2732 = vmatprep.subr.mxu0 0.0
        %2733 = vmatpush1.msra.mxu0 0.0
        %2734 = vmatprep.subr.mxu0 0.0
        %2735 = vmatpush1.msra.mxu0 0.0
        %2736 = vmatprep.subr.mxu0 0.0
        %2737 = vmatpush1.msra.mxu0 0.0
        %2738 = vmatprep.subr.mxu0 0.0
        %2739 = vmatpush1.msra.mxu0 0.0
        %2740 = vmatprep.subr.mxu0 0.0
        %2741 = vmatpush1.msra.mxu0 0.0
        %2742 = vmatprep.subr.mxu0 0.0
        %2743 = vmatpush1.msra.mxu0 0.0
        %2744 = vmatprep.subr.mxu0 0.0
        %2745 = vmatpush1.msra.mxu0 0.0
        %2746 = vmatprep.subr.mxu0 0.0
        %2747 = vmatpush1.msra.mxu0 0.0
        %2748 = vmatprep.subr.mxu0 0.0
        %2749 = vmatpush1.msra.mxu0 0.0
        %2750 = vmatprep.subr.mxu0 0.0
        %2751 = vmatpush1.msra.mxu0 0.0
        %2752 = vmatprep.subr.mxu0 0.0
        %2753 = vmatpush1.msra.mxu0 0.0
        %2754 = vmatprep.subr.mxu0 0.0
        %2755 = vmatpush1.msra.mxu0 0.0
        %2756 = vmatprep.subr.mxu0 0.0
        %2757 = vmatpush1.msra.mxu0 0.0
        %2758 = vmatprep.subr.mxu0 0.0
        %2759 = vmatpush1.msra.mxu0 0.0
        %2760 = vmatprep.subr.mxu0 0.0
        %2761 = vmatpush1.msra.mxu0 0.0
        %2762 = vmatprep.subr.mxu0 0.0
        %2763 = vmatpush1.msra.mxu0 0.0
        %2764 = vmatprep.subr.mxu0 0.0
        %2765 = vmatpush1.msra.mxu0 0.0
        %2766 = vmatprep.subr.mxu0 0.0
        %2767 = vmatpush1.msra.mxu0 0.0
        %2768 = vmatprep.subr.mxu0 0.0
        %2769 = vmatpush1.msra.mxu0 0.0
        %2770 = vmatprep.mubr.f32.mxu0 0.0
        %2771 = vmatmul.mubr.f32.gmra.mrb[0].mxu0 %v2704
        %v2772 = vpop.f32.mrb[0].mxu0
        %v2773 = vadd.f32 %v661, %v2772
        %v2774 = vpop.f32.mrb[0].mxu0
        %2775 = vdwg.mxu0
        %v2776 = vld [vmem:[#allocation11] sm:$0xff]
        %v2777 = vld [vmem:[#allocation11 + $0x8] sm:$0xff]
        %v2778 = vld [vmem:[#allocation11 + $0x10] sm:$0xff]
        %v2779 = vld [vmem:[#allocation11 + $0x18] sm:$0xff]
        %2780 = vmatprep.subr.mxu0 0.0
        %2781 = vmatpush1.msra.mxu0 %v2776
        %2782 = vmatprep.subr.mxu0 0.0
        %2783 = vmatpush1.msra.mxu0 %v2777
        %2784 = vmatprep.subr.mxu0 0.0
        %2785 = vmatpush1.msra.mxu0 %v2778
        %2786 = vmatprep.subr.mxu0 0.0
        %2787 = vmatpush1.msra.mxu0 %v2779
        %2788 = vmatprep.subr.mxu0 0.0
        %2789 = vmatpush1.msra.mxu0 0.0
        %2790 = vmatprep.subr.mxu0 0.0
        %2791 = vmatpush1.msra.mxu0 0.0
        %2792 = vmatprep.subr.mxu0 0.0
        %2793 = vmatpush1.msra.mxu0 0.0
        %2794 = vmatprep.subr.mxu0 0.0
        %2795 = vmatpush1.msra.mxu0 0.0
        %2796 = vmatprep.subr.mxu0 0.0
        %2797 = vmatpush1.msra.mxu0 0.0
        %2798 = vmatprep.subr.mxu0 0.0
        %2799 = vmatpush1.msra.mxu0 0.0
        %2800 = vmatprep.subr.mxu0 0.0
        %2801 = vmatpush1.msra.mxu0 0.0
        %2802 = vmatprep.subr.mxu0 0.0
        %2803 = vmatpush1.msra.mxu0 0.0
        %2804 = vmatprep.subr.mxu0 0.0
        %2805 = vmatpush1.msra.mxu0 0.0
        %2806 = vmatprep.subr.mxu0 0.0
        %2807 = vmatpush1.msra.mxu0 0.0
        %2808 = vmatprep.subr.mxu0 0.0
        %2809 = vmatpush1.msra.mxu0 0.0
        %2810 = vmatprep.subr.mxu0 0.0
        %2811 = vmatpush1.msra.mxu0 0.0
        %2812 = vmatprep.subr.mxu0 0.0
        %2813 = vmatpush1.msra.mxu0 0.0
        %2814 = vmatprep.subr.mxu0 0.0
        %2815 = vmatpush1.msra.mxu0 0.0
        %2816 = vmatprep.subr.mxu0 0.0
        %2817 = vmatpush1.msra.mxu0 0.0
        %2818 = vmatprep.subr.mxu0 0.0
        %2819 = vmatpush1.msra.mxu0 0.0
        %2820 = vmatprep.subr.mxu0 0.0
        %2821 = vmatpush1.msra.mxu0 0.0
        %2822 = vmatprep.subr.mxu0 0.0
        %2823 = vmatpush1.msra.mxu0 0.0
        %2824 = vmatprep.subr.mxu0 0.0
        %2825 = vmatpush1.msra.mxu0 0.0
        %2826 = vmatprep.subr.mxu0 0.0
        %2827 = vmatpush1.msra.mxu0 0.0
        %2828 = vmatprep.subr.mxu0 0.0
        %2829 = vmatpush1.msra.mxu0 0.0
        %2830 = vmatprep.subr.mxu0 0.0
        %2831 = vmatpush1.msra.mxu0 0.0
        %2832 = vmatprep.subr.mxu0 0.0
        %2833 = vmatpush1.msra.mxu0 0.0
        %2834 = vmatprep.subr.mxu0 0.0
        %2835 = vmatpush1.msra.mxu0 0.0
        %2836 = vmatprep.subr.mxu0 0.0
        %2837 = vmatpush1.msra.mxu0 0.0
        %2838 = vmatprep.subr.mxu0 0.0
        %2839 = vmatpush1.msra.mxu0 0.0
        %2840 = vmatprep.subr.mxu0 0.0
        %2841 = vmatpush1.msra.mxu0 0.0
        %2842 = vmatprep.subr.mxu0 0.0
        %2843 = vmatpush1.msra.mxu0 0.0
        %2844 = vmatprep.mubr.f32.mxu0 0.0
        %2845 = vmatmul.mubr.f32.gmra.mrb[0].mxu0 %v2186
        %v2846 = vpop.f32.mrb[0].mxu0
        %v2847 = vadd.f32 0.0, %v2846
        %v2848 = vpop.f32.mrb[0].mxu0
        %2849 = vdwg.mxu0
        %v2850 = vadd.f32 %v2773, %v2847
        %v2851 = vxor.u32 %v2850, 2147483648
        %v2852 = vmul.f32 %v2851, 1.442695
        %v2853 = vpow.pop %v2852
        %v2854 = vadd.f32 %v2853, 1.0
        %v2855 = vrcp.pop %v2854
        %v2856 = vmul.f32 1.0, %v2855
        %v2857 = vtanh.pop %v2850
        %2859 = vrot.lane.b32.xlu0 %v2857, 64
        %v2860 = vpop.permute.xlu0 %2859
        %v2862 = vmul.f32 %v2856, %v2860
        %2864 = vrot.lane.b32.xlu0 %v2172, 32
        %v2865 = vpop.permute.xlu0 %2864
        %v2867 = vmul.f32 %v2856, %v2865
        %2869 = vrot.lane.b32.xlu0 %v2867, 96
        %v2870 = vpop.permute.xlu0 %2869
        %v2872 = vadd.f32 %v2862, %v2870
        %v2873 = vtanh.pop %v2872
        %2875 = vrot.lane.b32.xlu0 %v2873, 96
        %v2876 = vpop.permute.xlu0 %2875
        %v2878 = vmul.f32 %v2856, %v2876
        %v2879 = vld [vmem:[#allocation12] sm:$0xff]
        %v2880 = vld [vmem:[#allocation12 + $0x8] sm:$0xff]
        %v2881 = vld [vmem:[#allocation12 + $0x10] sm:$0xff]
        %v2882 = vld [vmem:[#allocation12 + $0x18] sm:$0xff]
        %2884 = vrot.lane.b32.xlu0 %v2878, 32
        %v2885 = vpop.permute.xlu0 %2884
        %v2886 = vsel %vm670, %v2885, 0
        %2888 = vmatprep.subr.mxu0 0.0
        %2889 = vmatpush1.msra.mxu0 %v2879
        %2890 = vmatprep.subr.mxu0 0.0
        %2891 = vmatpush1.msra.mxu0 %v2880
        %2892 = vmatprep.subr.mxu0 0.0
        %2893 = vmatpush1.msra.mxu0 %v2881
        %2894 = vmatprep.subr.mxu0 0.0
        %2895 = vmatpush1.msra.mxu0 %v2882
        %2896 = vmatprep.subr.mxu0 0.0
        %2897 = vmatpush1.msra.mxu0 0.0
        %2898 = vmatprep.subr.mxu0 0.0
        %2899 = vmatpush1.msra.mxu0 0.0
        %2900 = vmatprep.subr.mxu0 0.0
        %2901 = vmatpush1.msra.mxu0 0.0
        %2902 = vmatprep.subr.mxu0 0.0
        %2903 = vmatpush1.msra.mxu0 0.0
        %2904 = vmatprep.subr.mxu0 0.0
        %2905 = vmatpush1.msra.mxu0 0.0
        %2906 = vmatprep.subr.mxu0 0.0
        %2907 = vmatpush1.msra.mxu0 0.0
        %2908 = vmatprep.subr.mxu0 0.0
        %2909 = vmatpush1.msra.mxu0 0.0
        %2910 = vmatprep.subr.mxu0 0.0
        %2911 = vmatpush1.msra.mxu0 0.0
        %2912 = vmatprep.subr.mxu0 0.0
        %2913 = vmatpush1.msra.mxu0 0.0
        %2914 = vmatprep.subr.mxu0 0.0
        %2915 = vmatpush1.msra.mxu0 0.0
        %2916 = vmatprep.subr.mxu0 0.0
        %2917 = vmatpush1.msra.mxu0 0.0
        %2918 = vmatprep.subr.mxu0 0.0
        %2919 = vmatpush1.msra.mxu0 0.0
        %2920 = vmatprep.subr.mxu0 0.0
        %2921 = vmatpush1.msra.mxu0 0.0
        %2922 = vmatprep.subr.mxu0 0.0
        %2923 = vmatpush1.msra.mxu0 0.0
        %2924 = vmatprep.subr.mxu0 0.0
        %2925 = vmatpush1.msra.mxu0 0.0
        %2926 = vmatprep.subr.mxu0 0.0
        %2927 = vmatpush1.msra.mxu0 0.0
        %2928 = vmatprep.subr.mxu0 0.0
        %2929 = vmatpush1.msra.mxu0 0.0
        %2930 = vmatprep.subr.mxu0 0.0
        %2931 = vmatpush1.msra.mxu0 0.0
        %2932 = vmatprep.subr.mxu0 0.0
        %2933 = vmatpush1.msra.mxu0 0.0
        %2934 = vmatprep.subr.mxu0 0.0
        %2935 = vmatpush1.msra.mxu0 0.0
        %2936 = vmatprep.subr.mxu0 0.0
        %2937 = vmatpush1.msra.mxu0 0.0
        %2938 = vmatprep.subr.mxu0 0.0
        %2939 = vmatpush1.msra.mxu0 0.0
        %2940 = vmatprep.subr.mxu0 0.0
        %2941 = vmatpush1.msra.mxu0 0.0
        %2942 = vmatprep.subr.mxu0 0.0
        %2943 = vmatpush1.msra.mxu0 0.0
        %2944 = vmatprep.subr.mxu0 0.0
        %2945 = vmatpush1.msra.mxu0 0.0
        %2946 = vmatprep.subr.mxu0 0.0
        %2947 = vmatpush1.msra.mxu0 0.0
        %2948 = vmatprep.subr.mxu0 0.0
        %2949 = vmatpush1.msra.mxu0 0.0
        %2950 = vmatprep.subr.mxu0 0.0
        %2951 = vmatpush1.msra.mxu0 0.0
        %2952 = vmatprep.mubr.f32.mxu0 0.0
        %2953 = vmatmul.mubr.f32.gmra.mrb[0].mxu0 %v2886
        %v2954 = vpop.f32.mrb[0].mxu0
        %v2955 = vadd.f32 %v662, %v2954
        %v2956 = vpop.f32.mrb[0].mxu0
        %2957 = vdwg.mxu0
        %v2958 = vld [vmem:[#allocation14] sm:$0xff]
        %v2959 = vld [vmem:[#allocation14 + $0x8] sm:$0xff]
        %v2960 = vld [vmem:[#allocation14 + $0x10] sm:$0xff]
        %v2961 = vld [vmem:[#allocation14 + $0x18] sm:$0xff]
        %2962 = vmatprep.subr.mxu0 0.0
        %2963 = vmatpush1.msra.mxu0 %v2958
        %2964 = vmatprep.subr.mxu0 0.0
        %2965 = vmatpush1.msra.mxu0 %v2959
        %2966 = vmatprep.subr.mxu0 0.0
        %2967 = vmatpush1.msra.mxu0 %v2960
        %2968 = vmatprep.subr.mxu0 0.0
        %2969 = vmatpush1.msra.mxu0 %v2961
        %2970 = vmatprep.subr.mxu0 0.0
        %2971 = vmatpush1.msra.mxu0 0.0
        %2972 = vmatprep.subr.mxu0 0.0
        %2973 = vmatpush1.msra.mxu0 0.0
        %2974 = vmatprep.subr.mxu0 0.0
        %2975 = vmatpush1.msra.mxu0 0.0
        %2976 = vmatprep.subr.mxu0 0.0
        %2977 = vmatpush1.msra.mxu0 0.0
        %2978 = vmatprep.subr.mxu0 0.0
        %2979 = vmatpush1.msra.mxu0 0.0
        %2980 = vmatprep.subr.mxu0 0.0
        %2981 = vmatpush1.msra.mxu0 0.0
        %2982 = vmatprep.subr.mxu0 0.0
        %2983 = vmatpush1.msra.mxu0 0.0
        %2984 = vmatprep.subr.mxu0 0.0
        %2985 = vmatpush1.msra.mxu0 0.0
        %2986 = vmatprep.subr.mxu0 0.0
        %2987 = vmatpush1.msra.mxu0 0.0
        %2988 = vmatprep.subr.mxu0 0.0
        %2989 = vmatpush1.msra.mxu0 0.0
        %2990 = vmatprep.subr.mxu0 0.0
        %2991 = vmatpush1.msra.mxu0 0.0
        %2992 = vmatprep.subr.mxu0 0.0
        %2993 = vmatpush1.msra.mxu0 0.0
        %2994 = vmatprep.subr.mxu0 0.0
        %2995 = vmatpush1.msra.mxu0 0.0
        %2996 = vmatprep.subr.mxu0 0.0
        %2997 = vmatpush1.msra.mxu0 0.0
        %2998 = vmatprep.subr.mxu0 0.0
        %2999 = vmatpush1.msra.mxu0 0.0
        %3000 = vmatprep.subr.mxu0 0.0
        %3001 = vmatpush1.msra.mxu0 0.0
        %3002 = vmatprep.subr.mxu0 0.0
        %3003 = vmatpush1.msra.mxu0 0.0
        %3004 = vmatprep.subr.mxu0 0.0
        %3005 = vmatpush1.msra.mxu0 0.0
        %3006 = vmatprep.subr.mxu0 0.0
        %3007 = vmatpush1.msra.mxu0 0.0
        %3008 = vmatprep.subr.mxu0 0.0
        %3009 = vmatpush1.msra.mxu0 0.0
        %3010 = vmatprep.subr.mxu0 0.0
        %3011 = vmatpush1.msra.mxu0 0.0
        %3012 = vmatprep.subr.mxu0 0.0
        %3013 = vmatpush1.msra.mxu0 0.0
        %3014 = vmatprep.subr.mxu0 0.0
        %3015 = vmatpush1.msra.mxu0 0.0
        %3016 = vmatprep.subr.mxu0 0.0
        %3017 = vmatpush1.msra.mxu0 0.0
        %3018 = vmatprep.subr.mxu0 0.0
        %3019 = vmatpush1.msra.mxu0 0.0
        %3020 = vmatprep.subr.mxu0 0.0
        %3021 = vmatpush1.msra.mxu0 0.0
        %3022 = vmatprep.subr.mxu0 0.0
        %3023 = vmatpush1.msra.mxu0 0.0
        %3024 = vmatprep.subr.mxu0 0.0
        %3025 = vmatpush1.msra.mxu0 0.0
        %3026 = vmatprep.mubr.f32.mxu0 0.0
        %3027 = vmatmul.mubr.f32.gmra.mrb[0].mxu0 %v2364
        %v3028 = vpop.f32.mrb[0].mxu0
        %v3029 = vadd.f32 0.0, %v3028
        %v3030 = vpop.f32.mrb[0].mxu0
        %3031 = vdwg.mxu0
        %v3032 = vadd.f32 %v2955, %v3029
        %v3033 = vxor.u32 %v3032, 2147483648
        %v3034 = vmul.f32 %v3033, 1.442695
        %v3035 = vpow.pop %v3034
        %v3036 = vadd.f32 %v3035, 1.0
        %v3037 = vrcp.pop %v3036
        %v3038 = vmul.f32 1.0, %v3037
        %v3039 = vtanh.pop %v3032
        %3041 = vrot.lane.b32.xlu0 %v3039, 64
        %v3042 = vpop.permute.xlu0 %3041
        %v3044 = vmul.f32 %v3038, %v3042
        %3046 = vrot.lane.b32.xlu0 %v2354, 32
        %v3047 = vpop.permute.xlu0 %3046
        %v3049 = vmul.f32 %v3038, %v3047
        %3051 = vrot.lane.b32.xlu0 %v3049, 96
        %v3052 = vpop.permute.xlu0 %3051
        %v3054 = vadd.f32 %v3044, %v3052
        %v3055 = vtanh.pop %v3054
        %3057 = vrot.lane.b32.xlu0 %v3055, 96
        %v3058 = vpop.permute.xlu0 %3057
        %v3060 = vmul.f32 %v3038, %v3058
        %3062 = vrot.lane.b32.xlu0 %v3060, 32
        %v3063 = vpop.permute.xlu0 %3062
        %v3064 = vsel %vm670, %v3063, 0
        %3066 = vmatprep.subr.mxu0 0.0
        %3067 = vmatpush1.msra.mxu0 %v654
        %3068 = vmatprep.subr.mxu0 0.0
        %3069 = vmatpush1.msra.mxu0 %v655
        %3070 = vmatprep.subr.mxu0 0.0
        %3071 = vmatpush1.msra.mxu0 %v656
        %3072 = vmatprep.subr.mxu0 0.0
        %3073 = vmatpush1.msra.mxu0 %v657
        %3074 = vmatprep.subr.mxu0 0.0
        %3075 = vmatpush1.msra.mxu0 0.0
        %3076 = vmatprep.subr.mxu0 0.0
        %3077 = vmatpush1.msra.mxu0 0.0
        %3078 = vmatprep.subr.mxu0 0.0
        %3079 = vmatpush1.msra.mxu0 0.0
        %3080 = vmatprep.subr.mxu0 0.0
        %3081 = vmatpush1.msra.mxu0 0.0
        %3082 = vmatprep.subr.mxu0 0.0
        %3083 = vmatpush1.msra.mxu0 0.0
        %3084 = vmatprep.subr.mxu0 0.0
        %3085 = vmatpush1.msra.mxu0 0.0
        %3086 = vmatprep.subr.mxu0 0.0
        %3087 = vmatpush1.msra.mxu0 0.0
        %3088 = vmatprep.subr.mxu0 0.0
        %3089 = vmatpush1.msra.mxu0 0.0
        %3090 = vmatprep.subr.mxu0 0.0
        %3091 = vmatpush1.msra.mxu0 0.0
        %3092 = vmatprep.subr.mxu0 0.0
        %3093 = vmatpush1.msra.mxu0 0.0
        %3094 = vmatprep.subr.mxu0 0.0
        %3095 = vmatpush1.msra.mxu0 0.0
        %3096 = vmatprep.subr.mxu0 0.0
        %3097 = vmatpush1.msra.mxu0 0.0
        %3098 = vmatprep.subr.mxu0 0.0
        %3099 = vmatpush1.msra.mxu0 0.0
        %3100 = vmatprep.subr.mxu0 0.0
        %3101 = vmatpush1.msra.mxu0 0.0
        %3102 = vmatprep.subr.mxu0 0.0
        %3103 = vmatpush1.msra.mxu0 0.0
        %3104 = vmatprep.subr.mxu0 0.0
        %3105 = vmatpush1.msra.mxu0 0.0
        %3106 = vmatprep.subr.mxu0 0.0
        %3107 = vmatpush1.msra.mxu0 0.0
        %3108 = vmatprep.subr.mxu0 0.0
        %3109 = vmatpush1.msra.mxu0 0.0
        %3110 = vmatprep.subr.mxu0 0.0
        %3111 = vmatpush1.msra.mxu0 0.0
        %3112 = vmatprep.subr.mxu0 0.0
        %3113 = vmatpush1.msra.mxu0 0.0
        %3114 = vmatprep.subr.mxu0 0.0
        %3115 = vmatpush1.msra.mxu0 0.0
        %3116 = vmatprep.subr.mxu0 0.0
        %3117 = vmatpush1.msra.mxu0 0.0
        %3118 = vmatprep.subr.mxu0 0.0
        %3119 = vmatpush1.msra.mxu0 0.0
        %3120 = vmatprep.subr.mxu0 0.0
        %3121 = vmatpush1.msra.mxu0 0.0
        %3122 = vmatprep.subr.mxu0 0.0
        %3123 = vmatpush1.msra.mxu0 0.0
        %3124 = vmatprep.subr.mxu0 0.0
        %3125 = vmatpush1.msra.mxu0 0.0
        %3126 = vmatprep.subr.mxu0 0.0
        %3127 = vmatpush1.msra.mxu0 0.0
        %3128 = vmatprep.subr.mxu0 0.0
        %3129 = vmatpush1.msra.mxu0 0.0
        %3130 = vmatprep.mubr.f32.mxu0 0.0
        %3131 = vmatmul.mubr.f32.gmra.mrb[0].mxu0 %v3064
        %v3132 = vpop.f32.mrb[0].mxu0
        %v3133 = vadd.f32 %v660, %v3132
        %v3134 = vpop.f32.mrb[0].mxu0
        %3135 = vdwg.mxu0
        %vm3136 = vcmp.gt.f32.partialorder %v3133, 0.0
        %v3137 = vmul.f32 %v3133, 0.01
        %v3138 = vsel %vm3136, %v3133, %v3137
        %3139 = vst.msk [vmem:[%s649 + $0x3] sm:$0x1] %vm1034, %v3138
        %s3140 = sadd.s32 %s1036, 4
        %s3141 = smul.u32 %s3140, 128
        %s3142 = sadd.s32 %s3141, %s1041
        %s3143 = sld [smem:[#allocation3 + %s3142]]
        %s3144 = scalar_lea.vmem %s1, %s3143
        %v3145 = vld [vmem:[%s3144] sm:$0x1]
        %v3146 = vld [vmem:[%s7] sm:$0xff]
        %v3147 = vld [vmem:[%s7 + $0x8] sm:$0xff]
        %v3148 = vld [vmem:[%s7 + $0x10] sm:$0xff]
        %v3149 = vld [vmem:[%s7 + $0x18] sm:$0xff]
        %3150 = vmatprep.subr.mxu0 0.0
        %3151 = vmatpush1.msra.mxu0 %v650
        %3152 = vmatprep.subr.mxu0 0.0
        %3153 = vmatpush1.msra.mxu0 %v651
        %3154 = vmatprep.subr.mxu0 0.0
        %3155 = vmatpush1.msra.mxu0 %v652
        %3156 = vmatprep.subr.mxu0 0.0
        %3157 = vmatpush1.msra.mxu0 %v653
        %3158 = vmatprep.subr.mxu0 0.0
        %3159 = vmatpush1.msra.mxu0 0.0
        %3160 = vmatprep.subr.mxu0 0.0
        %3161 = vmatpush1.msra.mxu0 0.0
        %3162 = vmatprep.subr.mxu0 0.0
        %3163 = vmatpush1.msra.mxu0 0.0
        %3164 = vmatprep.subr.mxu0 0.0
        %3165 = vmatpush1.msra.mxu0 0.0
        %3166 = vmatprep.subr.mxu0 0.0
        %3167 = vmatpush1.msra.mxu0 0.0
        %3168 = vmatprep.subr.mxu0 0.0
        %3169 = vmatpush1.msra.mxu0 0.0
        %3170 = vmatprep.subr.mxu0 0.0
        %3171 = vmatpush1.msra.mxu0 0.0
        %3172 = vmatprep.subr.mxu0 0.0
        %3173 = vmatpush1.msra.mxu0 0.0
        %3174 = vmatprep.subr.mxu0 0.0
        %3175 = vmatpush1.msra.mxu0 0.0
        %3176 = vmatprep.subr.mxu0 0.0
        %3177 = vmatpush1.msra.mxu0 0.0
        %3178 = vmatprep.subr.mxu0 0.0
        %3179 = vmatpush1.msra.mxu0 0.0
        %3180 = vmatprep.subr.mxu0 0.0
        %3181 = vmatpush1.msra.mxu0 0.0
        %3182 = vmatprep.subr.mxu0 0.0
        %3183 = vmatpush1.msra.mxu0 0.0
        %3184 = vmatprep.subr.mxu0 0.0
        %3185 = vmatpush1.msra.mxu0 0.0
        %3186 = vmatprep.subr.mxu0 0.0
        %3187 = vmatpush1.msra.mxu0 0.0
        %3188 = vmatprep.subr.mxu0 0.0
        %3189 = vmatpush1.msra.mxu0 0.0
        %3190 = vmatprep.subr.mxu0 0.0
        %3191 = vmatpush1.msra.mxu0 0.0
        %3192 = vmatprep.subr.mxu0 0.0
        %3193 = vmatpush1.msra.mxu0 0.0
        %3194 = vmatprep.subr.mxu0 0.0
        %3195 = vmatpush1.msra.mxu0 0.0
        %3196 = vmatprep.subr.mxu0 0.0
        %3197 = vmatpush1.msra.mxu0 0.0
        %3198 = vmatprep.subr.mxu0 0.0
        %3199 = vmatpush1.msra.mxu0 0.0
        %3200 = vmatprep.subr.mxu0 0.0
        %3201 = vmatpush1.msra.mxu0 0.0
        %3202 = vmatprep.subr.mxu0 0.0
        %3203 = vmatpush1.msra.mxu0 0.0
        %3204 = vmatprep.subr.mxu0 0.0
        %3205 = vmatpush1.msra.mxu0 0.0
        %3206 = vmatprep.subr.mxu0 0.0
        %3207 = vmatpush1.msra.mxu0 0.0
        %3208 = vmatprep.subr.mxu0 0.0
        %3209 = vmatpush1.msra.mxu0 0.0
        %3210 = vmatprep.subr.mxu0 0.0
        %3211 = vmatpush1.msra.mxu0 0.0
        %3212 = vmatprep.subr.mxu0 0.0
        %3213 = vmatpush1.msra.mxu0 0.0
        %3214 = vmatprep.mubr.f32.mxu0 0.0
        %3215 = vmatmul.mubr.f32.gmra.mrb[0].mxu0 %v3064
        %v3216 = vpop.f32.mrb[0].mxu0
        %v3217 = vadd.f32 0.0, %v3216
        %v3218 = vpop.f32.mrb[0].mxu0
        %3219 = vdwg.mxu0
        %v3221 = vsel %vm670, %v3145, 0
        %3223 = vmatprep.subr.mxu0 0.0
        %3224 = vmatpush1.msra.mxu0 %v3146
        %3225 = vmatprep.subr.mxu0 0.0
        %3226 = vmatpush1.msra.mxu0 %v3147
        %3227 = vmatprep.subr.mxu0 0.0
        %3228 = vmatpush1.msra.mxu0 %v3148
        %3229 = vmatprep.subr.mxu0 0.0
        %3230 = vmatpush1.msra.mxu0 %v3149
        %3231 = vmatprep.subr.mxu0 0.0
        %3232 = vmatpush1.msra.mxu0 0.0
        %3233 = vmatprep.subr.mxu0 0.0
        %3234 = vmatpush1.msra.mxu0 0.0
        %3235 = vmatprep.subr.mxu0 0.0
        %3236 = vmatpush1.msra.mxu0 0.0
        %3237 = vmatprep.subr.mxu0 0.0
        %3238 = vmatpush1.msra.mxu0 0.0
        %3239 = vmatprep.subr.mxu0 0.0
        %3240 = vmatpush1.msra.mxu0 0.0
        %3241 = vmatprep.subr.mxu0 0.0
        %3242 = vmatpush1.msra.mxu0 0.0
        %3243 = vmatprep.subr.mxu0 0.0
        %3244 = vmatpush1.msra.mxu0 0.0
        %3245 = vmatprep.subr.mxu0 0.0
        %3246 = vmatpush1.msra.mxu0 0.0
        %3247 = vmatprep.subr.mxu0 0.0
        %3248 = vmatpush1.msra.mxu0 0.0
        %3249 = vmatprep.subr.mxu0 0.0
        %3250 = vmatpush1.msra.mxu0 0.0
        %3251 = vmatprep.subr.mxu0 0.0
        %3252 = vmatpush1.msra.mxu0 0.0
        %3253 = vmatprep.subr.mxu0 0.0
        %3254 = vmatpush1.msra.mxu0 0.0
        %3255 = vmatprep.subr.mxu0 0.0
        %3256 = vmatpush1.msra.mxu0 0.0
        %3257 = vmatprep.subr.mxu0 0.0
        %3258 = vmatpush1.msra.mxu0 0.0
        %3259 = vmatprep.subr.mxu0 0.0
        %3260 = vmatpush1.msra.mxu0 0.0
        %3261 = vmatprep.subr.mxu0 0.0
        %3262 = vmatpush1.msra.mxu0 0.0
        %3263 = vmatprep.subr.mxu0 0.0
        %3264 = vmatpush1.msra.mxu0 0.0
        %3265 = vmatprep.subr.mxu0 0.0
        %3266 = vmatpush1.msra.mxu0 0.0
        %3267 = vmatprep.subr.mxu0 0.0
        %3268 = vmatpush1.msra.mxu0 0.0
        %3269 = vmatprep.subr.mxu0 0.0
        %3270 = vmatpush1.msra.mxu0 0.0
        %3271 = vmatprep.subr.mxu0 0.0
        %3272 = vmatpush1.msra.mxu0 0.0
        %3273 = vmatprep.subr.mxu0 0.0
        %3274 = vmatpush1.msra.mxu0 0.0
        %3275 = vmatprep.subr.mxu0 0.0
        %3276 = vmatpush1.msra.mxu0 0.0
        %3277 = vmatprep.subr.mxu0 0.0
        %3278 = vmatpush1.msra.mxu0 0.0
        %3279 = vmatprep.subr.mxu0 0.0
        %3280 = vmatpush1.msra.mxu0 0.0
        %3281 = vmatprep.subr.mxu0 0.0
        %3282 = vmatpush1.msra.mxu0 0.0
        %3283 = vmatprep.subr.mxu0 0.0
        %3284 = vmatpush1.msra.mxu0 0.0
        %3285 = vmatprep.subr.mxu0 0.0
        %3286 = vmatpush1.msra.mxu0 0.0
        %3287 = vmatprep.mubr.f32.mxu0 0.0
        %3288 = vmatmul.mubr.f32.gmra.mrb[0].mxu0 %v3221
        %v3289 = vpop.f32.mrb[0].mxu0
        %v3290 = vadd.f32 %v3217, %v3289
        %v3291 = vpop.f32.mrb[0].mxu0
        %3292 = vdwg.mxu0
        %v3293 = vld [vmem:[%s8] sm:$0xff]
        %v3294 = vld [vmem:[%s8 + $0x8] sm:$0xff]
        %v3295 = vld [vmem:[%s8 + $0x10] sm:$0xff]
        %v3296 = vld [vmem:[%s8 + $0x18] sm:$0xff]
        %3297 = vmatprep.subr.mxu0 0.0
        %3298 = vmatpush1.msra.mxu0 %v3293
        %3299 = vmatprep.subr.mxu0 0.0
        %3300 = vmatpush1.msra.mxu0 %v3294
        %3301 = vmatprep.subr.mxu0 0.0
        %3302 = vmatpush1.msra.mxu0 %v3295
        %3303 = vmatprep.subr.mxu0 0.0
        %3304 = vmatpush1.msra.mxu0 %v3296
        %3305 = vmatprep.subr.mxu0 0.0
        %3306 = vmatpush1.msra.mxu0 0.0
        %3307 = vmatprep.subr.mxu0 0.0
        %3308 = vmatpush1.msra.mxu0 0.0
        %3309 = vmatprep.subr.mxu0 0.0
        %3310 = vmatpush1.msra.mxu0 0.0
        %3311 = vmatprep.subr.mxu0 0.0
        %3312 = vmatpush1.msra.mxu0 0.0
        %3313 = vmatprep.subr.mxu0 0.0
        %3314 = vmatpush1.msra.mxu0 0.0
        %3315 = vmatprep.subr.mxu0 0.0
        %3316 = vmatpush1.msra.mxu0 0.0
        %3317 = vmatprep.subr.mxu0 0.0
        %3318 = vmatpush1.msra.mxu0 0.0
        %3319 = vmatprep.subr.mxu0 0.0
        %3320 = vmatpush1.msra.mxu0 0.0
        %3321 = vmatprep.subr.mxu0 0.0
        %3322 = vmatpush1.msra.mxu0 0.0
        %3323 = vmatprep.subr.mxu0 0.0
        %3324 = vmatpush1.msra.mxu0 0.0
        %3325 = vmatprep.subr.mxu0 0.0
        %3326 = vmatpush1.msra.mxu0 0.0
        %3327 = vmatprep.subr.mxu0 0.0
        %3328 = vmatpush1.msra.mxu0 0.0
        %3329 = vmatprep.subr.mxu0 0.0
        %3330 = vmatpush1.msra.mxu0 0.0
        %3331 = vmatprep.subr.mxu0 0.0
        %3332 = vmatpush1.msra.mxu0 0.0
        %3333 = vmatprep.subr.mxu0 0.0
        %3334 = vmatpush1.msra.mxu0 0.0
        %3335 = vmatprep.subr.mxu0 0.0
        %3336 = vmatpush1.msra.mxu0 0.0
        %3337 = vmatprep.subr.mxu0 0.0
        %3338 = vmatpush1.msra.mxu0 0.0
        %3339 = vmatprep.subr.mxu0 0.0
        %3340 = vmatpush1.msra.mxu0 0.0
        %3341 = vmatprep.subr.mxu0 0.0
        %3342 = vmatpush1.msra.mxu0 0.0
        %3343 = vmatprep.subr.mxu0 0.0
        %3344 = vmatpush1.msra.mxu0 0.0
        %3345 = vmatprep.subr.mxu0 0.0
        %3346 = vmatpush1.msra.mxu0 0.0
        %3347 = vmatprep.subr.mxu0 0.0
        %3348 = vmatpush1.msra.mxu0 0.0
        %3349 = vmatprep.subr.mxu0 0.0
        %3350 = vmatpush1.msra.mxu0 0.0
        %3351 = vmatprep.subr.mxu0 0.0
        %3352 = vmatpush1.msra.mxu0 0.0
        %3353 = vmatprep.subr.mxu0 0.0
        %3354 = vmatpush1.msra.mxu0 0.0
        %3355 = vmatprep.subr.mxu0 0.0
        %3356 = vmatpush1.msra.mxu0 0.0
        %3357 = vmatprep.subr.mxu0 0.0
        %3358 = vmatpush1.msra.mxu0 0.0
        %3359 = vmatprep.subr.mxu0 0.0
        %3360 = vmatpush1.msra.mxu0 0.0
        %3361 = vmatprep.mubr.f32.mxu0 0.0
        %3362 = vmatmul.mubr.f32.gmra.mrb[0].mxu0 %v2704
        %v3363 = vpop.f32.mrb[0].mxu0
        %v3364 = vadd.f32 0.0, %v3363
        %v3365 = vpop.f32.mrb[0].mxu0
        %3366 = vdwg.mxu0
        %v3367 = vadd.f32 %v3290, %v3364
        %v3368 = vadd.f32 %v3367, %v658
        %v3369 = vxor.u32 %v3368, 2147483648
        %v3370 = vmul.f32 %v3369, 1.442695
        %v3371 = vpow.pop %v3370
        %v3372 = vadd.f32 %v3371, 1.0
        %v3373 = vrcp.pop %v3372
        %v3374 = vmul.f32 1.0, %v3373
        %v3375 = vtanh.pop %v3368
        %3377 = vrot.lane.b32.xlu0 %v3375, 64
        %v3378 = vpop.permute.xlu0 %3377
        %v3380 = vmul.f32 %v3374, %v3378
        %3382 = vrot.lane.b32.xlu0 %v2690, 32
        %v3383 = vpop.permute.xlu0 %3382
        %v3385 = vmul.f32 %v3374, %v3383
        %3387 = vrot.lane.b32.xlu0 %v3385, 96
        %v3388 = vpop.permute.xlu0 %3387
        %v3390 = vadd.f32 %v3380, %v3388
        %v3391 = vtanh.pop %v3390
        %3393 = vrot.lane.b32.xlu0 %v3391, 96
        %v3394 = vpop.permute.xlu0 %3393
        %v3396 = vmul.f32 %v3374, %v3394
        %v3397 = vld [vmem:[#allocation9] sm:$0xff]
        %v3398 = vld [vmem:[#allocation9 + $0x8] sm:$0xff]
        %v3399 = vld [vmem:[#allocation9 + $0x10] sm:$0xff]
        %v3400 = vld [vmem:[#allocation9 + $0x18] sm:$0xff]
        %3402 = vrot.lane.b32.xlu0 %v3396, 32
        %v3403 = vpop.permute.xlu0 %3402
        %v3404 = vsel %vm670, %v3403, 0
        %3406 = vmatprep.subr.mxu0 0.0
        %3407 = vmatpush1.msra.mxu0 %v3397
        %3408 = vmatprep.subr.mxu0 0.0
        %3409 = vmatpush1.msra.mxu0 %v3398
        %3410 = vmatprep.subr.mxu0 0.0
        %3411 = vmatpush1.msra.mxu0 %v3399
        %3412 = vmatprep.subr.mxu0 0.0
        %3413 = vmatpush1.msra.mxu0 %v3400
        %3414 = vmatprep.subr.mxu0 0.0
        %3415 = vmatpush1.msra.mxu0 0.0
        %3416 = vmatprep.subr.mxu0 0.0
        %3417 = vmatpush1.msra.mxu0 0.0
        %3418 = vmatprep.subr.mxu0 0.0
        %3419 = vmatpush1.msra.mxu0 0.0
        %3420 = vmatprep.subr.mxu0 0.0
        %3421 = vmatpush1.msra.mxu0 0.0
        %3422 = vmatprep.subr.mxu0 0.0
        %3423 = vmatpush1.msra.mxu0 0.0
        %3424 = vmatprep.subr.mxu0 0.0
        %3425 = vmatpush1.msra.mxu0 0.0
        %3426 = vmatprep.subr.mxu0 0.0
        %3427 = vmatpush1.msra.mxu0 0.0
        %3428 = vmatprep.subr.mxu0 0.0
        %3429 = vmatpush1.msra.mxu0 0.0
        %3430 = vmatprep.subr.mxu0 0.0
        %3431 = vmatpush1.msra.mxu0 0.0
        %3432 = vmatprep.subr.mxu0 0.0
        %3433 = vmatpush1.msra.mxu0 0.0
        %3434 = vmatprep.subr.mxu0 0.0
        %3435 = vmatpush1.msra.mxu0 0.0
        %3436 = vmatprep.subr.mxu0 0.0
        %3437 = vmatpush1.msra.mxu0 0.0
        %3438 = vmatprep.subr.mxu0 0.0
        %3439 = vmatpush1.msra.mxu0 0.0
        %3440 = vmatprep.subr.mxu0 0.0
        %3441 = vmatpush1.msra.mxu0 0.0
        %3442 = vmatprep.subr.mxu0 0.0
        %3443 = vmatpush1.msra.mxu0 0.0
        %3444 = vmatprep.subr.mxu0 0.0
        %3445 = vmatpush1.msra.mxu0 0.0
        %3446 = vmatprep.subr.mxu0 0.0
        %3447 = vmatpush1.msra.mxu0 0.0
        %3448 = vmatprep.subr.mxu0 0.0
        %3449 = vmatpush1.msra.mxu0 0.0
        %3450 = vmatprep.subr.mxu0 0.0
        %3451 = vmatpush1.msra.mxu0 0.0
        %3452 = vmatprep.subr.mxu0 0.0
        %3453 = vmatpush1.msra.mxu0 0.0
        %3454 = vmatprep.subr.mxu0 0.0
        %3455 = vmatpush1.msra.mxu0 0.0
        %3456 = vmatprep.subr.mxu0 0.0
        %3457 = vmatpush1.msra.mxu0 0.0
        %3458 = vmatprep.subr.mxu0 0.0
        %3459 = vmatpush1.msra.mxu0 0.0
        %3460 = vmatprep.subr.mxu0 0.0
        %3461 = vmatpush1.msra.mxu0 0.0
        %3462 = vmatprep.subr.mxu0 0.0
        %3463 = vmatpush1.msra.mxu0 0.0
        %3464 = vmatprep.subr.mxu0 0.0
        %3465 = vmatpush1.msra.mxu0 0.0
        %3466 = vmatprep.subr.mxu0 0.0
        %3467 = vmatpush1.msra.mxu0 0.0
        %3468 = vmatprep.subr.mxu0 0.0
        %3469 = vmatpush1.msra.mxu0 0.0
        %3470 = vmatprep.mubr.f32.mxu0 0.0
        %3471 = vmatmul.mubr.f32.gmra.mrb[0].mxu0 %v3404
        %v3472 = vpop.f32.mrb[0].mxu0
        %v3473 = vadd.f32 %v661, %v3472
        %v3474 = vpop.f32.mrb[0].mxu0
        %3475 = vdwg.mxu0
        %v3476 = vld [vmem:[#allocation11] sm:$0xff]
        %v3477 = vld [vmem:[#allocation11 + $0x8] sm:$0xff]
        %v3478 = vld [vmem:[#allocation11 + $0x10] sm:$0xff]
        %v3479 = vld [vmem:[#allocation11 + $0x18] sm:$0xff]
        %3480 = vmatprep.subr.mxu0 0.0
        %3481 = vmatpush1.msra.mxu0 %v3476
        %3482 = vmatprep.subr.mxu0 0.0
        %3483 = vmatpush1.msra.mxu0 %v3477
        %3484 = vmatprep.subr.mxu0 0.0
        %3485 = vmatpush1.msra.mxu0 %v3478
        %3486 = vmatprep.subr.mxu0 0.0
        %3487 = vmatpush1.msra.mxu0 %v3479
        %3488 = vmatprep.subr.mxu0 0.0
        %3489 = vmatpush1.msra.mxu0 0.0
        %3490 = vmatprep.subr.mxu0 0.0
        %3491 = vmatpush1.msra.mxu0 0.0
        %3492 = vmatprep.subr.mxu0 0.0
        %3493 = vmatpush1.msra.mxu0 0.0
        %3494 = vmatprep.subr.mxu0 0.0
        %3495 = vmatpush1.msra.mxu0 0.0
        %3496 = vmatprep.subr.mxu0 0.0
        %3497 = vmatpush1.msra.mxu0 0.0
        %3498 = vmatprep.subr.mxu0 0.0
        %3499 = vmatpush1.msra.mxu0 0.0
        %3500 = vmatprep.subr.mxu0 0.0
        %3501 = vmatpush1.msra.mxu0 0.0
        %3502 = vmatprep.subr.mxu0 0.0
        %3503 = vmatpush1.msra.mxu0 0.0
        %3504 = vmatprep.subr.mxu0 0.0
        %3505 = vmatpush1.msra.mxu0 0.0
        %3506 = vmatprep.subr.mxu0 0.0
        %3507 = vmatpush1.msra.mxu0 0.0
        %3508 = vmatprep.subr.mxu0 0.0
        %3509 = vmatpush1.msra.mxu0 0.0
        %3510 = vmatprep.subr.mxu0 0.0
        %3511 = vmatpush1.msra.mxu0 0.0
        %3512 = vmatprep.subr.mxu0 0.0
        %3513 = vmatpush1.msra.mxu0 0.0
        %3514 = vmatprep.subr.mxu0 0.0
        %3515 = vmatpush1.msra.mxu0 0.0
        %3516 = vmatprep.subr.mxu0 0.0
        %3517 = vmatpush1.msra.mxu0 0.0
        %3518 = vmatprep.subr.mxu0 0.0
        %3519 = vmatpush1.msra.mxu0 0.0
        %3520 = vmatprep.subr.mxu0 0.0
        %3521 = vmatpush1.msra.mxu0 0.0
        %3522 = vmatprep.subr.mxu0 0.0
        %3523 = vmatpush1.msra.mxu0 0.0
        %3524 = vmatprep.subr.mxu0 0.0
        %3525 = vmatpush1.msra.mxu0 0.0
        %3526 = vmatprep.subr.mxu0 0.0
        %3527 = vmatpush1.msra.mxu0 0.0
        %3528 = vmatprep.subr.mxu0 0.0
        %3529 = vmatpush1.msra.mxu0 0.0
        %3530 = vmatprep.subr.mxu0 0.0
        %3531 = vmatpush1.msra.mxu0 0.0
        %3532 = vmatprep.subr.mxu0 0.0
        %3533 = vmatpush1.msra.mxu0 0.0
        %3534 = vmatprep.subr.mxu0 0.0
        %3535 = vmatpush1.msra.mxu0 0.0
        %3536 = vmatprep.subr.mxu0 0.0
        %3537 = vmatpush1.msra.mxu0 0.0
        %3538 = vmatprep.subr.mxu0 0.0
        %3539 = vmatpush1.msra.mxu0 0.0
        %3540 = vmatprep.subr.mxu0 0.0
        %3541 = vmatpush1.msra.mxu0 0.0
        %3542 = vmatprep.subr.mxu0 0.0
        %3543 = vmatpush1.msra.mxu0 0.0
        %3544 = vmatprep.mubr.f32.mxu0 0.0
        %3545 = vmatmul.mubr.f32.gmra.mrb[0].mxu0 %v2886
        %v3546 = vpop.f32.mrb[0].mxu0
        %v3547 = vadd.f32 0.0, %v3546
        %v3548 = vpop.f32.mrb[0].mxu0
        %3549 = vdwg.mxu0
        %v3550 = vadd.f32 %v3473, %v3547
        %v3551 = vxor.u32 %v3550, 2147483648
        %v3552 = vmul.f32 %v3551, 1.442695
        %v3553 = vpow.pop %v3552
        %v3554 = vadd.f32 %v3553, 1.0
        %v3555 = vrcp.pop %v3554
        %v3556 = vmul.f32 1.0, %v3555
        %v3557 = vtanh.pop %v3550
        %3559 = vrot.lane.b32.xlu0 %v3557, 64
        %v3560 = vpop.permute.xlu0 %3559
        %v3562 = vmul.f32 %v3556, %v3560
        %3564 = vrot.lane.b32.xlu0 %v2872, 32
        %v3565 = vpop.permute.xlu0 %3564
        %v3567 = vmul.f32 %v3556, %v3565
        %3569 = vrot.lane.b32.xlu0 %v3567, 96
        %v3570 = vpop.permute.xlu0 %3569
        %v3572 = vadd.f32 %v3562, %v3570
        %v3573 = vtanh.pop %v3572
        %3575 = vrot.lane.b32.xlu0 %v3573, 96
        %v3576 = vpop.permute.xlu0 %3575
        %v3578 = vmul.f32 %v3556, %v3576
        %v3579 = vld [vmem:[#allocation12] sm:$0xff]
        %v3580 = vld [vmem:[#allocation12 + $0x8] sm:$0xff]
        %v3581 = vld [vmem:[#allocation12 + $0x10] sm:$0xff]
        %v3582 = vld [vmem:[#allocation12 + $0x18] sm:$0xff]
        %3584 = vrot.lane.b32.xlu0 %v3578, 32
        %v3585 = vpop.permute.xlu0 %3584
        %v3586 = vsel %vm670, %v3585, 0
        %3588 = vmatprep.subr.mxu0 0.0
        %3589 = vmatpush1.msra.mxu0 %v3579
        %3590 = vmatprep.subr.mxu0 0.0
        %3591 = vmatpush1.msra.mxu0 %v3580
        %3592 = vmatprep.subr.mxu0 0.0
        %3593 = vmatpush1.msra.mxu0 %v3581
        %3594 = vmatprep.subr.mxu0 0.0
        %3595 = vmatpush1.msra.mxu0 %v3582
        %3596 = vmatprep.subr.mxu0 0.0
        %3597 = vmatpush1.msra.mxu0 0.0
        %3598 = vmatprep.subr.mxu0 0.0
        %3599 = vmatpush1.msra.mxu0 0.0
        %3600 = vmatprep.subr.mxu0 0.0
        %3601 = vmatpush1.msra.mxu0 0.0
        %3602 = vmatprep.subr.mxu0 0.0
        %3603 = vmatpush1.msra.mxu0 0.0
        %3604 = vmatprep.subr.mxu0 0.0
        %3605 = vmatpush1.msra.mxu0 0.0
        %3606 = vmatprep.subr.mxu0 0.0
        %3607 = vmatpush1.msra.mxu0 0.0
        %3608 = vmatprep.subr.mxu0 0.0
        %3609 = vmatpush1.msra.mxu0 0.0
        %3610 = vmatprep.subr.mxu0 0.0
        %3611 = vmatpush1.msra.mxu0 0.0
        %3612 = vmatprep.subr.mxu0 0.0
        %3613 = vmatpush1.msra.mxu0 0.0
        %3614 = vmatprep.subr.mxu0 0.0
        %3615 = vmatpush1.msra.mxu0 0.0
        %3616 = vmatprep.subr.mxu0 0.0
        %3617 = vmatpush1.msra.mxu0 0.0
        %3618 = vmatprep.subr.mxu0 0.0
        %3619 = vmatpush1.msra.mxu0 0.0
        %3620 = vmatprep.subr.mxu0 0.0
        %3621 = vmatpush1.msra.mxu0 0.0
        %3622 = vmatprep.subr.mxu0 0.0
        %3623 = vmatpush1.msra.mxu0 0.0
        %3624 = vmatprep.subr.mxu0 0.0
        %3625 = vmatpush1.msra.mxu0 0.0
        %3626 = vmatprep.subr.mxu0 0.0
        %3627 = vmatpush1.msra.mxu0 0.0
        %3628 = vmatprep.subr.mxu0 0.0
        %3629 = vmatpush1.msra.mxu0 0.0
        %3630 = vmatprep.subr.mxu0 0.0
        %3631 = vmatpush1.msra.mxu0 0.0
        %3632 = vmatprep.subr.mxu0 0.0
        %3633 = vmatpush1.msra.mxu0 0.0
        %3634 = vmatprep.subr.mxu0 0.0
        %3635 = vmatpush1.msra.mxu0 0.0
        %3636 = vmatprep.subr.mxu0 0.0
        %3637 = vmatpush1.msra.mxu0 0.0
        %3638 = vmatprep.subr.mxu0 0.0
        %3639 = vmatpush1.msra.mxu0 0.0
        %3640 = vmatprep.subr.mxu0 0.0
        %3641 = vmatpush1.msra.mxu0 0.0
        %3642 = vmatprep.subr.mxu0 0.0
        %3643 = vmatpush1.msra.mxu0 0.0
        %3644 = vmatprep.subr.mxu0 0.0
        %3645 = vmatpush1.msra.mxu0 0.0
        %3646 = vmatprep.subr.mxu0 0.0
        %3647 = vmatpush1.msra.mxu0 0.0
        %3648 = vmatprep.subr.mxu0 0.0
        %3649 = vmatpush1.msra.mxu0 0.0
        %3650 = vmatprep.subr.mxu0 0.0
        %3651 = vmatpush1.msra.mxu0 0.0
        %3652 = vmatprep.mubr.f32.mxu0 0.0
        %3653 = vmatmul.mubr.f32.gmra.mrb[0].mxu0 %v3586
        %v3654 = vpop.f32.mrb[0].mxu0
        %v3655 = vadd.f32 %v662, %v3654
        %v3656 = vpop.f32.mrb[0].mxu0
        %3657 = vdwg.mxu0
        %v3658 = vld [vmem:[#allocation14] sm:$0xff]
        %v3659 = vld [vmem:[#allocation14 + $0x8] sm:$0xff]
        %v3660 = vld [vmem:[#allocation14 + $0x10] sm:$0xff]
        %v3661 = vld [vmem:[#allocation14 + $0x18] sm:$0xff]
        %3662 = vmatprep.subr.mxu0 0.0
        %3663 = vmatpush1.msra.mxu0 %v3658
        %3664 = vmatprep.subr.mxu0 0.0
        %3665 = vmatpush1.msra.mxu0 %v3659
        %3666 = vmatprep.subr.mxu0 0.0
        %3667 = vmatpush1.msra.mxu0 %v3660
        %3668 = vmatprep.subr.mxu0 0.0
        %3669 = vmatpush1.msra.mxu0 %v3661
        %3670 = vmatprep.subr.mxu0 0.0
        %3671 = vmatpush1.msra.mxu0 0.0
        %3672 = vmatprep.subr.mxu0 0.0
        %3673 = vmatpush1.msra.mxu0 0.0
        %3674 = vmatprep.subr.mxu0 0.0
        %3675 = vmatpush1.msra.mxu0 0.0
        %3676 = vmatprep.subr.mxu0 0.0
        %3677 = vmatpush1.msra.mxu0 0.0
        %3678 = vmatprep.subr.mxu0 0.0
        %3679 = vmatpush1.msra.mxu0 0.0
        %3680 = vmatprep.subr.mxu0 0.0
        %3681 = vmatpush1.msra.mxu0 0.0
        %3682 = vmatprep.subr.mxu0 0.0
        %3683 = vmatpush1.msra.mxu0 0.0
        %3684 = vmatprep.subr.mxu0 0.0
        %3685 = vmatpush1.msra.mxu0 0.0
        %3686 = vmatprep.subr.mxu0 0.0
        %3687 = vmatpush1.msra.mxu0 0.0
        %3688 = vmatprep.subr.mxu0 0.0
        %3689 = vmatpush1.msra.mxu0 0.0
        %3690 = vmatprep.subr.mxu0 0.0
        %3691 = vmatpush1.msra.mxu0 0.0
        %3692 = vmatprep.subr.mxu0 0.0
        %3693 = vmatpush1.msra.mxu0 0.0
        %3694 = vmatprep.subr.mxu0 0.0
        %3695 = vmatpush1.msra.mxu0 0.0
        %3696 = vmatprep.subr.mxu0 0.0
        %3697 = vmatpush1.msra.mxu0 0.0
        %3698 = vmatprep.subr.mxu0 0.0
        %3699 = vmatpush1.msra.mxu0 0.0
        %3700 = vmatprep.subr.mxu0 0.0
        %3701 = vmatpush1.msra.mxu0 0.0
        %3702 = vmatprep.subr.mxu0 0.0
        %3703 = vmatpush1.msra.mxu0 0.0
        %3704 = vmatprep.subr.mxu0 0.0
        %3705 = vmatpush1.msra.mxu0 0.0
        %3706 = vmatprep.subr.mxu0 0.0
        %3707 = vmatpush1.msra.mxu0 0.0
        %3708 = vmatprep.subr.mxu0 0.0
        %3709 = vmatpush1.msra.mxu0 0.0
        %3710 = vmatprep.subr.mxu0 0.0
        %3711 = vmatpush1.msra.mxu0 0.0
        %3712 = vmatprep.subr.mxu0 0.0
        %3713 = vmatpush1.msra.mxu0 0.0
        %3714 = vmatprep.subr.mxu0 0.0
        %3715 = vmatpush1.msra.mxu0 0.0
        %3716 = vmatprep.subr.mxu0 0.0
        %3717 = vmatpush1.msra.mxu0 0.0
        %3718 = vmatprep.subr.mxu0 0.0
        %3719 = vmatpush1.msra.mxu0 0.0
        %3720 = vmatprep.subr.mxu0 0.0
        %3721 = vmatpush1.msra.mxu0 0.0
        %3722 = vmatprep.subr.mxu0 0.0
        %3723 = vmatpush1.msra.mxu0 0.0
        %3724 = vmatprep.subr.mxu0 0.0
        %3725 = vmatpush1.msra.mxu0 0.0
        %3726 = vmatprep.mubr.f32.mxu0 0.0
        %3727 = vmatmul.mubr.f32.gmra.mrb[0].mxu0 %v3064
        %v3728 = vpop.f32.mrb[0].mxu0
        %v3729 = vadd.f32 0.0, %v3728
        %v3730 = vpop.f32.mrb[0].mxu0
        %3731 = vdwg.mxu0
        %v3732 = vadd.f32 %v3655, %v3729
        %v3733 = vxor.u32 %v3732, 2147483648
        %v3734 = vmul.f32 %v3733, 1.442695
        %v3735 = vpow.pop %v3734
        %v3736 = vadd.f32 %v3735, 1.0
        %v3737 = vrcp.pop %v3736
        %v3738 = vmul.f32 1.0, %v3737
        %v3739 = vtanh.pop %v3732
        %3741 = vrot.lane.b32.xlu0 %v3739, 64
        %v3742 = vpop.permute.xlu0 %3741
        %v3744 = vmul.f32 %v3738, %v3742
        %3746 = vrot.lane.b32.xlu0 %v3054, 32
        %v3747 = vpop.permute.xlu0 %3746
        %v3749 = vmul.f32 %v3738, %v3747
        %3751 = vrot.lane.b32.xlu0 %v3749, 96
        %v3752 = vpop.permute.xlu0 %3751
        %v3754 = vadd.f32 %v3744, %v3752
        %v3755 = vtanh.pop %v3754
        %3757 = vrot.lane.b32.xlu0 %v3755, 96
        %v3758 = vpop.permute.xlu0 %3757
        %v3760 = vmul.f32 %v3738, %v3758
        %3762 = vrot.lane.b32.xlu0 %v3760, 32
        %v3763 = vpop.permute.xlu0 %3762
        %v3764 = vsel %vm670, %v3763, 0
        %3766 = vmatprep.subr.mxu0 0.0
        %3767 = vmatpush1.msra.mxu0 %v654
        %3768 = vmatprep.subr.mxu0 0.0
        %3769 = vmatpush1.msra.mxu0 %v655
        %3770 = vmatprep.subr.mxu0 0.0
        %3771 = vmatpush1.msra.mxu0 %v656
        %3772 = vmatprep.subr.mxu0 0.0
        %3773 = vmatpush1.msra.mxu0 %v657
        %3774 = vmatprep.subr.mxu0 0.0
        %3775 = vmatpush1.msra.mxu0 0.0
        %3776 = vmatprep.subr.mxu0 0.0
        %3777 = vmatpush1.msra.mxu0 0.0
        %3778 = vmatprep.subr.mxu0 0.0
        %3779 = vmatpush1.msra.mxu0 0.0
        %3780 = vmatprep.subr.mxu0 0.0
        %3781 = vmatpush1.msra.mxu0 0.0
        %3782 = vmatprep.subr.mxu0 0.0
        %3783 = vmatpush1.msra.mxu0 0.0
        %3784 = vmatprep.subr.mxu0 0.0
        %3785 = vmatpush1.msra.mxu0 0.0
        %3786 = vmatprep.subr.mxu0 0.0
        %3787 = vmatpush1.msra.mxu0 0.0
        %3788 = vmatprep.subr.mxu0 0.0
        %3789 = vmatpush1.msra.mxu0 0.0
        %3790 = vmatprep.subr.mxu0 0.0
        %3791 = vmatpush1.msra.mxu0 0.0
        %3792 = vmatprep.subr.mxu0 0.0
        %3793 = vmatpush1.msra.mxu0 0.0
        %3794 = vmatprep.subr.mxu0 0.0
        %3795 = vmatpush1.msra.mxu0 0.0
        %3796 = vmatprep.subr.mxu0 0.0
        %3797 = vmatpush1.msra.mxu0 0.0
        %3798 = vmatprep.subr.mxu0 0.0
        %3799 = vmatpush1.msra.mxu0 0.0
        %3800 = vmatprep.subr.mxu0 0.0
        %3801 = vmatpush1.msra.mxu0 0.0
        %3802 = vmatprep.subr.mxu0 0.0
        %3803 = vmatpush1.msra.mxu0 0.0
        %3804 = vmatprep.subr.mxu0 0.0
        %3805 = vmatpush1.msra.mxu0 0.0
        %3806 = vmatprep.subr.mxu0 0.0
        %3807 = vmatpush1.msra.mxu0 0.0
        %3808 = vmatprep.subr.mxu0 0.0
        %3809 = vmatpush1.msra.mxu0 0.0
        %3810 = vmatprep.subr.mxu0 0.0
        %3811 = vmatpush1.msra.mxu0 0.0
        %3812 = vmatprep.subr.mxu0 0.0
        %3813 = vmatpush1.msra.mxu0 0.0
        %3814 = vmatprep.subr.mxu0 0.0
        %3815 = vmatpush1.msra.mxu0 0.0
        %3816 = vmatprep.subr.mxu0 0.0
        %3817 = vmatpush1.msra.mxu0 0.0
        %3818 = vmatprep.subr.mxu0 0.0
        %3819 = vmatpush1.msra.mxu0 0.0
        %3820 = vmatprep.subr.mxu0 0.0
        %3821 = vmatpush1.msra.mxu0 0.0
        %3822 = vmatprep.subr.mxu0 0.0
        %3823 = vmatpush1.msra.mxu0 0.0
        %3824 = vmatprep.subr.mxu0 0.0
        %3825 = vmatpush1.msra.mxu0 0.0
        %3826 = vmatprep.subr.mxu0 0.0
        %3827 = vmatpush1.msra.mxu0 0.0
        %3828 = vmatprep.subr.mxu0 0.0
        %3829 = vmatpush1.msra.mxu0 0.0
        %3830 = vmatprep.mubr.f32.mxu0 0.0
        %3831 = vmatmul.mubr.f32.gmra.mrb[0].mxu0 %v3764
        %v3832 = vpop.f32.mrb[0].mxu0
        %v3833 = vadd.f32 %v660, %v3832
        %v3834 = vpop.f32.mrb[0].mxu0
        %3835 = vdwg.mxu0
        %vm3836 = vcmp.gt.f32.partialorder %v3833, 0.0
        %v3837 = vmul.f32 %v3833, 0.01
        %v3838 = vsel %vm3836, %v3833, %v3837
        %3839 = vst.msk [vmem:[%s649 + $0x4] sm:$0x1] %vm1034, %v3838
        %s3840 = sadd.s32 %s1036, 5
        %s3841 = smul.u32 %s3840, 128
        %s3842 = sadd.s32 %s3841, %s1041
        %s3843 = sld [smem:[#allocation3 + %s3842]]
        %s3844 = scalar_lea.vmem %s1, %s3843
        %v3845 = vld [vmem:[%s3844] sm:$0x1]
        %v3846 = vld [vmem:[%s7] sm:$0xff]
        %v3847 = vld [vmem:[%s7 + $0x8] sm:$0xff]
        %v3848 = vld [vmem:[%s7 + $0x10] sm:$0xff]
        %v3849 = vld [vmem:[%s7 + $0x18] sm:$0xff]
        %3850 = vmatprep.subr.mxu0 0.0
        %3851 = vmatpush1.msra.mxu0 %v650
        %3852 = vmatprep.subr.mxu0 0.0
        %3853 = vmatpush1.msra.mxu0 %v651
        %3854 = vmatprep.subr.mxu0 0.0
        %3855 = vmatpush1.msra.mxu0 %v652
        %3856 = vmatprep.subr.mxu0 0.0
        %3857 = vmatpush1.msra.mxu0 %v653
        %3858 = vmatprep.subr.mxu0 0.0
        %3859 = vmatpush1.msra.mxu0 0.0
        %3860 = vmatprep.subr.mxu0 0.0
        %3861 = vmatpush1.msra.mxu0 0.0
        %3862 = vmatprep.subr.mxu0 0.0
        %3863 = vmatpush1.msra.mxu0 0.0
        %3864 = vmatprep.subr.mxu0 0.0
        %3865 = vmatpush1.msra.mxu0 0.0
        %3866 = vmatprep.subr.mxu0 0.0
        %3867 = vmatpush1.msra.mxu0 0.0
        %3868 = vmatprep.subr.mxu0 0.0
        %3869 = vmatpush1.msra.mxu0 0.0
        %3870 = vmatprep.subr.mxu0 0.0
        %3871 = vmatpush1.msra.mxu0 0.0
        %3872 = vmatprep.subr.mxu0 0.0
        %3873 = vmatpush1.msra.mxu0 0.0
        %3874 = vmatprep.subr.mxu0 0.0
        %3875 = vmatpush1.msra.mxu0 0.0
        %3876 = vmatprep.subr.mxu0 0.0
        %3877 = vmatpush1.msra.mxu0 0.0
        %3878 = vmatprep.subr.mxu0 0.0
        %3879 = vmatpush1.msra.mxu0 0.0
        %3880 = vmatprep.subr.mxu0 0.0
        %3881 = vmatpush1.msra.mxu0 0.0
        %3882 = vmatprep.subr.mxu0 0.0
        %3883 = vmatpush1.msra.mxu0 0.0
        %3884 = vmatprep.subr.mxu0 0.0
        %3885 = vmatpush1.msra.mxu0 0.0
        %3886 = vmatprep.subr.mxu0 0.0
        %3887 = vmatpush1.msra.mxu0 0.0
        %3888 = vmatprep.subr.mxu0 0.0
        %3889 = vmatpush1.msra.mxu0 0.0
        %3890 = vmatprep.subr.mxu0 0.0
        %3891 = vmatpush1.msra.mxu0 0.0
        %3892 = vmatprep.subr.mxu0 0.0
        %3893 = vmatpush1.msra.mxu0 0.0
        %3894 = vmatprep.subr.mxu0 0.0
        %3895 = vmatpush1.msra.mxu0 0.0
        %3896 = vmatprep.subr.mxu0 0.0
        %3897 = vmatpush1.msra.mxu0 0.0
        %3898 = vmatprep.subr.mxu0 0.0
        %3899 = vmatpush1.msra.mxu0 0.0
        %3900 = vmatprep.subr.mxu0 0.0
        %3901 = vmatpush1.msra.mxu0 0.0
        %3902 = vmatprep.subr.mxu0 0.0
        %3903 = vmatpush1.msra.mxu0 0.0
        %3904 = vmatprep.subr.mxu0 0.0
        %3905 = vmatpush1.msra.mxu0 0.0
        %3906 = vmatprep.subr.mxu0 0.0
        %3907 = vmatpush1.msra.mxu0 0.0
        %3908 = vmatprep.subr.mxu0 0.0
        %3909 = vmatpush1.msra.mxu0 0.0
        %3910 = vmatprep.subr.mxu0 0.0
        %3911 = vmatpush1.msra.mxu0 0.0
        %3912 = vmatprep.subr.mxu0 0.0
        %3913 = vmatpush1.msra.mxu0 0.0
        %3914 = vmatprep.mubr.f32.mxu0 0.0
        %3915 = vmatmul.mubr.f32.gmra.mrb[0].mxu0 %v3764
        %v3916 = vpop.f32.mrb[0].mxu0
        %v3917 = vadd.f32 0.0, %v3916
        %v3918 = vpop.f32.mrb[0].mxu0
        %3919 = vdwg.mxu0
        %v3921 = vsel %vm670, %v3845, 0
        %3923 = vmatprep.subr.mxu0 0.0
        %3924 = vmatpush1.msra.mxu0 %v3846
        %3925 = vmatprep.subr.mxu0 0.0
        %3926 = vmatpush1.msra.mxu0 %v3847
        %3927 = vmatprep.subr.mxu0 0.0
        %3928 = vmatpush1.msra.mxu0 %v3848
        %3929 = vmatprep.subr.mxu0 0.0
        %3930 = vmatpush1.msra.mxu0 %v3849
        %3931 = vmatprep.subr.mxu0 0.0
        %3932 = vmatpush1.msra.mxu0 0.0
        %3933 = vmatprep.subr.mxu0 0.0
        %3934 = vmatpush1.msra.mxu0 0.0
        %3935 = vmatprep.subr.mxu0 0.0
        %3936 = vmatpush1.msra.mxu0 0.0
        %3937 = vmatprep.subr.mxu0 0.0
        %3938 = vmatpush1.msra.mxu0 0.0
        %3939 = vmatprep.subr.mxu0 0.0
        %3940 = vmatpush1.msra.mxu0 0.0
        %3941 = vmatprep.subr.mxu0 0.0
        %3942 = vmatpush1.msra.mxu0 0.0
        %3943 = vmatprep.subr.mxu0 0.0
        %3944 = vmatpush1.msra.mxu0 0.0
        %3945 = vmatprep.subr.mxu0 0.0
        %3946 = vmatpush1.msra.mxu0 0.0
        %3947 = vmatprep.subr.mxu0 0.0
        %3948 = vmatpush1.msra.mxu0 0.0
        %3949 = vmatprep.subr.mxu0 0.0
        %3950 = vmatpush1.msra.mxu0 0.0
        %3951 = vmatprep.subr.mxu0 0.0
        %3952 = vmatpush1.msra.mxu0 0.0
        %3953 = vmatprep.subr.mxu0 0.0
        %3954 = vmatpush1.msra.mxu0 0.0
        %3955 = vmatprep.subr.mxu0 0.0
        %3956 = vmatpush1.msra.mxu0 0.0
        %3957 = vmatprep.subr.mxu0 0.0
        %3958 = vmatpush1.msra.mxu0 0.0
        %3959 = vmatprep.subr.mxu0 0.0
        %3960 = vmatpush1.msra.mxu0 0.0
        %3961 = vmatprep.subr.mxu0 0.0
        %3962 = vmatpush1.msra.mxu0 0.0
        %3963 = vmatprep.subr.mxu0 0.0
        %3964 = vmatpush1.msra.mxu0 0.0
        %3965 = vmatprep.subr.mxu0 0.0
        %3966 = vmatpush1.msra.mxu0 0.0
        %3967 = vmatprep.subr.mxu0 0.0
        %3968 = vmatpush1.msra.mxu0 0.0
        %3969 = vmatprep.subr.mxu0 0.0
        %3970 = vmatpush1.msra.mxu0 0.0
        %3971 = vmatprep.subr.mxu0 0.0
        %3972 = vmatpush1.msra.mxu0 0.0
        %3973 = vmatprep.subr.mxu0 0.0
        %3974 = vmatpush1.msra.mxu0 0.0
        %3975 = vmatprep.subr.mxu0 0.0
        %3976 = vmatpush1.msra.mxu0 0.0
        %3977 = vmatprep.subr.mxu0 0.0
        %3978 = vmatpush1.msra.mxu0 0.0
        %3979 = vmatprep.subr.mxu0 0.0
        %3980 = vmatpush1.msra.mxu0 0.0
        %3981 = vmatprep.subr.mxu0 0.0
        %3982 = vmatpush1.msra.mxu0 0.0
        %3983 = vmatprep.subr.mxu0 0.0
        %3984 = vmatpush1.msra.mxu0 0.0
        %3985 = vmatprep.subr.mxu0 0.0
        %3986 = vmatpush1.msra.mxu0 0.0
        %3987 = vmatprep.mubr.f32.mxu0 0.0
        %3988 = vmatmul.mubr.f32.gmra.mrb[0].mxu0 %v3921
        %v3989 = vpop.f32.mrb[0].mxu0
        %v3990 = vadd.f32 %v3917, %v3989
        %v3991 = vpop.f32.mrb[0].mxu0
        %3992 = vdwg.mxu0
        %v3993 = vld [vmem:[%s8] sm:$0xff]
        %v3994 = vld [vmem:[%s8 + $0x8] sm:$0xff]
        %v3995 = vld [vmem:[%s8 + $0x10] sm:$0xff]
        %v3996 = vld [vmem:[%s8 + $0x18] sm:$0xff]
        %3997 = vmatprep.subr.mxu0 0.0
        %3998 = vmatpush1.msra.mxu0 %v3993
        %3999 = vmatprep.subr.mxu0 0.0
        %4000 = vmatpush1.msra.mxu0 %v3994
        %4001 = vmatprep.subr.mxu0 0.0
        %4002 = vmatpush1.msra.mxu0 %v3995
        %4003 = vmatprep.subr.mxu0 0.0
        %4004 = vmatpush1.msra.mxu0 %v3996
        %4005 = vmatprep.subr.mxu0 0.0
        %4006 = vmatpush1.msra.mxu0 0.0
        %4007 = vmatprep.subr.mxu0 0.0
        %4008 = vmatpush1.msra.mxu0 0.0
        %4009 = vmatprep.subr.mxu0 0.0
        %4010 = vmatpush1.msra.mxu0 0.0
        %4011 = vmatprep.subr.mxu0 0.0
        %4012 = vmatpush1.msra.mxu0 0.0
        %4013 = vmatprep.subr.mxu0 0.0
        %4014 = vmatpush1.msra.mxu0 0.0
        %4015 = vmatprep.subr.mxu0 0.0
        %4016 = vmatpush1.msra.mxu0 0.0
        %4017 = vmatprep.subr.mxu0 0.0
        %4018 = vmatpush1.msra.mxu0 0.0
        %4019 = vmatprep.subr.mxu0 0.0
        %4020 = vmatpush1.msra.mxu0 0.0
        %4021 = vmatprep.subr.mxu0 0.0
        %4022 = vmatpush1.msra.mxu0 0.0
        %4023 = vmatprep.subr.mxu0 0.0
        %4024 = vmatpush1.msra.mxu0 0.0
        %4025 = vmatprep.subr.mxu0 0.0
        %4026 = vmatpush1.msra.mxu0 0.0
        %4027 = vmatprep.subr.mxu0 0.0
        %4028 = vmatpush1.msra.mxu0 0.0
        %4029 = vmatprep.subr.mxu0 0.0
        %4030 = vmatpush1.msra.mxu0 0.0
        %4031 = vmatprep.subr.mxu0 0.0
        %4032 = vmatpush1.msra.mxu0 0.0
        %4033 = vmatprep.subr.mxu0 0.0
        %4034 = vmatpush1.msra.mxu0 0.0
        %4035 = vmatprep.subr.mxu0 0.0
        %4036 = vmatpush1.msra.mxu0 0.0
        %4037 = vmatprep.subr.mxu0 0.0
        %4038 = vmatpush1.msra.mxu0 0.0
        %4039 = vmatprep.subr.mxu0 0.0
        %4040 = vmatpush1.msra.mxu0 0.0
        %4041 = vmatprep.subr.mxu0 0.0
        %4042 = vmatpush1.msra.mxu0 0.0
        %4043 = vmatprep.subr.mxu0 0.0
        %4044 = vmatpush1.msra.mxu0 0.0
        %4045 = vmatprep.subr.mxu0 0.0
        %4046 = vmatpush1.msra.mxu0 0.0
        %4047 = vmatprep.subr.mxu0 0.0
        %4048 = vmatpush1.msra.mxu0 0.0
        %4049 = vmatprep.subr.mxu0 0.0
        %4050 = vmatpush1.msra.mxu0 0.0
        %4051 = vmatprep.subr.mxu0 0.0
        %4052 = vmatpush1.msra.mxu0 0.0
        %4053 = vmatprep.subr.mxu0 0.0
        %4054 = vmatpush1.msra.mxu0 0.0
        %4055 = vmatprep.subr.mxu0 0.0
        %4056 = vmatpush1.msra.mxu0 0.0
        %4057 = vmatprep.subr.mxu0 0.0
        %4058 = vmatpush1.msra.mxu0 0.0
        %4059 = vmatprep.subr.mxu0 0.0
        %4060 = vmatpush1.msra.mxu0 0.0
        %4061 = vmatprep.mubr.f32.mxu0 0.0
        %4062 = vmatmul.mubr.f32.gmra.mrb[0].mxu0 %v3404
        %v4063 = vpop.f32.mrb[0].mxu0
        %v4064 = vadd.f32 0.0, %v4063
        %v4065 = vpop.f32.mrb[0].mxu0
        %4066 = vdwg.mxu0
        %v4067 = vadd.f32 %v3990, %v4064
        %v4068 = vadd.f32 %v4067, %v658
        %v4069 = vxor.u32 %v4068, 2147483648
        %v4070 = vmul.f32 %v4069, 1.442695
        %v4071 = vpow.pop %v4070
        %v4072 = vadd.f32 %v4071, 1.0
        %v4073 = vrcp.pop %v4072
        %v4074 = vmul.f32 1.0, %v4073
        %v4075 = vtanh.pop %v4068
        %4077 = vrot.lane.b32.xlu0 %v4075, 64
        %v4078 = vpop.permute.xlu0 %4077
        %v4080 = vmul.f32 %v4074, %v4078
        %4082 = vrot.lane.b32.xlu0 %v3390, 32
        %v4083 = vpop.permute.xlu0 %4082
        %v4085 = vmul.f32 %v4074, %v4083
        %4087 = vrot.lane.b32.xlu0 %v4085, 96
        %v4088 = vpop.permute.xlu0 %4087
        %v4090 = vadd.f32 %v4080, %v4088
        %v4091 = vtanh.pop %v4090
        %4093 = vrot.lane.b32.xlu0 %v4091, 96
        %v4094 = vpop.permute.xlu0 %4093
        %v4096 = vmul.f32 %v4074, %v4094
        %v4097 = vld [vmem:[#allocation9] sm:$0xff]
        %v4098 = vld [vmem:[#allocation9 + $0x8] sm:$0xff]
        %v4099 = vld [vmem:[#allocation9 + $0x10] sm:$0xff]
        %v4100 = vld [vmem:[#allocation9 + $0x18] sm:$0xff]
        %4102 = vrot.lane.b32.xlu0 %v4096, 32
        %v4103 = vpop.permute.xlu0 %4102
        %v4104 = vsel %vm670, %v4103, 0
        %4106 = vmatprep.subr.mxu0 0.0
        %4107 = vmatpush1.msra.mxu0 %v4097
        %4108 = vmatprep.subr.mxu0 0.0
        %4109 = vmatpush1.msra.mxu0 %v4098
        %4110 = vmatprep.subr.mxu0 0.0
        %4111 = vmatpush1.msra.mxu0 %v4099
        %4112 = vmatprep.subr.mxu0 0.0
        %4113 = vmatpush1.msra.mxu0 %v4100
        %4114 = vmatprep.subr.mxu0 0.0
        %4115 = vmatpush1.msra.mxu0 0.0
        %4116 = vmatprep.subr.mxu0 0.0
        %4117 = vmatpush1.msra.mxu0 0.0
        %4118 = vmatprep.subr.mxu0 0.0
        %4119 = vmatpush1.msra.mxu0 0.0
        %4120 = vmatprep.subr.mxu0 0.0
        %4121 = vmatpush1.msra.mxu0 0.0
        %4122 = vmatprep.subr.mxu0 0.0
        %4123 = vmatpush1.msra.mxu0 0.0
        %4124 = vmatprep.subr.mxu0 0.0
        %4125 = vmatpush1.msra.mxu0 0.0
        %4126 = vmatprep.subr.mxu0 0.0
        %4127 = vmatpush1.msra.mxu0 0.0
        %4128 = vmatprep.subr.mxu0 0.0
        %4129 = vmatpush1.msra.mxu0 0.0
        %4130 = vmatprep.subr.mxu0 0.0
        %4131 = vmatpush1.msra.mxu0 0.0
        %4132 = vmatprep.subr.mxu0 0.0
        %4133 = vmatpush1.msra.mxu0 0.0
        %4134 = vmatprep.subr.mxu0 0.0
        %4135 = vmatpush1.msra.mxu0 0.0
        %4136 = vmatprep.subr.mxu0 0.0
        %4137 = vmatpush1.msra.mxu0 0.0
        %4138 = vmatprep.subr.mxu0 0.0
        %4139 = vmatpush1.msra.mxu0 0.0
        %4140 = vmatprep.subr.mxu0 0.0
        %4141 = vmatpush1.msra.mxu0 0.0
        %4142 = vmatprep.subr.mxu0 0.0
        %4143 = vmatpush1.msra.mxu0 0.0
        %4144 = vmatprep.subr.mxu0 0.0
        %4145 = vmatpush1.msra.mxu0 0.0
        %4146 = vmatprep.subr.mxu0 0.0
        %4147 = vmatpush1.msra.mxu0 0.0
        %4148 = vmatprep.subr.mxu0 0.0
        %4149 = vmatpush1.msra.mxu0 0.0
        %4150 = vmatprep.subr.mxu0 0.0
        %4151 = vmatpush1.msra.mxu0 0.0
        %4152 = vmatprep.subr.mxu0 0.0
        %4153 = vmatpush1.msra.mxu0 0.0
        %4154 = vmatprep.subr.mxu0 0.0
        %4155 = vmatpush1.msra.mxu0 0.0
        %4156 = vmatprep.subr.mxu0 0.0
        %4157 = vmatpush1.msra.mxu0 0.0
        %4158 = vmatprep.subr.mxu0 0.0
        %4159 = vmatpush1.msra.mxu0 0.0
        %4160 = vmatprep.subr.mxu0 0.0
        %4161 = vmatpush1.msra.mxu0 0.0
        %4162 = vmatprep.subr.mxu0 0.0
        %4163 = vmatpush1.msra.mxu0 0.0
        %4164 = vmatprep.subr.mxu0 0.0
        %4165 = vmatpush1.msra.mxu0 0.0
        %4166 = vmatprep.subr.mxu0 0.0
        %4167 = vmatpush1.msra.mxu0 0.0
        %4168 = vmatprep.subr.mxu0 0.0
        %4169 = vmatpush1.msra.mxu0 0.0
        %4170 = vmatprep.mubr.f32.mxu0 0.0
        %4171 = vmatmul.mubr.f32.gmra.mrb[0].mxu0 %v4104
        %v4172 = vpop.f32.mrb[0].mxu0
        %v4173 = vadd.f32 %v661, %v4172
        %v4174 = vpop.f32.mrb[0].mxu0
        %4175 = vdwg.mxu0
        %v4176 = vld [vmem:[#allocation11] sm:$0xff]
        %v4177 = vld [vmem:[#allocation11 + $0x8] sm:$0xff]
        %v4178 = vld [vmem:[#allocation11 + $0x10] sm:$0xff]
        %v4179 = vld [vmem:[#allocation11 + $0x18] sm:$0xff]
        %4180 = vmatprep.subr.mxu0 0.0
        %4181 = vmatpush1.msra.mxu0 %v4176
        %4182 = vmatprep.subr.mxu0 0.0
        %4183 = vmatpush1.msra.mxu0 %v4177
        %4184 = vmatprep.subr.mxu0 0.0
        %4185 = vmatpush1.msra.mxu0 %v4178
        %4186 = vmatprep.subr.mxu0 0.0
        %4187 = vmatpush1.msra.mxu0 %v4179
        %4188 = vmatprep.subr.mxu0 0.0
        %4189 = vmatpush1.msra.mxu0 0.0
        %4190 = vmatprep.subr.mxu0 0.0
        %4191 = vmatpush1.msra.mxu0 0.0
        %4192 = vmatprep.subr.mxu0 0.0
        %4193 = vmatpush1.msra.mxu0 0.0
        %4194 = vmatprep.subr.mxu0 0.0
        %4195 = vmatpush1.msra.mxu0 0.0
        %4196 = vmatprep.subr.mxu0 0.0
        %4197 = vmatpush1.msra.mxu0 0.0
        %4198 = vmatprep.subr.mxu0 0.0
        %4199 = vmatpush1.msra.mxu0 0.0
        %4200 = vmatprep.subr.mxu0 0.0
        %4201 = vmatpush1.msra.mxu0 0.0
        %4202 = vmatprep.subr.mxu0 0.0
        %4203 = vmatpush1.msra.mxu0 0.0
        %4204 = vmatprep.subr.mxu0 0.0
        %4205 = vmatpush1.msra.mxu0 0.0
        %4206 = vmatprep.subr.mxu0 0.0
        %4207 = vmatpush1.msra.mxu0 0.0
        %4208 = vmatprep.subr.mxu0 0.0
        %4209 = vmatpush1.msra.mxu0 0.0
        %4210 = vmatprep.subr.mxu0 0.0
        %4211 = vmatpush1.msra.mxu0 0.0
        %4212 = vmatprep.subr.mxu0 0.0
        %4213 = vmatpush1.msra.mxu0 0.0
        %4214 = vmatprep.subr.mxu0 0.0
        %4215 = vmatpush1.msra.mxu0 0.0
        %4216 = vmatprep.subr.mxu0 0.0
        %4217 = vmatpush1.msra.mxu0 0.0
        %4218 = vmatprep.subr.mxu0 0.0
        %4219 = vmatpush1.msra.mxu0 0.0
        %4220 = vmatprep.subr.mxu0 0.0
        %4221 = vmatpush1.msra.mxu0 0.0
        %4222 = vmatprep.subr.mxu0 0.0
        %4223 = vmatpush1.msra.mxu0 0.0
        %4224 = vmatprep.subr.mxu0 0.0
        %4225 = vmatpush1.msra.mxu0 0.0
        %4226 = vmatprep.subr.mxu0 0.0
        %4227 = vmatpush1.msra.mxu0 0.0
        %4228 = vmatprep.subr.mxu0 0.0
        %4229 = vmatpush1.msra.mxu0 0.0
        %4230 = vmatprep.subr.mxu0 0.0
        %4231 = vmatpush1.msra.mxu0 0.0
        %4232 = vmatprep.subr.mxu0 0.0
        %4233 = vmatpush1.msra.mxu0 0.0
        %4234 = vmatprep.subr.mxu0 0.0
        %4235 = vmatpush1.msra.mxu0 0.0
        %4236 = vmatprep.subr.mxu0 0.0
        %4237 = vmatpush1.msra.mxu0 0.0
        %4238 = vmatprep.subr.mxu0 0.0
        %4239 = vmatpush1.msra.mxu0 0.0
        %4240 = vmatprep.subr.mxu0 0.0
        %4241 = vmatpush1.msra.mxu0 0.0
        %4242 = vmatprep.subr.mxu0 0.0
        %4243 = vmatpush1.msra.mxu0 0.0
        %4244 = vmatprep.mubr.f32.mxu0 0.0
        %4245 = vmatmul.mubr.f32.gmra.mrb[0].mxu0 %v3586
        %v4246 = vpop.f32.mrb[0].mxu0
        %v4247 = vadd.f32 0.0, %v4246
        %v4248 = vpop.f32.mrb[0].mxu0
        %4249 = vdwg.mxu0
        %v4250 = vadd.f32 %v4173, %v4247
        %v4251 = vxor.u32 %v4250, 2147483648
        %v4252 = vmul.f32 %v4251, 1.442695
        %v4253 = vpow.pop %v4252
        %v4254 = vadd.f32 %v4253, 1.0
        %v4255 = vrcp.pop %v4254
        %v4256 = vmul.f32 1.0, %v4255
        %v4257 = vtanh.pop %v4250
        %4259 = vrot.lane.b32.xlu0 %v4257, 64
        %v4260 = vpop.permute.xlu0 %4259
        %v4262 = vmul.f32 %v4256, %v4260
        %4264 = vrot.lane.b32.xlu0 %v3572, 32
        %v4265 = vpop.permute.xlu0 %4264
        %v4267 = vmul.f32 %v4256, %v4265
        %4269 = vrot.lane.b32.xlu0 %v4267, 96
        %v4270 = vpop.permute.xlu0 %4269
        %v4272 = vadd.f32 %v4262, %v4270
        %v4273 = vtanh.pop %v4272
        %4275 = vrot.lane.b32.xlu0 %v4273, 96
        %v4276 = vpop.permute.xlu0 %4275
        %v4278 = vmul.f32 %v4256, %v4276
        %v4279 = vld [vmem:[#allocation12] sm:$0xff]
        %v4280 = vld [vmem:[#allocation12 + $0x8] sm:$0xff]
        %v4281 = vld [vmem:[#allocation12 + $0x10] sm:$0xff]
        %v4282 = vld [vmem:[#allocation12 + $0x18] sm:$0xff]
        %4284 = vrot.lane.b32.xlu0 %v4278, 32
        %v4285 = vpop.permute.xlu0 %4284
        %v4286 = vsel %vm670, %v4285, 0
        %4288 = vmatprep.subr.mxu0 0.0
        %4289 = vmatpush1.msra.mxu0 %v4279
        %4290 = vmatprep.subr.mxu0 0.0
        %4291 = vmatpush1.msra.mxu0 %v4280
        %4292 = vmatprep.subr.mxu0 0.0
        %4293 = vmatpush1.msra.mxu0 %v4281
        %4294 = vmatprep.subr.mxu0 0.0
        %4295 = vmatpush1.msra.mxu0 %v4282
        %4296 = vmatprep.subr.mxu0 0.0
        %4297 = vmatpush1.msra.mxu0 0.0
        %4298 = vmatprep.subr.mxu0 0.0
        %4299 = vmatpush1.msra.mxu0 0.0
        %4300 = vmatprep.subr.mxu0 0.0
        %4301 = vmatpush1.msra.mxu0 0.0
        %4302 = vmatprep.subr.mxu0 0.0
        %4303 = vmatpush1.msra.mxu0 0.0
        %4304 = vmatprep.subr.mxu0 0.0
        %4305 = vmatpush1.msra.mxu0 0.0
        %4306 = vmatprep.subr.mxu0 0.0
        %4307 = vmatpush1.msra.mxu0 0.0
        %4308 = vmatprep.subr.mxu0 0.0
        %4309 = vmatpush1.msra.mxu0 0.0
        %4310 = vmatprep.subr.mxu0 0.0
        %4311 = vmatpush1.msra.mxu0 0.0
        %4312 = vmatprep.subr.mxu0 0.0
        %4313 = vmatpush1.msra.mxu0 0.0
        %4314 = vmatprep.subr.mxu0 0.0
        %4315 = vmatpush1.msra.mxu0 0.0
        %4316 = vmatprep.subr.mxu0 0.0
        %4317 = vmatpush1.msra.mxu0 0.0
        %4318 = vmatprep.subr.mxu0 0.0
        %4319 = vmatpush1.msra.mxu0 0.0
        %4320 = vmatprep.subr.mxu0 0.0
        %4321 = vmatpush1.msra.mxu0 0.0
        %4322 = vmatprep.subr.mxu0 0.0
        %4323 = vmatpush1.msra.mxu0 0.0
        %4324 = vmatprep.subr.mxu0 0.0
        %4325 = vmatpush1.msra.mxu0 0.0
        %4326 = vmatprep.subr.mxu0 0.0
        %4327 = vmatpush1.msra.mxu0 0.0
        %4328 = vmatprep.subr.mxu0 0.0
        %4329 = vmatpush1.msra.mxu0 0.0
        %4330 = vmatprep.subr.mxu0 0.0
        %4331 = vmatpush1.msra.mxu0 0.0
        %4332 = vmatprep.subr.mxu0 0.0
        %4333 = vmatpush1.msra.mxu0 0.0
        %4334 = vmatprep.subr.mxu0 0.0
        %4335 = vmatpush1.msra.mxu0 0.0
        %4336 = vmatprep.subr.mxu0 0.0
        %4337 = vmatpush1.msra.mxu0 0.0
        %4338 = vmatprep.subr.mxu0 0.0
        %4339 = vmatpush1.msra.mxu0 0.0
        %4340 = vmatprep.subr.mxu0 0.0
        %4341 = vmatpush1.msra.mxu0 0.0
        %4342 = vmatprep.subr.mxu0 0.0
        %4343 = vmatpush1.msra.mxu0 0.0
        %4344 = vmatprep.subr.mxu0 0.0
        %4345 = vmatpush1.msra.mxu0 0.0
        %4346 = vmatprep.subr.mxu0 0.0
        %4347 = vmatpush1.msra.mxu0 0.0
        %4348 = vmatprep.subr.mxu0 0.0
        %4349 = vmatpush1.msra.mxu0 0.0
        %4350 = vmatprep.subr.mxu0 0.0
        %4351 = vmatpush1.msra.mxu0 0.0
        %4352 = vmatprep.mubr.f32.mxu0 0.0
        %4353 = vmatmul.mubr.f32.gmra.mrb[0].mxu0 %v4286
        %v4354 = vpop.f32.mrb[0].mxu0
        %v4355 = vadd.f32 %v662, %v4354
        %v4356 = vpop.f32.mrb[0].mxu0
        %4357 = vdwg.mxu0
        %v4358 = vld [vmem:[#allocation14] sm:$0xff]
        %v4359 = vld [vmem:[#allocation14 + $0x8] sm:$0xff]
        %v4360 = vld [vmem:[#allocation14 + $0x10] sm:$0xff]
        %v4361 = vld [vmem:[#allocation14 + $0x18] sm:$0xff]
        %4362 = vmatprep.subr.mxu0 0.0
        %4363 = vmatpush1.msra.mxu0 %v4358
        %4364 = vmatprep.subr.mxu0 0.0
        %4365 = vmatpush1.msra.mxu0 %v4359
        %4366 = vmatprep.subr.mxu0 0.0
        %4367 = vmatpush1.msra.mxu0 %v4360
        %4368 = vmatprep.subr.mxu0 0.0
        %4369 = vmatpush1.msra.mxu0 %v4361
        %4370 = vmatprep.subr.mxu0 0.0
        %4371 = vmatpush1.msra.mxu0 0.0
        %4372 = vmatprep.subr.mxu0 0.0
        %4373 = vmatpush1.msra.mxu0 0.0
        %4374 = vmatprep.subr.mxu0 0.0
        %4375 = vmatpush1.msra.mxu0 0.0
        %4376 = vmatprep.subr.mxu0 0.0
        %4377 = vmatpush1.msra.mxu0 0.0
        %4378 = vmatprep.subr.mxu0 0.0
        %4379 = vmatpush1.msra.mxu0 0.0
        %4380 = vmatprep.subr.mxu0 0.0
        %4381 = vmatpush1.msra.mxu0 0.0
        %4382 = vmatprep.subr.mxu0 0.0
        %4383 = vmatpush1.msra.mxu0 0.0
        %4384 = vmatprep.subr.mxu0 0.0
        %4385 = vmatpush1.msra.mxu0 0.0
        %4386 = vmatprep.subr.mxu0 0.0
        %4387 = vmatpush1.msra.mxu0 0.0
        %4388 = vmatprep.subr.mxu0 0.0
        %4389 = vmatpush1.msra.mxu0 0.0
        %4390 = vmatprep.subr.mxu0 0.0
        %4391 = vmatpush1.msra.mxu0 0.0
        %4392 = vmatprep.subr.mxu0 0.0
        %4393 = vmatpush1.msra.mxu0 0.0
        %4394 = vmatprep.subr.mxu0 0.0
        %4395 = vmatpush1.msra.mxu0 0.0
        %4396 = vmatprep.subr.mxu0 0.0
        %4397 = vmatpush1.msra.mxu0 0.0
        %4398 = vmatprep.subr.mxu0 0.0
        %4399 = vmatpush1.msra.mxu0 0.0
        %4400 = vmatprep.subr.mxu0 0.0
        %4401 = vmatpush1.msra.mxu0 0.0
        %4402 = vmatprep.subr.mxu0 0.0
        %4403 = vmatpush1.msra.mxu0 0.0
        %4404 = vmatprep.subr.mxu0 0.0
        %4405 = vmatpush1.msra.mxu0 0.0
        %4406 = vmatprep.subr.mxu0 0.0
        %4407 = vmatpush1.msra.mxu0 0.0
        %4408 = vmatprep.subr.mxu0 0.0
        %4409 = vmatpush1.msra.mxu0 0.0
        %4410 = vmatprep.subr.mxu0 0.0
        %4411 = vmatpush1.msra.mxu0 0.0
        %4412 = vmatprep.subr.mxu0 0.0
        %4413 = vmatpush1.msra.mxu0 0.0
        %4414 = vmatprep.subr.mxu0 0.0
        %4415 = vmatpush1.msra.mxu0 0.0
        %4416 = vmatprep.subr.mxu0 0.0
        %4417 = vmatpush1.msra.mxu0 0.0
        %4418 = vmatprep.subr.mxu0 0.0
        %4419 = vmatpush1.msra.mxu0 0.0
        %4420 = vmatprep.subr.mxu0 0.0
        %4421 = vmatpush1.msra.mxu0 0.0
        %4422 = vmatprep.subr.mxu0 0.0
        %4423 = vmatpush1.msra.mxu0 0.0
        %4424 = vmatprep.subr.mxu0 0.0
        %4425 = vmatpush1.msra.mxu0 0.0
        %4426 = vmatprep.mubr.f32.mxu0 0.0
        %4427 = vmatmul.mubr.f32.gmra.mrb[0].mxu0 %v3764
        %v4428 = vpop.f32.mrb[0].mxu0
        %v4429 = vadd.f32 0.0, %v4428
        %v4430 = vpop.f32.mrb[0].mxu0
        %4431 = vdwg.mxu0
        %v4432 = vadd.f32 %v4355, %v4429
        %v4433 = vxor.u32 %v4432, 2147483648
        %v4434 = vmul.f32 %v4433, 1.442695
        %v4435 = vpow.pop %v4434
        %v4436 = vadd.f32 %v4435, 1.0
        %v4437 = vrcp.pop %v4436
        %v4438 = vmul.f32 1.0, %v4437
        %v4439 = vtanh.pop %v4432
        %4441 = vrot.lane.b32.xlu0 %v4439, 64
        %v4442 = vpop.permute.xlu0 %4441
        %v4444 = vmul.f32 %v4438, %v4442
        %4446 = vrot.lane.b32.xlu0 %v3754, 32
        %v4447 = vpop.permute.xlu0 %4446
        %v4449 = vmul.f32 %v4438, %v4447
        %4451 = vrot.lane.b32.xlu0 %v4449, 96
        %v4452 = vpop.permute.xlu0 %4451
        %v4454 = vadd.f32 %v4444, %v4452
        %v4455 = vtanh.pop %v4454
        %4457 = vrot.lane.b32.xlu0 %v4455, 96
        %v4458 = vpop.permute.xlu0 %4457
        %v4460 = vmul.f32 %v4438, %v4458
        %4462 = vrot.lane.b32.xlu0 %v4460, 32
        %v4463 = vpop.permute.xlu0 %4462
        %v4464 = vsel %vm670, %v4463, 0
        %4466 = vmatprep.subr.mxu0 0.0
        %4467 = vmatpush1.msra.mxu0 %v654
        %4468 = vmatprep.subr.mxu0 0.0
        %4469 = vmatpush1.msra.mxu0 %v655
        %4470 = vmatprep.subr.mxu0 0.0
        %4471 = vmatpush1.msra.mxu0 %v656
        %4472 = vmatprep.subr.mxu0 0.0
        %4473 = vmatpush1.msra.mxu0 %v657
        %4474 = vmatprep.subr.mxu0 0.0
        %4475 = vmatpush1.msra.mxu0 0.0
        %4476 = vmatprep.subr.mxu0 0.0
        %4477 = vmatpush1.msra.mxu0 0.0
        %4478 = vmatprep.subr.mxu0 0.0
        %4479 = vmatpush1.msra.mxu0 0.0
        %4480 = vmatprep.subr.mxu0 0.0
        %4481 = vmatpush1.msra.mxu0 0.0
        %4482 = vmatprep.subr.mxu0 0.0
        %4483 = vmatpush1.msra.mxu0 0.0
        %4484 = vmatprep.subr.mxu0 0.0
        %4485 = vmatpush1.msra.mxu0 0.0
        %4486 = vmatprep.subr.mxu0 0.0
        %4487 = vmatpush1.msra.mxu0 0.0
        %4488 = vmatprep.subr.mxu0 0.0
        %4489 = vmatpush1.msra.mxu0 0.0
        %4490 = vmatprep.subr.mxu0 0.0
        %4491 = vmatpush1.msra.mxu0 0.0
        %4492 = vmatprep.subr.mxu0 0.0
        %4493 = vmatpush1.msra.mxu0 0.0
        %4494 = vmatprep.subr.mxu0 0.0
        %4495 = vmatpush1.msra.mxu0 0.0
        %4496 = vmatprep.subr.mxu0 0.0
        %4497 = vmatpush1.msra.mxu0 0.0
        %4498 = vmatprep.subr.mxu0 0.0
        %4499 = vmatpush1.msra.mxu0 0.0
        %4500 = vmatprep.subr.mxu0 0.0
        %4501 = vmatpush1.msra.mxu0 0.0
        %4502 = vmatprep.subr.mxu0 0.0
        %4503 = vmatpush1.msra.mxu0 0.0
        %4504 = vmatprep.subr.mxu0 0.0
        %4505 = vmatpush1.msra.mxu0 0.0
        %4506 = vmatprep.subr.mxu0 0.0
        %4507 = vmatpush1.msra.mxu0 0.0
        %4508 = vmatprep.subr.mxu0 0.0
        %4509 = vmatpush1.msra.mxu0 0.0
        %4510 = vmatprep.subr.mxu0 0.0
        %4511 = vmatpush1.msra.mxu0 0.0
        %4512 = vmatprep.subr.mxu0 0.0
        %4513 = vmatpush1.msra.mxu0 0.0
        %4514 = vmatprep.subr.mxu0 0.0
        %4515 = vmatpush1.msra.mxu0 0.0
        %4516 = vmatprep.subr.mxu0 0.0
        %4517 = vmatpush1.msra.mxu0 0.0
        %4518 = vmatprep.subr.mxu0 0.0
        %4519 = vmatpush1.msra.mxu0 0.0
        %4520 = vmatprep.subr.mxu0 0.0
        %4521 = vmatpush1.msra.mxu0 0.0
        %4522 = vmatprep.subr.mxu0 0.0
        %4523 = vmatpush1.msra.mxu0 0.0
        %4524 = vmatprep.subr.mxu0 0.0
        %4525 = vmatpush1.msra.mxu0 0.0
        %4526 = vmatprep.subr.mxu0 0.0
        %4527 = vmatpush1.msra.mxu0 0.0
        %4528 = vmatprep.subr.mxu0 0.0
        %4529 = vmatpush1.msra.mxu0 0.0
        %4530 = vmatprep.mubr.f32.mxu0 0.0
        %4531 = vmatmul.mubr.f32.gmra.mrb[0].mxu0 %v4464
        %v4532 = vpop.f32.mrb[0].mxu0
        %v4533 = vadd.f32 %v660, %v4532
        %v4534 = vpop.f32.mrb[0].mxu0
        %4535 = vdwg.mxu0
        %vm4536 = vcmp.gt.f32.partialorder %v4533, 0.0
        %v4537 = vmul.f32 %v4533, 0.01
        %v4538 = vsel %vm4536, %v4533, %v4537
        %4539 = vst.msk [vmem:[%s649 + $0x5] sm:$0x1] %vm1034, %v4538
        %p4540 = scmp.lt.s32.totalorder %s40, 1
        %s4541 = scalar_select %p4540, %s40, 1
        %s4542 = smul.addr %s4541, 8
        %s4543 = scalar_lea.vmem %s15, %s4542
        // Predicated region
        $region105: #{tpu_custom_call.1} parent=75 // pred_check
          %p4544 = pneg %p377
        $region106: #{tpu_custom_call.1} parent=75 // pred_check_branch
          %4546 = sbr.rel (%p4544) target = $region108
        $region107: #{tpu_custom_call.1} parent=75 // pred_region
          _
        $region108: #{tpu_custom_call.1} parent=75 // pred_fallthru
          _
      $region76: #{tpu_custom_call.1} parent=5 // pred_fallthru
        _
      %p4547 = scmp.le.s32.totalorder 2, %s35
      // Predicated region
      $region109: #{tpu_custom_call.1} parent=5 // pred_check
        %p4548 = pneg %p4547
      $region110: #{tpu_custom_call.1} parent=5 // pred_check_branch
        %4550 = sbr.rel (%p4548) target = $region112
      $region111: #{tpu_custom_call.1} parent=5 // pred_region
        %s4551 = ssub.s32 %s35, 2
        // Predicated region
        $region113: #{tpu_custom_call.1} parent=111 // pred_check
          %p4552 = pneg %p383
        $region114: #{tpu_custom_call.1} parent=111 // pred_check_branch
          %4554 = sbr.rel (%p4552) target = $region116
        $region115: #{tpu_custom_call.1} parent=111 // pred_region
          %p4555 = scmp.lt.s32.totalorder %s41, 1
          %s4556 = scalar_select %p4555, %s41, 1
          %s4557 = smul.addr %s4556, 8
          %s4558 = scalar_lea.vmem %s15, %s4557
        $region116: #{tpu_custom_call.1} parent=111 // pred_fallthru
          _
      $region112: #{tpu_custom_call.1} parent=5 // pred_fallthru
        _
    $region6: #{tpu_custom_call.1} parent=1 // loop_footer
      %s39 = sadd.s32 1, %s35
    $region7: #{tpu_custom_call.1} parent=1 // loop_footer_branch
      %34 = sbr.rel target = $region3
    $region8: #{tpu_custom_call.1} parent=1 // loop_exit
      _
    %4559 = vsyncpa [#allocation5], 1
    %s4560 = scalar_lea.sflag [#allocation5], 1
    %4561 = vsyncpa %s4560, 1
    %4562 = vsyncpa [#allocation7], 1
    %s4563 = scalar_lea.sflag [#allocation7], 1
    %4564 = vsyncpa %s4563, 1
    %4565 = vsyncpa [#allocation10], 1
    %4566 = vsyncpa [#allocation13], 1

</llo_original>
